<compile_context>
chip_gen: v7x
topology: tpu7x:2x2x1
jax: 0.10.0
libtpu: 0.0.40
codegen_flags: <defaults>
</compile_context>

<pallas_src>
import functools

import jax
import jax.numpy as jnp
from jax.experimental import pallas as pl
from jax.experimental.pallas import tpu as pltpu

EPS = 1e-5
P_MAX = 1.0


# ---------------------------------------------------------------------------
# fused generator kernel (one sample per grid step)
# ---------------------------------------------------------------------------
def _gen_kernel(x_ref, wi_ref, pi_ref, wr1_ref, wr2_ref, pr_ref,
                wcb_ref, bcb_ref, wu1_ref, pu1_ref, wu2_ref, pu2_ref,
                wf_ref, bf_ref,
                o_ref,
                xpad, hbuf, tbuf, ibuf, y1buf, y2buf,
                *, L, C, C_in, NB):
    f32 = jnp.float32

    # Zero only the per-sample halo rows; the centers are fully rewritten each
    # step.  Done every step so a megacore-split "parallel" grid stays correct.
    def zero_halo(buf, halo, width):
        z = jnp.zeros((halo, width), f32)
        buf[0:halo, :] = z
        buf[halo + L:2 * halo + L, :] = z

    zero_halo(xpad, 4, C_in)
    zero_halo(hbuf, 2, C)
    zero_halo(tbuf, 1, C)
    zero_halo(y1buf, 1, 2 * C)
    zero_halo(y2buf, 1, 6 * C)

    def packed(buf, halo, k):
        # im2col over the zero-padded position axis: one (L, k*width) bf16
        # operand so each conv is a single deep-contraction MXU matmul.
        p = (k - 1) // 2
        v = buf[...]
        return jnp.concatenate(
            [v[halo - p + j:halo - p + j + L, :].astype(jnp.bfloat16)
             for j in range(k)], axis=-1)

    def prelu(y, a):
        return jnp.where(y >= 0.0, y, a * y)

    # ---- initial ConvBlock: conv9 + bias + PReLU (no BN) ------------------
    xpad[4:4 + L, :] = x_ref[...]
    y = jnp.dot(packed(xpad, 4, 9), wi_ref[...], preferred_element_type=f32)
    y = prelu(y + pi_ref[0:1, :], pi_ref[1:2, :])
    ibuf[...] = y                        # skip connection for the convblock
    hbuf[2:2 + L, :] = y

    # ---- ResidualBlocks (eval-mode BN folded into the weights) ------------
    for b in range(NB):
        t = jnp.dot(packed(hbuf, 2, 3), wr1_ref[b], preferred_element_type=f32)
        t = prelu(t + pr_ref[b, 0:1, :], pr_ref[b, 1:2, :])
        tbuf[1:1 + L, :] = t
        y = jnp.dot(packed(tbuf, 1, 3), wr2_ref[b], preferred_element_type=f32)
        hbuf[2:2 + L, :] = (y + pr_ref[b, 2:3, :]) + hbuf[2:2 + L, :]

    # ---- convblock: conv5 + folded BN, no act, + initial skip -------------
    y = jnp.dot(packed(hbuf, 2, 5), wcb_ref[...], preferred_element_type=f32)
    hbuf[2:2 + L, :] = (y + bcb_ref[...]) + ibuf[...]

    # ---- Upsample x2: conv5 C->2C + bias + PReLU (alpha tiled).  The
    # PixelShuffle is implicit: row w of y1buf holds upsampled positions
    # (2w, 2w+1) as two C-wide lane groups. ---------------------------------
    y = jnp.dot(packed(hbuf, 2, 5), wu1_ref[...], preferred_element_type=f32)
    y1buf[1:1 + L, :] = prelu(y + pu1_ref[0:1, :], pu1_ref[1:2, :])

    # ---- Upsample x3 on the x2 stream with a banded weight: one
    # (L, 6C) @ (6C, 6C) matmul evaluates the k=5 conv for both parities;
    # row w of y2buf then holds final-rate positions (6w .. 6w+5). ----------
    y = jnp.dot(packed(y1buf, 1, 3), wu2_ref[...], preferred_element_type=f32)
    y2buf[1:1 + L, :] = prelu(y + pu2_ref[0:1, :], pu2_ref[1:2, :])

    # ---- final conv9 (C -> 1) over the x6 stream + sigmoid * P_MAX.  The
    # banded weight yields all six output phases per row in one matmul, so
    # the result stays in the grouped (L, 6) layout (free host reshape). ----
    y = jnp.dot(packed(y2buf, 1, 3), wf_ref[...], preferred_element_type=f32)
    y = y + bf_ref[...]
    y = P_MAX * pl.reciprocal(1.0 + jnp.exp(-y), approx=True)
    o_ref[...] = y[:, 0:6]


# ---------------------------------------------------------------------------
# host-side parameter packing (BN folding, im2col weight layout, banding)
# ---------------------------------------------------------------------------
def _pack_w(w_oik):
    """PyTorch (Co, Ci, K) -> im2col (K*Ci, Co), tap-major."""
    co, ci, k = w_oik.shape
    return jnp.transpose(w_oik, (2, 1, 0)).reshape(k * ci, co)


def _fold_bn(w_oik, g, b, m, v):
    """Fold eval-mode BatchNorm1d into a packed conv weight + bias."""
    scale = g * jax.lax.rsqrt(v + EPS)
    wp = _pack_w(w_oik) * scale[None, :]
    return wp.astype(jnp.bfloat16), b - m * scale


# ---------------------------------------------------------------------------
# full generator forward (eval mode)
# ---------------------------------------------------------------------------
def gen_forward(x_ncl, params):
    n, c_in, l0 = x_ncl.shape
    c = params["initial"]["w"].shape[0]
    nb = len(params["res"])
    assert l0 % 8 == 0, "sequence length must be a multiple of 8"
    assert nb >= 1

    # initial ConvBlock (k=9, bias, PReLU)
    ip = params["initial"]
    wi = _pack_w(ip["w"]).astype(jnp.bfloat16)                 # (9*Cin, C)
    pi = jnp.stack([ip["b"], ip["alpha"]])                     # (2, C)

    # residual blocks (BN folded)
    w1s, w2s, ps = [], [], []
    for rp in params["res"]:
        w1, s1 = _fold_bn(rp["w1"], rp["g1"], rp["b1"], rp["m1"], rp["v1"])
        w2, s2 = _fold_bn(rp["w2"], rp["g2"], rp["b2"], rp["m2"], rp["v2"])
        w1s.append(w1)
        w2s.append(w2)
        ps.append(jnp.stack([s1, rp["alpha"], s2]))
    wr1 = jnp.stack(w1s)                                       # (NB, 3C, C)
    wr2 = jnp.stack(w2s)                                       # (NB, 3C, C)
    pres = jnp.stack(ps)                                       # (NB, 3, C)

    # convblock (k=5, BN folded, no act)
    cp = params["convblock"]
    wcb, bcb = _fold_bn(cp["w"], cp["g"], cp["b"], cp["m"], cp["v"])
    bcb = bcb.reshape(1, c)

    # upsample x2 (conv k=5 C -> 2C, bias, post-shuffle PReLU tiled x2)
    u1 = params["up1"]
    wu1 = _pack_w(u1["w"]).astype(jnp.bfloat16)                # (5C, 2C)
    pu1 = jnp.stack([u1["b"], jnp.tile(u1["alpha"], 2)])       # (2, 2C)

    # upsample x3: banded weight evaluating both input parities at once
    u2 = params["up2"]
    w2p = _pack_w(u2["w"])                                     # (5C, 3C)
    wu2 = jnp.zeros((6 * c, 6 * c), jnp.float32)
    wu2 = wu2.at[0:5 * c, 0:3 * c].set(w2p)
    wu2 = wu2.at[c:6 * c, 3 * c:6 * c].set(w2p)
    wu2 = wu2.astype(jnp.bfloat16)                             # (6C, 6C)
    pu2 = jnp.stack([jnp.tile(u2["b"], 2), jnp.tile(u2["alpha"], 6)])  # (2, 6C)

    # final conv (k=9, C -> 1): banded weight producing the 6 output phases
    fp = params["final"]
    wfp = _pack_w(fp["w"])                                     # (9C, 1)
    wf = jnp.zeros((18 * c, 8), jnp.float32)
    for s in range(6):
        wf = wf.at[(s + 2) * c:(s + 11) * c, s].set(wfp[:, 0])
    wf = wf.astype(jnp.bfloat16)                               # (18C, 8)
    bf = jnp.full((1, 8), fp["b"][0], jnp.float32)

    # channels-last rows
    x_rows = jnp.transpose(x_ncl, (0, 2, 1)).reshape(n * l0, c_in)

    def full(shape):
        return pl.BlockSpec(shape, lambda i: (0,) * len(shape))

    kern = functools.partial(_gen_kernel, L=l0, C=c, C_in=c_in, NB=nb)
    out = pl.pallas_call(
        kern,
        out_shape=jax.ShapeDtypeStruct((n * l0, 6), jnp.float32),
        grid=(n,),
        in_specs=[pl.BlockSpec((l0, c_in), lambda i: (i, 0)),
                  full(wi.shape), full(pi.shape),
                  full(wr1.shape), full(wr2.shape), full(pres.shape),
                  full(wcb.shape), full(bcb.shape),
                  full(wu1.shape), full(pu1.shape),
                  full(wu2.shape), full(pu2.shape),
                  full(wf.shape), full(bf.shape)],
        out_specs=pl.BlockSpec((l0, 6), lambda i: (i, 0)),
        scratch_shapes=[
            pltpu.VMEM((l0 + 8, c_in), jnp.float32),   # padded input
            pltpu.VMEM((l0 + 4, c), jnp.float32),      # main stream (halo 2)
            pltpu.VMEM((l0 + 2, c), jnp.float32),      # res-block temp (halo 1)
            pltpu.VMEM((l0, c), jnp.float32),          # 'initial' skip
            pltpu.VMEM((l0 + 2, 2 * c), jnp.float32),  # x2 stream (halo 1)
            pltpu.VMEM((l0 + 2, 6 * c), jnp.float32),  # x6 stream (halo 1)
        ],
        compiler_params=pltpu.CompilerParams(
            dimension_semantics=("parallel",),
            vmem_limit_bytes=32 * 1024 * 1024),
    )(x_rows, wi, pi, wr1, wr2, pres, wcb, bcb, wu1, pu1, wu2, pu2, wf, bf)

    return out.reshape(n, 1, 6 * l0)


# ---------------------------------------------------------------------------
# pure-JAX reference (PyTorch semantics, f32) for correctness checking
# ---------------------------------------------------------------------------
def _ref_conv(x, w, pad):
    return jax.lax.conv_general_dilated(
        x, w, window_strides=(1,), padding=[(pad, pad)],
        dimension_numbers=("NCH", "OIH", "NCH"),
        precision=jax.lax.Precision.HIGHEST)


def _ref_bn(x, g, b, m, v):
    return ((x - m[None, :, None]) * jax.lax.rsqrt(v + EPS)[None, :, None]
            * g[None, :, None] + b[None, :, None])


def _ref_prelu(x, a):
    return jnp.where(x >= 0.0, x, a[None, :, None] * x)


def _ref_pixel_shuffle(x, r):
    b, cs, w = x.shape
    cl = cs // r
    x = x.reshape(b, r, cl, w)
    x = jnp.transpose(x, (0, 2, 3, 1))
    return x.reshape(b, cl, w * r)


def ref_forward(x, params):
    ip = params["initial"]
    initial = _ref_prelu(_ref_conv(x, ip["w"], 4) + ip["b"][None, :, None],
                         ip["alpha"])
    h = initial
    for rp in params["res"]:
        t = _ref_bn(_ref_conv(h, rp["w1"], 1), rp["g1"], rp["b1"], rp["m1"], rp["v1"])
        t = _ref_prelu(t, rp["alpha"])
        t = _ref_bn(_ref_conv(t, rp["w2"], 1), rp["g2"], rp["b2"], rp["m2"], rp["v2"])
        h = t + h
    cp = params["convblock"]
    h = _ref_bn(_ref_conv(h, cp["w"], 2), cp["g"], cp["b"], cp["m"], cp["v"]) + initial
    for up, r in ((params["up1"], 2), (params["up2"], 3)):
        t = _ref_conv(h, up["w"], 2) + up["b"][None, :, None]
        h = _ref_prelu(_ref_pixel_shuffle(t, r), up["alpha"])
    fp = params["final"]
    y = _ref_conv(h, fp["w"], 4) + fp["b"][None, :, None]
    return jax.nn.sigmoid(y) * P_MAX


# ---------------------------------------------------------------------------
# deterministic parameter construction
# ---------------------------------------------------------------------------
def init_params(key, c_in, c, num_blocks):
    k_iter = iter(jax.random.split(key, 32 + 12 * num_blocks))
    nxt = lambda: next(k_iter)

    def conv_w(co, ci, k):
        return jax.random.normal(nxt(), (co, ci, k), jnp.float32) / ((ci * k) ** 0.5)

    def vec(cn, scale=0.1):
        return scale * jax.random.normal(nxt(), (cn,), jnp.float32)

    def prelu(cn):
        return 0.25 + 0.05 * jax.random.normal(nxt(), (cn,), jnp.float32)

    def bn(cn):
        return dict(g=1.0 + vec(cn), b=vec(cn), m=vec(cn),
                    v=1.0 + 0.2 * jnp.abs(jax.random.normal(nxt(), (cn,), jnp.float32)))

    params = dict(
        initial=dict(w=conv_w(c, c_in, 9), b=vec(c), alpha=prelu(c)),
        res=[],
        convblock=dict(w=conv_w(c, c, 5)),
        up1=dict(w=conv_w(2 * c, c, 5), b=vec(2 * c), alpha=prelu(c)),
        up2=dict(w=conv_w(3 * c, c, 5), b=vec(3 * c), alpha=prelu(c)),
        final=dict(w=conv_w(1, c, 9), b=vec(1)),
    )
    params["convblock"].update(bn(c))
    for _ in range(num_blocks):
        blk = dict(w1=conv_w(c, c, 3), alpha=prelu(c), w2=conv_w(c, c, 3))
        bn1, bn2 = bn(c), bn(c)
        blk.update(g1=bn1["g"], b1=bn1["b"], m1=bn1["m"], v1=bn1["v"],
                   g2=bn2["g"], b2=bn2["b"], m2=bn2["m"], v2=bn2["v"])
        params["res"].append(blk)
    return params


if __name__ == "__main__":
    N, C_IN, C, L0, NUM_BLOCKS = 2, 6, 64, 32, 2
    kx, kp = jax.random.split(jax.random.PRNGKey(0))
    x = jax.random.normal(kx, (N, C_IN, L0), jnp.float32)
    params = init_params(kp, C_IN, C, NUM_BLOCKS)

    out = jax.block_until_ready(jax.jit(gen_forward)(x, params))
    ref = jax.block_until_ready(ref_forward(x, params))

    assert out.shape == (N, 1, 6 * L0) and out.dtype == jnp.float32
    max_err = float(jnp.max(jnp.abs(out - ref)))
    # bf16 MXU operands (f32 accumulation) vs an f32 reference -> loosened tol.
    assert max_err < 3e-2, max_err
    print("KERNEL_OK")
</pallas_src>

<mosaic_0001>
module attributes {stable_mosaic.version = 11 : i64} {
  func.func @_gen_kernel(%arg0: i32, %arg1: memref<32x6xf32, #tpu.memory_space<vmem>>, %arg2: memref<54x64xbf16, #tpu.memory_space<vmem>>, %arg3: memref<2x64xf32, #tpu.memory_space<vmem>>, %arg4: memref<2x192x64xbf16, #tpu.memory_space<vmem>>, %arg5: memref<2x192x64xbf16, #tpu.memory_space<vmem>>, %arg6: memref<2x3x64xf32, #tpu.memory_space<vmem>>, %arg7: memref<320x64xbf16, #tpu.memory_space<vmem>>, %arg8: memref<1x64xf32, #tpu.memory_space<vmem>>, %arg9: memref<320x128xbf16, #tpu.memory_space<vmem>>, %arg10: memref<2x128xf32, #tpu.memory_space<vmem>>, %arg11: memref<384x384xbf16, #tpu.memory_space<vmem>>, %arg12: memref<2x384xf32, #tpu.memory_space<vmem>>, %arg13: memref<1152x8xbf16, #tpu.memory_space<vmem>>, %arg14: memref<1x8xf32, #tpu.memory_space<vmem>>, %arg15: memref<32x6xf32, #tpu.memory_space<vmem>>, %arg16: memref<40x6xf32, #tpu.memory_space<vmem>>, %arg17: memref<36x64xf32, #tpu.memory_space<vmem>>, %arg18: memref<34x64xf32, #tpu.memory_space<vmem>>, %arg19: memref<32x64xf32, #tpu.memory_space<vmem>>, %arg20: memref<34x128xf32, #tpu.memory_space<vmem>>, %arg21: memref<34x384xf32, #tpu.memory_space<vmem>>) attributes {dimension_semantics = [#tpu.dimension_semantics<parallel>], iteration_bounds = array<i64: 2>, scalar_prefetch = 0 : i64, scratch_operands = 6 : i64, tpu.core_type = #tpu.core_type<tc>, window_params = [{transform_indices = @transform_0, window_bounds = array<i64: 32, 6>}, {pipeline_mode = #tpu.pipeline_mode<synchronous>, transform_indices = @transform_1, window_bounds = array<i64: 54, 64>}, {pipeline_mode = #tpu.pipeline_mode<synchronous>, transform_indices = @transform_2, window_bounds = array<i64: 2, 64>}, {pipeline_mode = #tpu.pipeline_mode<synchronous>, transform_indices = @transform_3, window_bounds = array<i64: 2, 192, 64>}, {pipeline_mode = #tpu.pipeline_mode<synchronous>, transform_indices = @transform_4, window_bounds = array<i64: 2, 192, 64>}, {pipeline_mode = #tpu.pipeline_mode<synchronous>, transform_indices = @transform_5, window_bounds = array<i64: 2, 3, 64>}, {pipeline_mode = #tpu.pipeline_mode<synchronous>, transform_indices = @transform_6, window_bounds = array<i64: 320, 64>}, {pipeline_mode = #tpu.pipeline_mode<synchronous>, transform_indices = @transform_7, window_bounds = array<i64: 1, 64>}, {pipeline_mode = #tpu.pipeline_mode<synchronous>, transform_indices = @transform_8, window_bounds = array<i64: 320, 128>}, {pipeline_mode = #tpu.pipeline_mode<synchronous>, transform_indices = @transform_9, window_bounds = array<i64: 2, 128>}, {pipeline_mode = #tpu.pipeline_mode<synchronous>, transform_indices = @transform_10, window_bounds = array<i64: 384, 384>}, {pipeline_mode = #tpu.pipeline_mode<synchronous>, transform_indices = @transform_11, window_bounds = array<i64: 2, 384>}, {pipeline_mode = #tpu.pipeline_mode<synchronous>, transform_indices = @transform_12, window_bounds = array<i64: 1152, 8>}, {pipeline_mode = #tpu.pipeline_mode<synchronous>, transform_indices = @transform_13, window_bounds = array<i64: 1, 8>}, {transform_indices = @transform_14, window_bounds = array<i64: 32, 6>}]} {
    %cst = arith.constant 0.000000e+00 : f32
    %0 = vector.broadcast %cst : f32 to vector<4x6xf32>
    %c0 = arith.constant 0 : index
    %c0_0 = arith.constant 0 : index
    %1 = vector.load %arg16[%c0, %c0_0] : memref<40x6xf32, #tpu.memory_space<vmem>>, vector<4x6xf32>
    tpu.vector_store %arg16[%c0, %c0_0], %0 {strides = array<i32>} : memref<40x6xf32, #tpu.memory_space<vmem>>, vector<4x6xf32>,
    %c36 = arith.constant 36 : index
    %c0_1 = arith.constant 0 : index
    %2 = vector.load %arg16[%c36, %c0_1] : memref<40x6xf32, #tpu.memory_space<vmem>>, vector<4x6xf32>
    tpu.vector_store %arg16[%c36, %c0_1], %0 {strides = array<i32>} : memref<40x6xf32, #tpu.memory_space<vmem>>, vector<4x6xf32>,
    %cst_2 = arith.constant 0.000000e+00 : f32
    %3 = vector.broadcast %cst_2 : f32 to vector<2x64xf32>
    %c0_3 = arith.constant 0 : index
    %c0_4 = arith.constant 0 : index
    %4 = vector.load %arg17[%c0_3, %c0_4] : memref<36x64xf32, #tpu.memory_space<vmem>>, vector<2x64xf32>
    tpu.vector_store %arg17[%c0_3, %c0_4], %3 {strides = array<i32>} : memref<36x64xf32, #tpu.memory_space<vmem>>, vector<2x64xf32>,
    %c34 = arith.constant 34 : index
    %c0_5 = arith.constant 0 : index
    %5 = vector.load %arg17[%c34, %c0_5] : memref<36x64xf32, #tpu.memory_space<vmem>>, vector<2x64xf32>
    tpu.vector_store %arg17[%c34, %c0_5], %3 {strides = array<i32>} : memref<36x64xf32, #tpu.memory_space<vmem>>, vector<2x64xf32>,
    %cst_6 = arith.constant 0.000000e+00 : f32
    %6 = vector.broadcast %cst_6 : f32 to vector<1x64xf32>
    %c0_7 = arith.constant 0 : index
    %c0_8 = arith.constant 0 : index
    %7 = vector.load %arg18[%c0_7, %c0_8] : memref<34x64xf32, #tpu.memory_space<vmem>>, vector<1x64xf32>
    tpu.vector_store %arg18[%c0_7, %c0_8], %6 {strides = array<i32>} : memref<34x64xf32, #tpu.memory_space<vmem>>, vector<1x64xf32>,
    %c33 = arith.constant 33 : index
    %c0_9 = arith.constant 0 : index
    %8 = vector.load %arg18[%c33, %c0_9] : memref<34x64xf32, #tpu.memory_space<vmem>>, vector<1x64xf32>
    tpu.vector_store %arg18[%c33, %c0_9], %6 {strides = array<i32>} : memref<34x64xf32, #tpu.memory_space<vmem>>, vector<1x64xf32>,
    %cst_10 = arith.constant 0.000000e+00 : f32
    %9 = vector.broadcast %cst_10 : f32 to vector<1x128xf32>
    %c0_11 = arith.constant 0 : index
    %c0_12 = arith.constant 0 : index
    %10 = vector.load %arg20[%c0_11, %c0_12] : memref<34x128xf32, #tpu.memory_space<vmem>>, vector<1x128xf32>
    tpu.vector_store %arg20[%c0_11, %c0_12], %9 {strides = array<i32>} : memref<34x128xf32, #tpu.memory_space<vmem>>, vector<1x128xf32>,
    %c33_13 = arith.constant 33 : index
    %c0_14 = arith.constant 0 : index
    %11 = vector.load %arg20[%c33_13, %c0_14] : memref<34x128xf32, #tpu.memory_space<vmem>>, vector<1x128xf32>
    tpu.vector_store %arg20[%c33_13, %c0_14], %9 {strides = array<i32>} : memref<34x128xf32, #tpu.memory_space<vmem>>, vector<1x128xf32>,
    %cst_15 = arith.constant 0.000000e+00 : f32
    %12 = vector.broadcast %cst_15 : f32 to vector<1x384xf32>
    %c0_16 = arith.constant 0 : index
    %c0_17 = arith.constant 0 : index
    %13 = vector.load %arg21[%c0_16, %c0_17] : memref<34x384xf32, #tpu.memory_space<vmem>>, vector<1x384xf32>
    tpu.vector_store %arg21[%c0_16, %c0_17], %12 {strides = array<i32>} : memref<34x384xf32, #tpu.memory_space<vmem>>, vector<1x384xf32>,
    %c33_18 = arith.constant 33 : index
    %c0_19 = arith.constant 0 : index
    %14 = vector.load %arg21[%c33_18, %c0_19] : memref<34x384xf32, #tpu.memory_space<vmem>>, vector<1x384xf32>
    tpu.vector_store %arg21[%c33_18, %c0_19], %12 {strides = array<i32>} : memref<34x384xf32, #tpu.memory_space<vmem>>, vector<1x384xf32>,
    %c0_20 = arith.constant 0 : index
    %c0_21 = arith.constant 0 : index
    %15 = vector.load %arg1[%c0_20, %c0_21] : memref<32x6xf32, #tpu.memory_space<vmem>>, vector<32x6xf32>
    %c4 = arith.constant 4 : index
    %c0_22 = arith.constant 0 : index
    %16 = vector.load %arg16[%c4, %c0_22] : memref<40x6xf32, #tpu.memory_space<vmem>>, vector<32x6xf32>
    tpu.vector_store %arg16[%c4, %c0_22], %15 {strides = array<i32>} : memref<40x6xf32, #tpu.memory_space<vmem>>, vector<32x6xf32>,
    %c0_23 = arith.constant 0 : index
    %c0_24 = arith.constant 0 : index
    %17 = vector.load %arg16[%c0_23, %c0_24] : memref<40x6xf32, #tpu.memory_space<vmem>>, vector<40x6xf32>
    %18 = vector.extract_strided_slice %17 {offsets = [0, 0], sizes = [32, 6], strides = [1, 1]} : vector<40x6xf32> to vector<32x6xf32>
    %19 = arith.truncf %18 : vector<32x6xf32> to vector<32x6xbf16>
    %20 = vector.extract_strided_slice %17 {offsets = [1, 0], sizes = [32, 6], strides = [1, 1]} : vector<40x6xf32> to vector<32x6xf32>
    %21 = arith.truncf %20 : vector<32x6xf32> to vector<32x6xbf16>
    %22 = vector.extract_strided_slice %17 {offsets = [2, 0], sizes = [32, 6], strides = [1, 1]} : vector<40x6xf32> to vector<32x6xf32>
    %23 = arith.truncf %22 : vector<32x6xf32> to vector<32x6xbf16>
    %24 = vector.extract_strided_slice %17 {offsets = [3, 0], sizes = [32, 6], strides = [1, 1]} : vector<40x6xf32> to vector<32x6xf32>
    %25 = arith.truncf %24 : vector<32x6xf32> to vector<32x6xbf16>
    %26 = vector.extract_strided_slice %17 {offsets = [4, 0], sizes = [32, 6], strides = [1, 1]} : vector<40x6xf32> to vector<32x6xf32>
    %27 = arith.truncf %26 : vector<32x6xf32> to vector<32x6xbf16>
    %28 = vector.extract_strided_slice %17 {offsets = [5, 0], sizes = [32, 6], strides = [1, 1]} : vector<40x6xf32> to vector<32x6xf32>
    %29 = arith.truncf %28 : vector<32x6xf32> to vector<32x6xbf16>
    %30 = vector.extract_strided_slice %17 {offsets = [6, 0], sizes = [32, 6], strides = [1, 1]} : vector<40x6xf32> to vector<32x6xf32>
    %31 = arith.truncf %30 : vector<32x6xf32> to vector<32x6xbf16>
    %32 = vector.extract_strided_slice %17 {offsets = [7, 0], sizes = [32, 6], strides = [1, 1]} : vector<40x6xf32> to vector<32x6xf32>
    %33 = arith.truncf %32 : vector<32x6xf32> to vector<32x6xbf16>
    %34 = vector.extract_strided_slice %17 {offsets = [8, 0], sizes = [32, 6], strides = [1, 1]} : vector<40x6xf32> to vector<32x6xf32>
    %35 = arith.truncf %34 : vector<32x6xf32> to vector<32x6xbf16>
    %36 = tpu.concatenate %19, %21, %23, %25, %27, %29, %31, %33, %35 in 1 : vector<32x6xbf16>, vector<32x6xbf16>, vector<32x6xbf16>, vector<32x6xbf16>, vector<32x6xbf16>, vector<32x6xbf16>, vector<32x6xbf16>, vector<32x6xbf16>, vector<32x6xbf16> -> vector<32x54xbf16>
    %c0_25 = arith.constant 0 : index
    %c0_26 = arith.constant 0 : index
    %37 = vector.load %arg2[%c0_25, %c0_26] : memref<54x64xbf16, #tpu.memory_space<vmem>>, vector<54x64xbf16>
    %cst_27 = arith.constant dense<0.000000e+00> : vector<32x64xf32>
    %38 = tpu.matmul %36, %37, %cst_27 {dimension_numbers = #tpu.dot_dimension_numbers<[1], [0], [0], [1], [0, 0, 1, 1], [], []>} : vector<32x54xbf16>, vector<54x64xbf16>, vector<32x64xf32> -> vector<32x64xf32>
    %c0_28 = arith.constant 0 : index
    %c0_29 = arith.constant 0 : index
    %39 = vector.load %arg3[%c0_28, %c0_29] : memref<2x64xf32, #tpu.memory_space<vmem>>, vector<1x64xf32>
    %40 = vector.broadcast %39 : vector<1x64xf32> to vector<32x64xf32>
    %41 = arith.addf %38, %40 : vector<32x64xf32>
    %c1 = arith.constant 1 : index
    %c0_30 = arith.constant 0 : index
    %42 = vector.load %arg3[%c1, %c0_30] : memref<2x64xf32, #tpu.memory_space<vmem>>, vector<1x64xf32>
    %cst_31 = arith.constant 0.000000e+00 : f32
    %43 = vector.broadcast %cst_31 : f32 to vector<32x64xf32>
    %44 = arith.cmpf oge, %41, %43 : vector<32x64xf32>
    %45 = vector.broadcast %42 : vector<1x64xf32> to vector<32x64xf32>
    %46 = arith.mulf %45, %41 : vector<32x64xf32>
    %47 = arith.select %44, %41, %46 : vector<32x64xi1>, vector<32x64xf32>
    %c0_32 = arith.constant 0 : index
    %c0_33 = arith.constant 0 : index
    %48 = vector.load %arg19[%c0_32, %c0_33] : memref<32x64xf32, #tpu.memory_space<vmem>>, vector<32x64xf32>
    tpu.vector_store %arg19[%c0_32, %c0_33], %47 {strides = array<i32>} : memref<32x64xf32, #tpu.memory_space<vmem>>, vector<32x64xf32>,
    %c2 = arith.constant 2 : index
    %c0_34 = arith.constant 0 : index
    %49 = vector.load %arg17[%c2, %c0_34] : memref<36x64xf32, #tpu.memory_space<vmem>>, vector<32x64xf32>
    tpu.vector_store %arg17[%c2, %c0_34], %47 {strides = array<i32>} : memref<36x64xf32, #tpu.memory_space<vmem>>, vector<32x64xf32>,
    %c0_35 = arith.constant 0 : index
    %c0_36 = arith.constant 0 : index
    %50 = vector.load %arg17[%c0_35, %c0_36] : memref<36x64xf32, #tpu.memory_space<vmem>>, vector<36x64xf32>
    %51 = vector.extract_strided_slice %50 {offsets = [1, 0], sizes = [32, 64], strides = [1, 1]} : vector<36x64xf32> to vector<32x64xf32>
    %52 = arith.truncf %51 : vector<32x64xf32> to vector<32x64xbf16>
    %53 = vector.extract_strided_slice %50 {offsets = [2, 0], sizes = [32, 64], strides = [1, 1]} : vector<36x64xf32> to vector<32x64xf32>
    %54 = arith.truncf %53 : vector<32x64xf32> to vector<32x64xbf16>
    %55 = vector.extract_strided_slice %50 {offsets = [3, 0], sizes = [32, 64], strides = [1, 1]} : vector<36x64xf32> to vector<32x64xf32>
    %56 = arith.truncf %55 : vector<32x64xf32> to vector<32x64xbf16>
    %57 = tpu.concatenate %52, %54, %56 in 1 : vector<32x64xbf16>, vector<32x64xbf16>, vector<32x64xbf16> -> vector<32x192xbf16>
    %c0_37 = arith.constant 0 : index
    %c0_38 = arith.constant 0 : index
    %c0_39 = arith.constant 0 : index
    %58 = vector.load %arg4[%c0_37, %c0_38, %c0_39] : memref<2x192x64xbf16, #tpu.memory_space<vmem>>, vector<1x192x64xbf16>
    %59 = vector.shape_cast %58 : vector<1x192x64xbf16> to vector<192x64xbf16>
    %cst_40 = arith.constant dense<0.000000e+00> : vector<32x64xf32>
    %60 = tpu.matmul %57, %59, %cst_40 {dimension_numbers = #tpu.dot_dimension_numbers<[1], [0], [0], [1], [0, 0, 1, 1], [], []>} : vector<32x192xbf16>, vector<192x64xbf16>, vector<32x64xf32> -> vector<32x64xf32>
    %c0_41 = arith.constant 0 : index
    %c0_42 = arith.constant 0 : index
    %c0_43 = arith.constant 0 : index
    %61 = vector.load %arg6[%c0_41, %c0_42, %c0_43] : memref<2x3x64xf32, #tpu.memory_space<vmem>>, vector<1x1x64xf32>
    %62 = vector.shape_cast %61 : vector<1x1x64xf32> to vector<1x64xf32>
    %63 = vector.broadcast %62 : vector<1x64xf32> to vector<32x64xf32>
    %64 = arith.addf %60, %63 : vector<32x64xf32>
    %c0_44 = arith.constant 0 : index
    %c1_45 = arith.constant 1 : index
    %c0_46 = arith.constant 0 : index
    %65 = vector.load %arg6[%c0_44, %c1_45, %c0_46] : memref<2x3x64xf32, #tpu.memory_space<vmem>>, vector<1x1x64xf32>
    %66 = vector.shape_cast %65 : vector<1x1x64xf32> to vector<1x64xf32>
    %cst_47 = arith.constant 0.000000e+00 : f32
    %67 = vector.broadcast %cst_47 : f32 to vector<32x64xf32>
    %68 = arith.cmpf oge, %64, %67 : vector<32x64xf32>
    %69 = vector.broadcast %66 : vector<1x64xf32> to vector<32x64xf32>
    %70 = arith.mulf %69, %64 : vector<32x64xf32>
    %71 = arith.select %68, %64, %70 : vector<32x64xi1>, vector<32x64xf32>
    %c1_48 = arith.constant 1 : index
    %c0_49 = arith.constant 0 : index
    %72 = vector.load %arg18[%c1_48, %c0_49] : memref<34x64xf32, #tpu.memory_space<vmem>>, vector<32x64xf32>
    tpu.vector_store %arg18[%c1_48, %c0_49], %71 {strides = array<i32>} : memref<34x64xf32, #tpu.memory_space<vmem>>, vector<32x64xf32>,
    %c0_50 = arith.constant 0 : index
    %c0_51 = arith.constant 0 : index
    %73 = vector.load %arg18[%c0_50, %c0_51] : memref<34x64xf32, #tpu.memory_space<vmem>>, vector<34x64xf32>
    %74 = vector.extract_strided_slice %73 {offsets = [0, 0], sizes = [32, 64], strides = [1, 1]} : vector<34x64xf32> to vector<32x64xf32>
    %75 = arith.truncf %74 : vector<32x64xf32> to vector<32x64xbf16>
    %76 = vector.extract_strided_slice %73 {offsets = [1, 0], sizes = [32, 64], strides = [1, 1]} : vector<34x64xf32> to vector<32x64xf32>
    %77 = arith.truncf %76 : vector<32x64xf32> to vector<32x64xbf16>
    %78 = vector.extract_strided_slice %73 {offsets = [2, 0], sizes = [32, 64], strides = [1, 1]} : vector<34x64xf32> to vector<32x64xf32>
    %79 = arith.truncf %78 : vector<32x64xf32> to vector<32x64xbf16>
    %80 = tpu.concatenate %75, %77, %79 in 1 : vector<32x64xbf16>, vector<32x64xbf16>, vector<32x64xbf16> -> vector<32x192xbf16>
    %c0_52 = arith.constant 0 : index
    %c0_53 = arith.constant 0 : index
    %c0_54 = arith.constant 0 : index
    %81 = vector.load %arg5[%c0_52, %c0_53, %c0_54] : memref<2x192x64xbf16, #tpu.memory_space<vmem>>, vector<1x192x64xbf16>
    %82 = vector.shape_cast %81 : vector<1x192x64xbf16> to vector<192x64xbf16>
    %cst_55 = arith.constant dense<0.000000e+00> : vector<32x64xf32>
    %83 = tpu.matmul %80, %82, %cst_55 {dimension_numbers = #tpu.dot_dimension_numbers<[1], [0], [0], [1], [0, 0, 1, 1], [], []>} : vector<32x192xbf16>, vector<192x64xbf16>, vector<32x64xf32> -> vector<32x64xf32>
    %c0_56 = arith.constant 0 : index
    %c2_57 = arith.constant 2 : index
    %c0_58 = arith.constant 0 : index
    %84 = vector.load %arg6[%c0_56, %c2_57, %c0_58] : memref<2x3x64xf32, #tpu.memory_space<vmem>>, vector<1x1x64xf32>
    %85 = vector.shape_cast %84 : vector<1x1x64xf32> to vector<1x64xf32>
    %86 = vector.broadcast %85 : vector<1x64xf32> to vector<32x64xf32>
    %87 = arith.addf %83, %86 : vector<32x64xf32>
    %c2_59 = arith.constant 2 : index
    %c0_60 = arith.constant 0 : index
    %88 = vector.load %arg17[%c2_59, %c0_60] : memref<36x64xf32, #tpu.memory_space<vmem>>, vector<32x64xf32>
    %89 = arith.addf %87, %88 : vector<32x64xf32>
    %c2_61 = arith.constant 2 : index
    %c0_62 = arith.constant 0 : index
    %90 = vector.load %arg17[%c2_61, %c0_62] : memref<36x64xf32, #tpu.memory_space<vmem>>, vector<32x64xf32>
    tpu.vector_store %arg17[%c2_61, %c0_62], %89 {strides = array<i32>} : memref<36x64xf32, #tpu.memory_space<vmem>>, vector<32x64xf32>,
    %c0_63 = arith.constant 0 : index
    %c0_64 = arith.constant 0 : index
    %91 = vector.load %arg17[%c0_63, %c0_64] : memref<36x64xf32, #tpu.memory_space<vmem>>, vector<36x64xf32>
    %92 = vector.extract_strided_slice %91 {offsets = [1, 0], sizes = [32, 64], strides = [1, 1]} : vector<36x64xf32> to vector<32x64xf32>
    %93 = arith.truncf %92 : vector<32x64xf32> to vector<32x64xbf16>
    %94 = vector.extract_strided_slice %91 {offsets = [2, 0], sizes = [32, 64], strides = [1, 1]} : vector<36x64xf32> to vector<32x64xf32>
    %95 = arith.truncf %94 : vector<32x64xf32> to vector<32x64xbf16>
    %96 = vector.extract_strided_slice %91 {offsets = [3, 0], sizes = [32, 64], strides = [1, 1]} : vector<36x64xf32> to vector<32x64xf32>
    %97 = arith.truncf %96 : vector<32x64xf32> to vector<32x64xbf16>
    %98 = tpu.concatenate %93, %95, %97 in 1 : vector<32x64xbf16>, vector<32x64xbf16>, vector<32x64xbf16> -> vector<32x192xbf16>
    %c1_65 = arith.constant 1 : index
    %c0_66 = arith.constant 0 : index
    %c0_67 = arith.constant 0 : index
    %99 = vector.load %arg4[%c1_65, %c0_66, %c0_67] : memref<2x192x64xbf16, #tpu.memory_space<vmem>>, vector<1x192x64xbf16>
    %100 = vector.shape_cast %99 : vector<1x192x64xbf16> to vector<192x64xbf16>
    %cst_68 = arith.constant dense<0.000000e+00> : vector<32x64xf32>
    %101 = tpu.matmul %98, %100, %cst_68 {dimension_numbers = #tpu.dot_dimension_numbers<[1], [0], [0], [1], [0, 0, 1, 1], [], []>} : vector<32x192xbf16>, vector<192x64xbf16>, vector<32x64xf32> -> vector<32x64xf32>
    %c1_69 = arith.constant 1 : index
    %c0_70 = arith.constant 0 : index
    %c0_71 = arith.constant 0 : index
    %102 = vector.load %arg6[%c1_69, %c0_70, %c0_71] : memref<2x3x64xf32, #tpu.memory_space<vmem>>, vector<1x1x64xf32>
    %103 = vector.shape_cast %102 : vector<1x1x64xf32> to vector<1x64xf32>
    %104 = vector.broadcast %103 : vector<1x64xf32> to vector<32x64xf32>
    %105 = arith.addf %101, %104 : vector<32x64xf32>
    %c1_72 = arith.constant 1 : index
    %c1_73 = arith.constant 1 : index
    %c0_74 = arith.constant 0 : index
    %106 = vector.load %arg6[%c1_72, %c1_73, %c0_74] : memref<2x3x64xf32, #tpu.memory_space<vmem>>, vector<1x1x64xf32>
    %107 = vector.shape_cast %106 : vector<1x1x64xf32> to vector<1x64xf32>
    %cst_75 = arith.constant 0.000000e+00 : f32
    %108 = vector.broadcast %cst_75 : f32 to vector<32x64xf32>
    %109 = arith.cmpf oge, %105, %108 : vector<32x64xf32>
    %110 = vector.broadcast %107 : vector<1x64xf32> to vector<32x64xf32>
    %111 = arith.mulf %110, %105 : vector<32x64xf32>
    %112 = arith.select %109, %105, %111 : vector<32x64xi1>, vector<32x64xf32>
    %c1_76 = arith.constant 1 : index
    %c0_77 = arith.constant 0 : index
    %113 = vector.load %arg18[%c1_76, %c0_77] : memref<34x64xf32, #tpu.memory_space<vmem>>, vector<32x64xf32>
    tpu.vector_store %arg18[%c1_76, %c0_77], %112 {strides = array<i32>} : memref<34x64xf32, #tpu.memory_space<vmem>>, vector<32x64xf32>,
    %c0_78 = arith.constant 0 : index
    %c0_79 = arith.constant 0 : index
    %114 = vector.load %arg18[%c0_78, %c0_79] : memref<34x64xf32, #tpu.memory_space<vmem>>, vector<34x64xf32>
    %115 = vector.extract_strided_slice %114 {offsets = [0, 0], sizes = [32, 64], strides = [1, 1]} : vector<34x64xf32> to vector<32x64xf32>
    %116 = arith.truncf %115 : vector<32x64xf32> to vector<32x64xbf16>
    %117 = vector.extract_strided_slice %114 {offsets = [1, 0], sizes = [32, 64], strides = [1, 1]} : vector<34x64xf32> to vector<32x64xf32>
    %118 = arith.truncf %117 : vector<32x64xf32> to vector<32x64xbf16>
    %119 = vector.extract_strided_slice %114 {offsets = [2, 0], sizes = [32, 64], strides = [1, 1]} : vector<34x64xf32> to vector<32x64xf32>
    %120 = arith.truncf %119 : vector<32x64xf32> to vector<32x64xbf16>
    %121 = tpu.concatenate %116, %118, %120 in 1 : vector<32x64xbf16>, vector<32x64xbf16>, vector<32x64xbf16> -> vector<32x192xbf16>
    %c1_80 = arith.constant 1 : index
    %c0_81 = arith.constant 0 : index
    %c0_82 = arith.constant 0 : index
    %122 = vector.load %arg5[%c1_80, %c0_81, %c0_82] : memref<2x192x64xbf16, #tpu.memory_space<vmem>>, vector<1x192x64xbf16>
    %123 = vector.shape_cast %122 : vector<1x192x64xbf16> to vector<192x64xbf16>
    %cst_83 = arith.constant dense<0.000000e+00> : vector<32x64xf32>
    %124 = tpu.matmul %121, %123, %cst_83 {dimension_numbers = #tpu.dot_dimension_numbers<[1], [0], [0], [1], [0, 0, 1, 1], [], []>} : vector<32x192xbf16>, vector<192x64xbf16>, vector<32x64xf32> -> vector<32x64xf32>
    %c1_84 = arith.constant 1 : index
    %c2_85 = arith.constant 2 : index
    %c0_86 = arith.constant 0 : index
    %125 = vector.load %arg6[%c1_84, %c2_85, %c0_86] : memref<2x3x64xf32, #tpu.memory_space<vmem>>, vector<1x1x64xf32>
    %126 = vector.shape_cast %125 : vector<1x1x64xf32> to vector<1x64xf32>
    %127 = vector.broadcast %126 : vector<1x64xf32> to vector<32x64xf32>
    %128 = arith.addf %124, %127 : vector<32x64xf32>
    %c2_87 = arith.constant 2 : index
    %c0_88 = arith.constant 0 : index
    %129 = vector.load %arg17[%c2_87, %c0_88] : memref<36x64xf32, #tpu.memory_space<vmem>>, vector<32x64xf32>
    %130 = arith.addf %128, %129 : vector<32x64xf32>
    %c2_89 = arith.constant 2 : index
    %c0_90 = arith.constant 0 : index
    %131 = vector.load %arg17[%c2_89, %c0_90] : memref<36x64xf32, #tpu.memory_space<vmem>>, vector<32x64xf32>
    tpu.vector_store %arg17[%c2_89, %c0_90], %130 {strides = array<i32>} : memref<36x64xf32, #tpu.memory_space<vmem>>, vector<32x64xf32>,
    %c0_91 = arith.constant 0 : index
    %c0_92 = arith.constant 0 : index
    %132 = vector.load %arg17[%c0_91, %c0_92] : memref<36x64xf32, #tpu.memory_space<vmem>>, vector<36x64xf32>
    %133 = vector.extract_strided_slice %132 {offsets = [0, 0], sizes = [32, 64], strides = [1, 1]} : vector<36x64xf32> to vector<32x64xf32>
    %134 = arith.truncf %133 : vector<32x64xf32> to vector<32x64xbf16>
    %135 = vector.extract_strided_slice %132 {offsets = [1, 0], sizes = [32, 64], strides = [1, 1]} : vector<36x64xf32> to vector<32x64xf32>
    %136 = arith.truncf %135 : vector<32x64xf32> to vector<32x64xbf16>
    %137 = vector.extract_strided_slice %132 {offsets = [2, 0], sizes = [32, 64], strides = [1, 1]} : vector<36x64xf32> to vector<32x64xf32>
    %138 = arith.truncf %137 : vector<32x64xf32> to vector<32x64xbf16>
    %139 = vector.extract_strided_slice %132 {offsets = [3, 0], sizes = [32, 64], strides = [1, 1]} : vector<36x64xf32> to vector<32x64xf32>
    %140 = arith.truncf %139 : vector<32x64xf32> to vector<32x64xbf16>
    %141 = vector.extract_strided_slice %132 {offsets = [4, 0], sizes = [32, 64], strides = [1, 1]} : vector<36x64xf32> to vector<32x64xf32>
    %142 = arith.truncf %141 : vector<32x64xf32> to vector<32x64xbf16>
    %143 = tpu.concatenate %134, %136, %138, %140, %142 in 1 : vector<32x64xbf16>, vector<32x64xbf16>, vector<32x64xbf16>, vector<32x64xbf16>, vector<32x64xbf16> -> vector<32x320xbf16>
    %c0_93 = arith.constant 0 : index
    %c0_94 = arith.constant 0 : index
    %144 = vector.load %arg7[%c0_93, %c0_94] : memref<320x64xbf16, #tpu.memory_space<vmem>>, vector<320x64xbf16>
    %cst_95 = arith.constant dense<0.000000e+00> : vector<32x64xf32>
    %145 = tpu.matmul %143, %144, %cst_95 {dimension_numbers = #tpu.dot_dimension_numbers<[1], [0], [0], [1], [0, 0, 1, 1], [], []>} : vector<32x320xbf16>, vector<320x64xbf16>, vector<32x64xf32> -> vector<32x64xf32>
    %c0_96 = arith.constant 0 : index
    %c0_97 = arith.constant 0 : index
    %146 = vector.load %arg8[%c0_96, %c0_97] : memref<1x64xf32, #tpu.memory_space<vmem>>, vector<1x64xf32>
    %147 = vector.broadcast %146 : vector<1x64xf32> to vector<32x64xf32>
    %148 = arith.addf %145, %147 : vector<32x64xf32>
    %c0_98 = arith.constant 0 : index
    %c0_99 = arith.constant 0 : index
    %149 = vector.load %arg19[%c0_98, %c0_99] : memref<32x64xf32, #tpu.memory_space<vmem>>, vector<32x64xf32>
    %150 = arith.addf %148, %149 : vector<32x64xf32>
    %c2_100 = arith.constant 2 : index
    %c0_101 = arith.constant 0 : index
    %151 = vector.load %arg17[%c2_100, %c0_101] : memref<36x64xf32, #tpu.memory_space<vmem>>, vector<32x64xf32>
    tpu.vector_store %arg17[%c2_100, %c0_101], %150 {strides = array<i32>} : memref<36x64xf32, #tpu.memory_space<vmem>>, vector<32x64xf32>,
    %c0_102 = arith.constant 0 : index
    %c0_103 = arith.constant 0 : index
    %152 = vector.load %arg17[%c0_102, %c0_103] : memref<36x64xf32, #tpu.memory_space<vmem>>, vector<36x64xf32>
    %153 = vector.extract_strided_slice %152 {offsets = [0, 0], sizes = [32, 64], strides = [1, 1]} : vector<36x64xf32> to vector<32x64xf32>
    %154 = arith.truncf %153 : vector<32x64xf32> to vector<32x64xbf16>
    %155 = vector.extract_strided_slice %152 {offsets = [1, 0], sizes = [32, 64], strides = [1, 1]} : vector<36x64xf32> to vector<32x64xf32>
    %156 = arith.truncf %155 : vector<32x64xf32> to vector<32x64xbf16>
    %157 = vector.extract_strided_slice %152 {offsets = [2, 0], sizes = [32, 64], strides = [1, 1]} : vector<36x64xf32> to vector<32x64xf32>
    %158 = arith.truncf %157 : vector<32x64xf32> to vector<32x64xbf16>
    %159 = vector.extract_strided_slice %152 {offsets = [3, 0], sizes = [32, 64], strides = [1, 1]} : vector<36x64xf32> to vector<32x64xf32>
    %160 = arith.truncf %159 : vector<32x64xf32> to vector<32x64xbf16>
    %161 = vector.extract_strided_slice %152 {offsets = [4, 0], sizes = [32, 64], strides = [1, 1]} : vector<36x64xf32> to vector<32x64xf32>
    %162 = arith.truncf %161 : vector<32x64xf32> to vector<32x64xbf16>
    %163 = tpu.concatenate %154, %156, %158, %160, %162 in 1 : vector<32x64xbf16>, vector<32x64xbf16>, vector<32x64xbf16>, vector<32x64xbf16>, vector<32x64xbf16> -> vector<32x320xbf16>
    %c0_104 = arith.constant 0 : index
    %c0_105 = arith.constant 0 : index
    %164 = vector.load %arg9[%c0_104, %c0_105] : memref<320x128xbf16, #tpu.memory_space<vmem>>, vector<320x128xbf16>
    %cst_106 = arith.constant dense<0.000000e+00> : vector<32x128xf32>
    %165 = tpu.matmul %163, %164, %cst_106 {dimension_numbers = #tpu.dot_dimension_numbers<[1], [0], [0], [1], [0, 0, 1, 1], [], []>} : vector<32x320xbf16>, vector<320x128xbf16>, vector<32x128xf32> -> vector<32x128xf32>
    %c0_107 = arith.constant 0 : index
    %c0_108 = arith.constant 0 : index
    %166 = vector.load %arg10[%c0_107, %c0_108] : memref<2x128xf32, #tpu.memory_space<vmem>>, vector<1x128xf32>
    %167 = vector.broadcast %166 : vector<1x128xf32> to vector<32x128xf32>
    %168 = arith.addf %165, %167 : vector<32x128xf32>
    %c1_109 = arith.constant 1 : index
    %c0_110 = arith.constant 0 : index
    %169 = vector.load %arg10[%c1_109, %c0_110] : memref<2x128xf32, #tpu.memory_space<vmem>>, vector<1x128xf32>
    %cst_111 = arith.constant 0.000000e+00 : f32
    %170 = vector.broadcast %cst_111 : f32 to vector<32x128xf32>
    %171 = arith.cmpf oge, %168, %170 : vector<32x128xf32>
    %172 = vector.broadcast %169 : vector<1x128xf32> to vector<32x128xf32>
    %173 = arith.mulf %172, %168 : vector<32x128xf32>
    %174 = arith.select %171, %168, %173 : vector<32x128xi1>, vector<32x128xf32>
    %c1_112 = arith.constant 1 : index
    %c0_113 = arith.constant 0 : index
    %175 = vector.load %arg20[%c1_112, %c0_113] : memref<34x128xf32, #tpu.memory_space<vmem>>, vector<32x128xf32>
    tpu.vector_store %arg20[%c1_112, %c0_113], %174 {strides = array<i32>} : memref<34x128xf32, #tpu.memory_space<vmem>>, vector<32x128xf32>,
    %c0_114 = arith.constant 0 : index
    %c0_115 = arith.constant 0 : index
    %176 = vector.load %arg20[%c0_114, %c0_115] : memref<34x128xf32, #tpu.memory_space<vmem>>, vector<34x128xf32>
    %177 = vector.extract_strided_slice %176 {offsets = [0, 0], sizes = [32, 128], strides = [1, 1]} : vector<34x128xf32> to vector<32x128xf32>
    %178 = arith.truncf %177 : vector<32x128xf32> to vector<32x128xbf16>
    %179 = vector.extract_strided_slice %176 {offsets = [1, 0], sizes = [32, 128], strides = [1, 1]} : vector<34x128xf32> to vector<32x128xf32>
    %180 = arith.truncf %179 : vector<32x128xf32> to vector<32x128xbf16>
    %181 = vector.extract_strided_slice %176 {offsets = [2, 0], sizes = [32, 128], strides = [1, 1]} : vector<34x128xf32> to vector<32x128xf32>
    %182 = arith.truncf %181 : vector<32x128xf32> to vector<32x128xbf16>
    %183 = tpu.concatenate %178, %180, %182 in 1 : vector<32x128xbf16>, vector<32x128xbf16>, vector<32x128xbf16> -> vector<32x384xbf16>
    %c0_116 = arith.constant 0 : index
    %c0_117 = arith.constant 0 : index
    %184 = vector.load %arg11[%c0_116, %c0_117] : memref<384x384xbf16, #tpu.memory_space<vmem>>, vector<384x384xbf16>
    %cst_118 = arith.constant dense<0.000000e+00> : vector<32x384xf32>
    %185 = tpu.matmul %183, %184, %cst_118 {dimension_numbers = #tpu.dot_dimension_numbers<[1], [0], [0], [1], [0, 0, 1, 1], [], []>} : vector<32x384xbf16>, vector<384x384xbf16>, vector<32x384xf32> -> vector<32x384xf32>
    %c0_119 = arith.constant 0 : index
    %c0_120 = arith.constant 0 : index
    %186 = vector.load %arg12[%c0_119, %c0_120] : memref<2x384xf32, #tpu.memory_space<vmem>>, vector<1x384xf32>
    %187 = vector.broadcast %186 : vector<1x384xf32> to vector<32x384xf32>
    %188 = arith.addf %185, %187 : vector<32x384xf32>
    %c1_121 = arith.constant 1 : index
    %c0_122 = arith.constant 0 : index
    %189 = vector.load %arg12[%c1_121, %c0_122] : memref<2x384xf32, #tpu.memory_space<vmem>>, vector<1x384xf32>
    %cst_123 = arith.constant 0.000000e+00 : f32
    %190 = vector.broadcast %cst_123 : f32 to vector<32x384xf32>
    %191 = arith.cmpf oge, %188, %190 : vector<32x384xf32>
    %192 = vector.broadcast %189 : vector<1x384xf32> to vector<32x384xf32>
    %193 = arith.mulf %192, %188 : vector<32x384xf32>
    %194 = arith.select %191, %188, %193 : vector<32x384xi1>, vector<32x384xf32>
    %c1_124 = arith.constant 1 : index
    %c0_125 = arith.constant 0 : index
    %195 = vector.load %arg21[%c1_124, %c0_125] : memref<34x384xf32, #tpu.memory_space<vmem>>, vector<32x384xf32>
    tpu.vector_store %arg21[%c1_124, %c0_125], %194 {strides = array<i32>} : memref<34x384xf32, #tpu.memory_space<vmem>>, vector<32x384xf32>,
    %c0_126 = arith.constant 0 : index
    %c0_127 = arith.constant 0 : index
    %196 = vector.load %arg21[%c0_126, %c0_127] : memref<34x384xf32, #tpu.memory_space<vmem>>, vector<34x384xf32>
    %197 = vector.extract_strided_slice %196 {offsets = [0, 0], sizes = [32, 384], strides = [1, 1]} : vector<34x384xf32> to vector<32x384xf32>
    %198 = arith.truncf %197 : vector<32x384xf32> to vector<32x384xbf16>
    %199 = vector.extract_strided_slice %196 {offsets = [1, 0], sizes = [32, 384], strides = [1, 1]} : vector<34x384xf32> to vector<32x384xf32>
    %200 = arith.truncf %199 : vector<32x384xf32> to vector<32x384xbf16>
    %201 = vector.extract_strided_slice %196 {offsets = [2, 0], sizes = [32, 384], strides = [1, 1]} : vector<34x384xf32> to vector<32x384xf32>
    %202 = arith.truncf %201 : vector<32x384xf32> to vector<32x384xbf16>
    %203 = tpu.concatenate %198, %200, %202 in 1 : vector<32x384xbf16>, vector<32x384xbf16>, vector<32x384xbf16> -> vector<32x1152xbf16>
    %c0_128 = arith.constant 0 : index
    %c0_129 = arith.constant 0 : index
    %204 = vector.load %arg13[%c0_128, %c0_129] : memref<1152x8xbf16, #tpu.memory_space<vmem>>, vector<1152x8xbf16>
    %cst_130 = arith.constant dense<0.000000e+00> : vector<32x8xf32>
    %205 = tpu.matmul %203, %204, %cst_130 {dimension_numbers = #tpu.dot_dimension_numbers<[1], [0], [0], [1], [0, 0, 1, 1], [], []>} : vector<32x1152xbf16>, vector<1152x8xbf16>, vector<32x8xf32> -> vector<32x8xf32>
    %c0_131 = arith.constant 0 : index
    %c0_132 = arith.constant 0 : index
    %206 = vector.load %arg14[%c0_131, %c0_132] : memref<1x8xf32, #tpu.memory_space<vmem>>, vector<1x8xf32>
    %207 = vector.broadcast %206 : vector<1x8xf32> to vector<32x8xf32>
    %208 = arith.addf %205, %207 : vector<32x8xf32>
    %cst_133 = arith.constant 0.000000e+00 : f32
    %209 = vector.broadcast %cst_133 : f32 to vector<32x8xf32>
    %210 = arith.subf %209, %208 : vector<32x8xf32>
    %211 = math.exp %210 : vector<32x8xf32>
    %cst_134 = arith.constant 1.000000e+00 : f32
    %212 = vector.broadcast %cst_134 : f32 to vector<32x8xf32>
    %213 = arith.addf %212, %211 : vector<32x8xf32>
    %214 = tpu.reciprocal %213 {approx = true} : vector<32x8xf32> -> vector<32x8xf32>
    %cst_135 = arith.constant 1.000000e+00 : f32
    %215 = vector.broadcast %cst_135 : f32 to vector<32x8xf32>
    %216 = arith.mulf %215, %214 : vector<32x8xf32>
    %217 = vector.extract_strided_slice %216 {offsets = [0, 0], sizes = [32, 6], strides = [1, 1]} : vector<32x8xf32> to vector<32x6xf32>
    %c0_136 = arith.constant 0 : index
    %c0_137 = arith.constant 0 : index
    %218 = vector.load %arg15[%c0_136, %c0_137] : memref<32x6xf32, #tpu.memory_space<vmem>>, vector<32x6xf32>
    tpu.vector_store %arg15[%c0_136, %c0_137], %217 {strides = array<i32>} : memref<32x6xf32, #tpu.memory_space<vmem>>, vector<32x6xf32>,
    return
  }
  func.func @transform_0(%arg0: i32) -> (i32, i32) {
    %c0_i32 = arith.constant 0 : i32
    %c0_i32_0 = arith.constant 0 : i32
    return %arg0, %c0_i32 : i32, i32
  }
  func.func @transform_1(%arg0: i32) -> (i32, i32) {
    %c0_i32 = arith.constant 0 : i32
    %c0_i32_0 = arith.constant 0 : i32
    %c0_i32_1 = arith.constant 0 : i32
    return %c0_i32, %c0_i32_0 : i32, i32
  }
  func.func @transform_2(%arg0: i32) -> (i32, i32) {
    %c0_i32 = arith.constant 0 : i32
    %c0_i32_0 = arith.constant 0 : i32
    %c0_i32_1 = arith.constant 0 : i32
    return %c0_i32, %c0_i32_0 : i32, i32
  }
  func.func @transform_3(%arg0: i32) -> (i32, i32, i32) {
    %c0_i32 = arith.constant 0 : i32
    %c0_i32_0 = arith.constant 0 : i32
    %c0_i32_1 = arith.constant 0 : i32
    %c0_i32_2 = arith.constant 0 : i32
    return %c0_i32, %c0_i32_0, %c0_i32_1 : i32, i32, i32
  }
  func.func @transform_4(%arg0: i32) -> (i32, i32, i32) {
    %c0_i32 = arith.constant 0 : i32
    %c0_i32_0 = arith.constant 0 : i32
    %c0_i32_1 = arith.constant 0 : i32
    %c0_i32_2 = arith.constant 0 : i32
    return %c0_i32, %c0_i32_0, %c0_i32_1 : i32, i32, i32
  }
  func.func @transform_5(%arg0: i32) -> (i32, i32, i32) {
    %c0_i32 = arith.constant 0 : i32
    %c0_i32_0 = arith.constant 0 : i32
    %c0_i32_1 = arith.constant 0 : i32
    %c0_i32_2 = arith.constant 0 : i32
    return %c0_i32, %c0_i32_0, %c0_i32_1 : i32, i32, i32
  }
  func.func @transform_6(%arg0: i32) -> (i32, i32) {
    %c0_i32 = arith.constant 0 : i32
    %c0_i32_0 = arith.constant 0 : i32
    %c0_i32_1 = arith.constant 0 : i32
    return %c0_i32, %c0_i32_0 : i32, i32
  }
  func.func @transform_7(%arg0: i32) -> (i32, i32) {
    %c0_i32 = arith.constant 0 : i32
    %c0_i32_0 = arith.constant 0 : i32
    %c0_i32_1 = arith.constant 0 : i32
    return %c0_i32, %c0_i32_0 : i32, i32
  }
  func.func @transform_8(%arg0: i32) -> (i32, i32) {
    %c0_i32 = arith.constant 0 : i32
    %c0_i32_0 = arith.constant 0 : i32
    %c0_i32_1 = arith.constant 0 : i32
    return %c0_i32, %c0_i32_0 : i32, i32
  }
  func.func @transform_9(%arg0: i32) -> (i32, i32) {
    %c0_i32 = arith.constant 0 : i32
    %c0_i32_0 = arith.constant 0 : i32
    %c0_i32_1 = arith.constant 0 : i32
    return %c0_i32, %c0_i32_0 : i32, i32
  }
  func.func @transform_10(%arg0: i32) -> (i32, i32) {
    %c0_i32 = arith.constant 0 : i32
    %c0_i32_0 = arith.constant 0 : i32
    %c0_i32_1 = arith.constant 0 : i32
    return %c0_i32, %c0_i32_0 : i32, i32
  }
  func.func @transform_11(%arg0: i32) -> (i32, i32) {
    %c0_i32 = arith.constant 0 : i32
    %c0_i32_0 = arith.constant 0 : i32
    %c0_i32_1 = arith.constant 0 : i32
    return %c0_i32, %c0_i32_0 : i32, i32
  }
  func.func @transform_12(%arg0: i32) -> (i32, i32) {
    %c0_i32 = arith.constant 0 : i32
    %c0_i32_0 = arith.constant 0 : i32
    %c0_i32_1 = arith.constant 0 : i32
    return %c0_i32, %c0_i32_0 : i32, i32
  }
  func.func @transform_13(%arg0: i32) -> (i32, i32) {
    %c0_i32 = arith.constant 0 : i32
    %c0_i32_0 = arith.constant 0 : i32
    %c0_i32_1 = arith.constant 0 : i32
    return %c0_i32, %c0_i32_0 : i32, i32
  }
  func.func @transform_14(%arg0: i32) -> (i32, i32) {
    %c0_i32 = arith.constant 0 : i32
    %c0_i32_0 = arith.constant 0 : i32
    return %arg0, %c0_i32 : i32, i32
  }
}

</mosaic_0001>

<llo_original>
// kernel: tile.27
$region0: #{tile.27}
  #allocation0 [shape = 's32[1]{0}', space=sflag, size = 0x4, scoped, tag = 'scoped memory for tile.27']
  %s0 = inlined_call_operand.vmem [shape: f32[64], index: 0, kind: input, shape index: {}]
  %s1 = inlined_call_operand.vmem [shape: f32[6,64], index: 1, kind: output, shape index: {}]
  // Predicated region
  $region2: #{tile.27} parent=0 // pred_check
    _
  $region3: #{tile.27} parent=0 // pred_check_branch
    %3 = sbr.rel (0) target = $region5
  $region4: #{tile.27} parent=0 // pred_region
    _
  $region5: #{tile.27} parent=0 // pred_fallthru
    _
  %v4 = vld [vmem:[%s0] ss:$0 sm:$0xff]
  %5 = vst [vmem:[%s1] sm:$0xff] %v4

// kernel: tile.29
$region0: #{tile.29}
  %s0 = inlined_call_operand.vmem [shape: f32[6,64], index: 0, kind: input, shape index: {}]
  %s1 = inlined_call_operand.vmem [shape: f32[1,384], index: 1, kind: output, shape index: {}]
  $region1: #{tile.29} parent=0
    #allocation0 [shape = 'u8[12288]{0}', space=vmem, size = 0x3000, scoped, tag = 'scoped mem for output reshape']
    %v2 = vld [vmem:[%s0] ss:$2 sm:$0x7]
    %vm3 = vcmask 523264
    %4 = vst.msk [vmem:[#allocation0] ss:$8 sm:$0x7] %vm3, %v2
    %s5 = scalar_lea.vmem %s0, 1
    %v6 = vld [vmem:[%s5] ss:$2 sm:$0x7]
    %7 = vrot.lane.b32.xlu0 %v6, 64
    %v8 = vpop.permute.xlu0 %7
    %vm9 = vcmask 1048064
    %10 = vst.msk [vmem:[#allocation0] ss:$8 sm:$0x7] %vm9, %v8
    %s12 = sshllo.u32 0, 1
    %v14 = vld [vmem:[#allocation0] sm:%s12]
    %s15 = sshllo.u32 0, 1
    %16 = vst [vmem:[%s1] sm:%s15] %v14
    %s17 = scalar_lea.vmem [#allocation0], 8
    %v18 = vld [vmem:[%s17] sm:%s12]
    %s19 = sshllo.u32 0, 1
    %s20 = scalar_lea.vmem %s1, 1
    %21 = vst [vmem:[%s20] sm:%s19] %v18
    %s22 = scalar_lea.vmem [#allocation0], 16
    %v23 = vld [vmem:[%s22] sm:%s12]
    %s24 = sshllo.u32 0, 1
    %s25 = smul.addr 1, 2
    %s26 = scalar_lea.vmem %s1, %s25
    %27 = vst [vmem:[%s26] sm:%s24] %v23

// kernel: tile.23
$region0: #{tile.23}
  #allocation0 [shape = 's32[1]{0}', space=sflag, size = 0x4, scoped, tag = 'scoped memory for tile.23']
  %s0 = inlined_call_operand.vmem [shape: f32[192], index: 0, kind: input, shape index: {}]
  %s1 = inlined_call_operand.vmem [shape: f32[2,192], index: 1, kind: output, shape index: {}]
  // Predicated region
  $region2: #{tile.23} parent=0 // pred_check
    _
  $region3: #{tile.23} parent=0 // pred_check_branch
    %3 = sbr.rel (0) target = $region5
  $region4: #{tile.23} parent=0 // pred_region
    _
  $region5: #{tile.23} parent=0 // pred_fallthru
    _
  %v4 = vld [vmem:[%s0] ss:$0 sm:$0xff]
  %5 = vst [vmem:[%s1] sm:$0x3] %v4
  %s6 = scalar_lea.vmem %s0, 1
  %v7 = vld [vmem:[%s6] ss:$0 sm:$0xff]
  %s8 = scalar_lea.vmem %s1, 2
  %9 = vst [vmem:[%s8] sm:$0x3] %v7

// kernel: tile.28
$region0: #{tile.28}
  %s0 = inlined_call_operand.vmem [shape: f32[2,192], index: 0, kind: input, shape index: {}]
  %s1 = inlined_call_operand.vmem [shape: f32[1,384], index: 1, kind: output, shape index: {}]
  $region1: #{tile.28} parent=0
    #allocation0 [shape = 'u8[12288]{0}', space=vmem, size = 0x3000, scoped, tag = 'scoped mem for output reshape']
    #allocation1 [shape = 'u8[8192]{0}', space=vmem, size = 0x2000, scoped, tag = 'scoped mem for input reshape']
    %s3 = sshllo.u32 0, 2
    %s4 = scalar_lea.vmem %s0, 2
    %v5 = vld [vmem:[%s4] sm:%s3]
    %s6 = scalar_lea.vmem [#allocation1], 8
    %7 = vst [vmem:[%s6] sm:%s3] %v5
    %v8 = vld [vmem:[%s0] sm:%s3]
    %9 = vst [vmem:[#allocation1] sm:%s3] %v8
    %s10 = scalar_lea.vmem [#allocation1], 8
    %v11 = vld [vmem:[%s10] sm:$0x1]
    %vm12 = vcmask 523264
    %s13 = scalar_lea.vmem [#allocation0], 8
    %14 = vst.msk [vmem:[%s13] sm:$0x1] %vm12, %v11
    %v15 = vld [vmem:[#allocation1] sm:$0x1]
    %16 = vst [vmem:[#allocation0] sm:$0x1] %v15
    %s17 = scalar_lea.vmem [#allocation1], 1
    %v18 = vld [vmem:[%s17] sm:$0x1]
    %s19 = scalar_lea.vmem [#allocation1], 1
    %s20 = smov 3
    %v21 = vld [vmem:[%s19] ss:$8 sm:%s20]
    %vm22 = vcmask 523264
    %v23 = vsel %vm22, %v21, %v18
    %24 = vrot.lane.b32.xlu0 %v23, 64
    %v25 = vpop.permute.xlu0 %24
    %vm26 = vcmask 523264
    %s27 = scalar_lea.vmem [#allocation0], 16
    %28 = vst.msk [vmem:[%s27] sm:$0x1] %vm26, %v25
    %vm29 = vcmask 1048064
    %s30 = scalar_lea.vmem [#allocation0], 8
    %31 = vst.msk [vmem:[%s30] ss:$8 sm:$0x3] %vm29, %v25
    %s33 = sshllo.u32 0, 1
    %v35 = vld [vmem:[#allocation0] sm:%s33]
    %s36 = sshllo.u32 0, 1
    %37 = vst [vmem:[%s1] sm:%s36] %v35
    %s38 = scalar_lea.vmem [#allocation0], 8
    %v39 = vld [vmem:[%s38] sm:%s33]
    %s40 = sshllo.u32 0, 1
    %s41 = scalar_lea.vmem %s1, 1
    %42 = vst [vmem:[%s41] sm:%s40] %v39
    %s43 = scalar_lea.vmem [#allocation0], 16
    %v44 = vld [vmem:[%s43] sm:%s33]
    %s45 = sshllo.u32 0, 1
    %s46 = smul.addr 1, 2
    %s47 = scalar_lea.vmem %s1, %s46
    %48 = vst [vmem:[%s47] sm:%s45] %v44

// kernel: tile.18
$region0: #{tile.18}
  #allocation0 [shape = 's32[1]{0}', space=sflag, size = 0x4, scoped, tag = 'scoped memory for tile.18']
  %s0 = inlined_call_operand.vmem [shape: f32[64], index: 0, kind: input, shape index: {}]
  %s1 = inlined_call_operand.vmem [shape: f32[2,64], index: 1, kind: output, shape index: {}]
  // Predicated region
  $region2: #{tile.18} parent=0 // pred_check
    _
  $region3: #{tile.18} parent=0 // pred_check_branch
    %3 = sbr.rel (0) target = $region5
  $region4: #{tile.18} parent=0 // pred_region
    _
  $region5: #{tile.18} parent=0 // pred_fallthru
    _
  %v4 = vld [vmem:[%s0] ss:$0 sm:$0xff]
  %5 = vst [vmem:[%s1] sm:$0x3] %v4

// kernel: tile.19
$region0: #{tile.19}
  %s0 = inlined_call_operand.vmem [shape: f32[2,64], index: 0, kind: input, shape index: {}]
  %s1 = inlined_call_operand.vmem [shape: f32[1,128], index: 1, kind: output, shape index: {}]
  $region1: #{tile.19} parent=0
    #allocation0 [shape = 'u8[4096]{0}', space=vmem, size = 0x1000, scoped, tag = 'scoped mem for output reshape']
    #allocation1 [shape = 'u8[4096]{0}', space=vmem, size = 0x1000, scoped, tag = 'scoped mem for input reshape']
    %s3 = sshllo.u32 0, 2
    %v4 = vld [vmem:[%s0] sm:%s3]
    %5 = vst [vmem:[#allocation1] sm:%s3] %v4
    %v6 = vld [vmem:[#allocation1] sm:$0x1]
    %vm7 = vcmask 523264
    %8 = vst.msk [vmem:[#allocation0] sm:$0x1] %vm7, %v6
    %s9 = scalar_lea.vmem [#allocation1], 1
    %v10 = vld [vmem:[%s9] sm:$0x1]
    %11 = vrot.lane.b32.xlu0 %v10, 64
    %v12 = vpop.permute.xlu0 %11
    %vm13 = vcmask 1048064
    %14 = vst.msk [vmem:[#allocation0] sm:$0x1] %vm13, %v12
    %s16 = sshllo.u32 0, 1
    %v18 = vld [vmem:[#allocation0] sm:%s16]
    %s19 = sshllo.u32 0, 1
    %20 = vst [vmem:[%s1] sm:%s19] %v18

// kernel: gen_forward.1
$region0: #{gen_forward.1}
  #allocation0 [shape = 'u32[]', space=smem, size = 0x4, offset = 0x4, fixed_abs, tag = 'smem constant byte address 0x4 - core index']
  #allocation1 [shape = 'u32[144,128]{1,0:T(1,128)}', space=vmem, size = 0x12000, scoped, tag = 'internal scratch']
  #allocation2 [shape = 'f32[40,6]{1,0:T(8,128)}', space=vmem, size = 0x5000, scoped, tag = 'scratch operand']
  #allocation3 [shape = 'f32[36,64]{1,0:T(8,128)}', space=vmem, size = 0x5000, scoped, tag = 'scratch operand']
  #allocation4 [shape = 'f32[34,64]{1,0:T(8,128)}', space=vmem, size = 0x5000, scoped, tag = 'scratch operand']
  #allocation5 [shape = 'f32[32,64]{1,0:T(8,128)}', space=vmem, size = 0x4000, scoped, tag = 'scratch operand']
  #allocation6 [shape = 'f32[34,128]{1,0:T(8,128)}', space=vmem, size = 0x5000, scoped, tag = 'scratch operand']
  #allocation7 [shape = 'f32[34,384]{1,0:T(8,128)}', space=vmem, size = 0xf000, scoped, tag = 'scratch operand']
  %s0 = inlined_call_operand.vmem [shape: f32[64,6], index: 0, kind: input, shape index: {}]
  %s1 = inlined_call_operand.vmem [shape: bf16[54,64], index: 1, kind: input, shape index: {}]
  %s2 = inlined_call_operand.vmem [shape: f32[2,64], index: 2, kind: input, shape index: {}]
  %s3 = inlined_call_operand.vmem [shape: bf16[2,192,64], index: 3, kind: input, shape index: {}]
  %s4 = inlined_call_operand.vmem [shape: bf16[2,192,64], index: 4, kind: input, shape index: {}]
  %s5 = inlined_call_operand.vmem [shape: f32[2,3,64], index: 5, kind: input, shape index: {}]
  %s6 = inlined_call_operand.vmem [shape: bf16[320,64], index: 6, kind: input, shape index: {}]
  %s7 = inlined_call_operand.vmem [shape: f32[1,64], index: 7, kind: input, shape index: {}]
  %s8 = inlined_call_operand.vmem [shape: bf16[320,128], index: 8, kind: input, shape index: {}]
  %s9 = inlined_call_operand.vmem [shape: f32[2,128], index: 9, kind: input, shape index: {}]
  %s10 = inlined_call_operand.vmem [shape: bf16[384,384], index: 10, kind: input, shape index: {}]
  %s11 = inlined_call_operand.vmem [shape: f32[2,384], index: 11, kind: input, shape index: {}]
  %s12 = inlined_call_operand.vmem [shape: bf16[1152,8], index: 12, kind: input, shape index: {}]
  %s13 = inlined_call_operand.vmem [shape: f32[1,8], index: 13, kind: input, shape index: {}]
  %s14 = inlined_call_operand.vmem [shape: f32[64,6], index: 14, kind: output, shape index: {}]
  %s15 = sld [smem:[#allocation0]]
  $region89: #{gen_forward.1} parent=0
    _
  %s17 = ssub.s32 1, %s15
  %s18 = scalar_select 0, %s17, %s15
  loop: start=0, step=1, limit=4
  $region2: #{gen_forward.1} parent=0 // loop_pre_header
    _
  $region3: #{gen_forward.1} parent=0 // loop_header
    %s20 = sphi 0, %s24
    %p21 = scmp.ge.s32.totalorder %s20, 4
    %s30 = sphi 0, %s32
    %s33 = sphi 0, %s30
    %s34 = sphi 0, %s33
    %s50 = sphi 0, %s34
    %s54 = sphi 0, %s54
    %s56 = sphi 0, %s54
    %s57 = sphi 0, %s56
    %s71 = sphi 0, %s57
    %s75 = sphi 0, %s75
    %s77 = sphi 0, %s75
    %s78 = sphi 0, %s77
    %s92 = sphi 0, %s78
    %s96 = sphi 0, %s96
    %s98 = sphi 0, %s96
    %s99 = sphi 0, %s98
    %s113 = sphi 0, %s99
    %s117 = sphi 0, %s117
    %s119 = sphi 0, %s117
    %s120 = sphi 0, %s119
    %s134 = sphi 0, %s120
    %s138 = sphi 0, %s138
    %s140 = sphi 0, %s138
    %s141 = sphi 0, %s140
    %s155 = sphi 0, %s141
    %s159 = sphi 0, %s159
    %s161 = sphi 0, %s159
    %s162 = sphi 0, %s161
    %s176 = sphi 0, %s162
    %s180 = sphi 0, %s180
    %s182 = sphi 0, %s180
    %s183 = sphi 0, %s182
    %s197 = sphi 0, %s183
    %s201 = sphi 0, %s201
    %s203 = sphi 0, %s201
    %s204 = sphi 0, %s203
    %s218 = sphi 0, %s204
    %s222 = sphi 0, %s222
    %s224 = sphi 0, %s222
    %s225 = sphi 0, %s224
    %s239 = sphi 0, %s225
    %s243 = sphi 0, %s243
    %s245 = sphi 0, %s243
    %s246 = sphi 0, %s245
    %s260 = sphi 0, %s246
    %s264 = sphi 0, %s264
    %s266 = sphi 0, %s264
    %s267 = sphi 0, %s266
    %s281 = sphi 0, %s267
    %s285 = sphi 0, %s285
    %s287 = sphi 0, %s285
    %s288 = sphi 0, %s287
    %s302 = sphi 0, %s288
    %s306 = sphi 0, %s306
    %s308 = sphi 0, %s306
    %s309 = sphi 0, %s308
    %s323 = sphi 0, %s309
    %s329 = sphi 0, %s331
    %s332 = sphi 0, %s329
    %s333 = sphi 0, %s332
    %s349 = sphi 0, %s333
  $region4: #{gen_forward.1} parent=0 // loop_header_branch
    %23 = sbr.rel (%p21) target = $region8
  $region5: #{gen_forward.1} parent=0 // loop_body
    %s25 = ssub.s32 %s20, 1
    %s26 = ssub.s32 %s20, 2
    %s27 = sadd.s32 %s20, 1
    %s28 = ssub.s32 %s20, %s27
    %p29 = scmp.eq.s32.totalorder %s28, 0
    %s31 = sadd.s32 %s30, 1
    %s32 = scalar_select %p29, %s30, %s31
    %p35 = pneg %p29
    %p36 = scmp.eq.s32.totalorder %s20, 1
    %p37 = por %p35, %p36
    %p38 = scmp.ne.s32.totalorder %s30, %s33
    %p39 = scmp.eq.s32.totalorder %s20, 0
    %p40 = por %p38, %p39
    %p41 = scmp.ne.s32.totalorder %s30, %s33
    %p42 = scmp.eq.s32.totalorder %s25, 1
    %p43 = por %p41, %p42
    %p44 = scmp.ne.s32.totalorder %s33, %s34
    %p45 = scmp.eq.s32.totalorder %s25, 0
    %p46 = por %p44, %p45
    %p47 = scmp.ne.s32.totalorder %s33, %s34
    %p48 = scmp.eq.s32.totalorder %s26, 1
    %p49 = por %p47, %p48
    %p51 = scmp.ne.s32.totalorder %s34, %s50
    %p52 = scmp.eq.s32.totalorder %s26, 0
    %p53 = por %p51, %p52
    %s55 = sadd.s32 %s54, 1
    %p58 = scmp.eq.s32.totalorder %s20, 1
    %p59 = scmp.ne.s32.totalorder %s54, %s56
    %p60 = scmp.eq.s32.totalorder %s20, 0
    %p61 = por %p59, %p60
    %p62 = scmp.ne.s32.totalorder %s54, %s56
    %p63 = scmp.eq.s32.totalorder %s25, 1
    %p64 = por %p62, %p63
    %p65 = scmp.ne.s32.totalorder %s56, %s57
    %p66 = scmp.eq.s32.totalorder %s25, 0
    %p67 = por %p65, %p66
    %p68 = scmp.ne.s32.totalorder %s56, %s57
    %p69 = scmp.eq.s32.totalorder %s26, 1
    %p70 = por %p68, %p69
    %p72 = scmp.ne.s32.totalorder %s57, %s71
    %p73 = scmp.eq.s32.totalorder %s26, 0
    %p74 = por %p72, %p73
    %s76 = sadd.s32 %s75, 1
    %p79 = scmp.eq.s32.totalorder %s20, 1
    %p80 = scmp.ne.s32.totalorder %s75, %s77
    %p81 = scmp.eq.s32.totalorder %s20, 0
    %p82 = por %p80, %p81
    %p83 = scmp.ne.s32.totalorder %s75, %s77
    %p84 = scmp.eq.s32.totalorder %s25, 1
    %p85 = por %p83, %p84
    %p86 = scmp.ne.s32.totalorder %s77, %s78
    %p87 = scmp.eq.s32.totalorder %s25, 0
    %p88 = por %p86, %p87
    %p89 = scmp.ne.s32.totalorder %s77, %s78
    %p90 = scmp.eq.s32.totalorder %s26, 1
    %p91 = por %p89, %p90
    %p93 = scmp.ne.s32.totalorder %s78, %s92
    %p94 = scmp.eq.s32.totalorder %s26, 0
    %p95 = por %p93, %p94
    %s97 = sadd.s32 %s96, 1
    %p100 = scmp.eq.s32.totalorder %s20, 1
    %p101 = scmp.ne.s32.totalorder %s96, %s98
    %p102 = scmp.eq.s32.totalorder %s20, 0
    %p103 = por %p101, %p102
    %p104 = scmp.ne.s32.totalorder %s96, %s98
    %p105 = scmp.eq.s32.totalorder %s25, 1
    %p106 = por %p104, %p105
    %p107 = scmp.ne.s32.totalorder %s98, %s99
    %p108 = scmp.eq.s32.totalorder %s25, 0
    %p109 = por %p107, %p108
    %p110 = scmp.ne.s32.totalorder %s98, %s99
    %p111 = scmp.eq.s32.totalorder %s26, 1
    %p112 = por %p110, %p111
    %p114 = scmp.ne.s32.totalorder %s99, %s113
    %p115 = scmp.eq.s32.totalorder %s26, 0
    %p116 = por %p114, %p115
    %s118 = sadd.s32 %s117, 1
    %p121 = scmp.eq.s32.totalorder %s20, 1
    %p122 = scmp.ne.s32.totalorder %s117, %s119
    %p123 = scmp.eq.s32.totalorder %s20, 0
    %p124 = por %p122, %p123
    %p125 = scmp.ne.s32.totalorder %s117, %s119
    %p126 = scmp.eq.s32.totalorder %s25, 1
    %p127 = por %p125, %p126
    %p128 = scmp.ne.s32.totalorder %s119, %s120
    %p129 = scmp.eq.s32.totalorder %s25, 0
    %p130 = por %p128, %p129
    %p131 = scmp.ne.s32.totalorder %s119, %s120
    %p132 = scmp.eq.s32.totalorder %s26, 1
    %p133 = por %p131, %p132
    %p135 = scmp.ne.s32.totalorder %s120, %s134
    %p136 = scmp.eq.s32.totalorder %s26, 0
    %p137 = por %p135, %p136
    %s139 = sadd.s32 %s138, 1
    %p142 = scmp.eq.s32.totalorder %s20, 1
    %p143 = scmp.ne.s32.totalorder %s138, %s140
    %p144 = scmp.eq.s32.totalorder %s20, 0
    %p145 = por %p143, %p144
    %p146 = scmp.ne.s32.totalorder %s138, %s140
    %p147 = scmp.eq.s32.totalorder %s25, 1
    %p148 = por %p146, %p147
    %p149 = scmp.ne.s32.totalorder %s140, %s141
    %p150 = scmp.eq.s32.totalorder %s25, 0
    %p151 = por %p149, %p150
    %p152 = scmp.ne.s32.totalorder %s140, %s141
    %p153 = scmp.eq.s32.totalorder %s26, 1
    %p154 = por %p152, %p153
    %p156 = scmp.ne.s32.totalorder %s141, %s155
    %p157 = scmp.eq.s32.totalorder %s26, 0
    %p158 = por %p156, %p157
    %s160 = sadd.s32 %s159, 1
    %p163 = scmp.eq.s32.totalorder %s20, 1
    %p164 = scmp.ne.s32.totalorder %s159, %s161
    %p165 = scmp.eq.s32.totalorder %s20, 0
    %p166 = por %p164, %p165
    %p167 = scmp.ne.s32.totalorder %s159, %s161
    %p168 = scmp.eq.s32.totalorder %s25, 1
    %p169 = por %p167, %p168
    %p170 = scmp.ne.s32.totalorder %s161, %s162
    %p171 = scmp.eq.s32.totalorder %s25, 0
    %p172 = por %p170, %p171
    %p173 = scmp.ne.s32.totalorder %s161, %s162
    %p174 = scmp.eq.s32.totalorder %s26, 1
    %p175 = por %p173, %p174
    %p177 = scmp.ne.s32.totalorder %s162, %s176
    %p178 = scmp.eq.s32.totalorder %s26, 0
    %p179 = por %p177, %p178
    %s181 = sadd.s32 %s180, 1
    %p184 = scmp.eq.s32.totalorder %s20, 1
    %p185 = scmp.ne.s32.totalorder %s180, %s182
    %p186 = scmp.eq.s32.totalorder %s20, 0
    %p187 = por %p185, %p186
    %p188 = scmp.ne.s32.totalorder %s180, %s182
    %p189 = scmp.eq.s32.totalorder %s25, 1
    %p190 = por %p188, %p189
    %p191 = scmp.ne.s32.totalorder %s182, %s183
    %p192 = scmp.eq.s32.totalorder %s25, 0
    %p193 = por %p191, %p192
    %p194 = scmp.ne.s32.totalorder %s182, %s183
    %p195 = scmp.eq.s32.totalorder %s26, 1
    %p196 = por %p194, %p195
    %p198 = scmp.ne.s32.totalorder %s183, %s197
    %p199 = scmp.eq.s32.totalorder %s26, 0
    %p200 = por %p198, %p199
    %s202 = sadd.s32 %s201, 1
    %p205 = scmp.eq.s32.totalorder %s20, 1
    %p206 = scmp.ne.s32.totalorder %s201, %s203
    %p207 = scmp.eq.s32.totalorder %s20, 0
    %p208 = por %p206, %p207
    %p209 = scmp.ne.s32.totalorder %s201, %s203
    %p210 = scmp.eq.s32.totalorder %s25, 1
    %p211 = por %p209, %p210
    %p212 = scmp.ne.s32.totalorder %s203, %s204
    %p213 = scmp.eq.s32.totalorder %s25, 0
    %p214 = por %p212, %p213
    %p215 = scmp.ne.s32.totalorder %s203, %s204
    %p216 = scmp.eq.s32.totalorder %s26, 1
    %p217 = por %p215, %p216
    %p219 = scmp.ne.s32.totalorder %s204, %s218
    %p220 = scmp.eq.s32.totalorder %s26, 0
    %p221 = por %p219, %p220
    %s223 = sadd.s32 %s222, 1
    %p226 = scmp.eq.s32.totalorder %s20, 1
    %p227 = scmp.ne.s32.totalorder %s222, %s224
    %p228 = scmp.eq.s32.totalorder %s20, 0
    %p229 = por %p227, %p228
    %p230 = scmp.ne.s32.totalorder %s222, %s224
    %p231 = scmp.eq.s32.totalorder %s25, 1
    %p232 = por %p230, %p231
    %p233 = scmp.ne.s32.totalorder %s224, %s225
    %p234 = scmp.eq.s32.totalorder %s25, 0
    %p235 = por %p233, %p234
    %p236 = scmp.ne.s32.totalorder %s224, %s225
    %p237 = scmp.eq.s32.totalorder %s26, 1
    %p238 = por %p236, %p237
    %p240 = scmp.ne.s32.totalorder %s225, %s239
    %p241 = scmp.eq.s32.totalorder %s26, 0
    %p242 = por %p240, %p241
    %s244 = sadd.s32 %s243, 1
    %p247 = scmp.eq.s32.totalorder %s20, 1
    %p248 = scmp.ne.s32.totalorder %s243, %s245
    %p249 = scmp.eq.s32.totalorder %s20, 0
    %p250 = por %p248, %p249
    %p251 = scmp.ne.s32.totalorder %s243, %s245
    %p252 = scmp.eq.s32.totalorder %s25, 1
    %p253 = por %p251, %p252
    %p254 = scmp.ne.s32.totalorder %s245, %s246
    %p255 = scmp.eq.s32.totalorder %s25, 0
    %p256 = por %p254, %p255
    %p257 = scmp.ne.s32.totalorder %s245, %s246
    %p258 = scmp.eq.s32.totalorder %s26, 1
    %p259 = por %p257, %p258
    %p261 = scmp.ne.s32.totalorder %s246, %s260
    %p262 = scmp.eq.s32.totalorder %s26, 0
    %p263 = por %p261, %p262
    %s265 = sadd.s32 %s264, 1
    %p268 = scmp.eq.s32.totalorder %s20, 1
    %p269 = scmp.ne.s32.totalorder %s264, %s266
    %p270 = scmp.eq.s32.totalorder %s20, 0
    %p271 = por %p269, %p270
    %p272 = scmp.ne.s32.totalorder %s264, %s266
    %p273 = scmp.eq.s32.totalorder %s25, 1
    %p274 = por %p272, %p273
    %p275 = scmp.ne.s32.totalorder %s266, %s267
    %p276 = scmp.eq.s32.totalorder %s25, 0
    %p277 = por %p275, %p276
    %p278 = scmp.ne.s32.totalorder %s266, %s267
    %p279 = scmp.eq.s32.totalorder %s26, 1
    %p280 = por %p278, %p279
    %p282 = scmp.ne.s32.totalorder %s267, %s281
    %p283 = scmp.eq.s32.totalorder %s26, 0
    %p284 = por %p282, %p283
    %s286 = sadd.s32 %s285, 1
    %p289 = scmp.eq.s32.totalorder %s20, 1
    %p290 = scmp.ne.s32.totalorder %s285, %s287
    %p291 = scmp.eq.s32.totalorder %s20, 0
    %p292 = por %p290, %p291
    %p293 = scmp.ne.s32.totalorder %s285, %s287
    %p294 = scmp.eq.s32.totalorder %s25, 1
    %p295 = por %p293, %p294
    %p296 = scmp.ne.s32.totalorder %s287, %s288
    %p297 = scmp.eq.s32.totalorder %s25, 0
    %p298 = por %p296, %p297
    %p299 = scmp.ne.s32.totalorder %s287, %s288
    %p300 = scmp.eq.s32.totalorder %s26, 1
    %p301 = por %p299, %p300
    %p303 = scmp.ne.s32.totalorder %s288, %s302
    %p304 = scmp.eq.s32.totalorder %s26, 0
    %p305 = por %p303, %p304
    %s307 = sadd.s32 %s306, 1
    %p310 = scmp.eq.s32.totalorder %s20, 1
    %p311 = scmp.ne.s32.totalorder %s306, %s308
    %p312 = scmp.eq.s32.totalorder %s20, 0
    %p313 = por %p311, %p312
    %p314 = scmp.ne.s32.totalorder %s306, %s308
    %p315 = scmp.eq.s32.totalorder %s25, 1
    %p316 = por %p314, %p315
    %p317 = scmp.ne.s32.totalorder %s308, %s309
    %p318 = scmp.eq.s32.totalorder %s25, 0
    %p319 = por %p317, %p318
    %p320 = scmp.ne.s32.totalorder %s308, %s309
    %p321 = scmp.eq.s32.totalorder %s26, 1
    %p322 = por %p320, %p321
    %p324 = scmp.ne.s32.totalorder %s309, %s323
    %p325 = scmp.eq.s32.totalorder %s26, 0
    %p326 = por %p324, %p325
    %s327 = ssub.s32 %s20, %s27
    %p328 = scmp.eq.s32.totalorder %s327, 0
    %s330 = sadd.s32 %s329, 1
    %s331 = scalar_select %p328, %s329, %s330
    %p334 = pneg %p328
    %p335 = scmp.eq.s32.totalorder %s20, 1
    %p336 = por %p334, %p335
    %p337 = scmp.ne.s32.totalorder %s329, %s332
    %p338 = scmp.eq.s32.totalorder %s20, 0
    %p339 = por %p337, %p338
    %p340 = scmp.ne.s32.totalorder %s329, %s332
    %p341 = scmp.eq.s32.totalorder %s25, 1
    %p342 = por %p340, %p341
    %p343 = scmp.ne.s32.totalorder %s332, %s333
    %p344 = scmp.eq.s32.totalorder %s25, 0
    %p345 = por %p343, %p344
    %p346 = scmp.ne.s32.totalorder %s332, %s333
    %p347 = scmp.eq.s32.totalorder %s26, 1
    %p348 = por %p346, %p347
    %p350 = scmp.ne.s32.totalorder %s333, %s349
    %p351 = scmp.eq.s32.totalorder %s26, 0
    %p352 = por %p350, %p351
    %p353 = scmp.le.s32.totalorder 1, %s20
    %p354 = scmp.lt.s32.totalorder %s20, 3
    %p355 = pnand %p353, %p354
    %p356 = pneg %p355
    // Predicated region
    $region9: #{gen_forward.1} parent=5 // pred_check
      _
    $region10: #{gen_forward.1} parent=5 // pred_check_branch
      %358 = sbr.rel (%p355) target = $region12
    $region11: #{gen_forward.1} parent=5 // pred_region
      %s359 = ssub.s32 %s20, 1
      // Predicated region
      $region13: #{gen_forward.1} parent=11 // pred_check
        %p360 = pneg %p67
      $region14: #{gen_forward.1} parent=11 // pred_check_branch
        %362 = sbr.rel (%p360) target = $region16
      $region15: #{gen_forward.1} parent=11 // pred_region
        _
      $region16: #{gen_forward.1} parent=11 // pred_fallthru
        _
      // Predicated region
      $region17: #{gen_forward.1} parent=11 // pred_check
        %p363 = pneg %p88
      $region18: #{gen_forward.1} parent=11 // pred_check_branch
        %365 = sbr.rel (%p363) target = $region20
      $region19: #{gen_forward.1} parent=11 // pred_region
        _
      $region20: #{gen_forward.1} parent=11 // pred_fallthru
        _
      // Predicated region
      $region21: #{gen_forward.1} parent=11 // pred_check
        %p366 = pneg %p109
      $region22: #{gen_forward.1} parent=11 // pred_check_branch
        %368 = sbr.rel (%p366) target = $region24
      $region23: #{gen_forward.1} parent=11 // pred_region
        _
      $region24: #{gen_forward.1} parent=11 // pred_fallthru
        _
      // Predicated region
      $region25: #{gen_forward.1} parent=11 // pred_check
        %p369 = pneg %p130
      $region26: #{gen_forward.1} parent=11 // pred_check_branch
        %371 = sbr.rel (%p369) target = $region28
      $region27: #{gen_forward.1} parent=11 // pred_region
        _
      $region28: #{gen_forward.1} parent=11 // pred_fallthru
        _
      // Predicated region
      $region29: #{gen_forward.1} parent=11 // pred_check
        %p372 = pneg %p151
      $region30: #{gen_forward.1} parent=11 // pred_check_branch
        %374 = sbr.rel (%p372) target = $region32
      $region31: #{gen_forward.1} parent=11 // pred_region
        _
      $region32: #{gen_forward.1} parent=11 // pred_fallthru
        _
      // Predicated region
      $region33: #{gen_forward.1} parent=11 // pred_check
        %p375 = pneg %p172
      $region34: #{gen_forward.1} parent=11 // pred_check_branch
        %377 = sbr.rel (%p375) target = $region36
      $region35: #{gen_forward.1} parent=11 // pred_region
        _
      $region36: #{gen_forward.1} parent=11 // pred_fallthru
        _
      // Predicated region
      $region37: #{gen_forward.1} parent=11 // pred_check
        %p378 = pneg %p193
      $region38: #{gen_forward.1} parent=11 // pred_check_branch
        %380 = sbr.rel (%p378) target = $region40
      $region39: #{gen_forward.1} parent=11 // pred_region
        _
      $region40: #{gen_forward.1} parent=11 // pred_fallthru
        _
      // Predicated region
      $region41: #{gen_forward.1} parent=11 // pred_check
        %p381 = pneg %p214
      $region42: #{gen_forward.1} parent=11 // pred_check_branch
        %383 = sbr.rel (%p381) target = $region44
      $region43: #{gen_forward.1} parent=11 // pred_region
        _
      $region44: #{gen_forward.1} parent=11 // pred_fallthru
        _
      // Predicated region
      $region45: #{gen_forward.1} parent=11 // pred_check
        %p384 = pneg %p235
      $region46: #{gen_forward.1} parent=11 // pred_check_branch
        %386 = sbr.rel (%p384) target = $region48
      $region47: #{gen_forward.1} parent=11 // pred_region
        _
      $region48: #{gen_forward.1} parent=11 // pred_fallthru
        _
      // Predicated region
      $region49: #{gen_forward.1} parent=11 // pred_check
        %p387 = pneg %p256
      $region50: #{gen_forward.1} parent=11 // pred_check_branch
        %389 = sbr.rel (%p387) target = $region52
      $region51: #{gen_forward.1} parent=11 // pred_region
        _
      $region52: #{gen_forward.1} parent=11 // pred_fallthru
        _
      // Predicated region
      $region53: #{gen_forward.1} parent=11 // pred_check
        %p390 = pneg %p277
      $region54: #{gen_forward.1} parent=11 // pred_check_branch
        %392 = sbr.rel (%p390) target = $region56
      $region55: #{gen_forward.1} parent=11 // pred_region
        _
      $region56: #{gen_forward.1} parent=11 // pred_fallthru
        _
      // Predicated region
      $region57: #{gen_forward.1} parent=11 // pred_check
        %p393 = pneg %p298
      $region58: #{gen_forward.1} parent=11 // pred_check_branch
        %395 = sbr.rel (%p393) target = $region60
      $region59: #{gen_forward.1} parent=11 // pred_region
        _
      $region60: #{gen_forward.1} parent=11 // pred_fallthru
        _
      // Predicated region
      $region61: #{gen_forward.1} parent=11 // pred_check
        %p396 = pneg %p319
      $region62: #{gen_forward.1} parent=11 // pred_check_branch
        %398 = sbr.rel (%p396) target = $region64
      $region63: #{gen_forward.1} parent=11 // pred_region
        _
      $region64: #{gen_forward.1} parent=11 // pred_fallthru
        _
    $region12: #{gen_forward.1} parent=5 // pred_fallthru
      _
    %p399 = scmp.lt.s32.totalorder %s20, 2
    // Predicated region
    $region65: #{gen_forward.1} parent=5 // pred_check
      %p400 = pneg %p399
    $region66: #{gen_forward.1} parent=5 // pred_check_branch
      %402 = sbr.rel (%p400) target = $region68
    $region67: #{gen_forward.1} parent=5 // pred_region
      // Predicated region
      $region69: #{gen_forward.1} parent=67 // pred_check
        %p403 = pneg %p40
      $region70: #{gen_forward.1} parent=67 // pred_check_branch
        %405 = sbr.rel (%p403) target = $region72
      $region71: #{gen_forward.1} parent=67 // pred_region
        %s406 = smul.u32 4, %s20
        %p407 = scmp.lt.s32.totalorder %s406, 7
        %s408 = scalar_select %p407, %s406, 7
        %s409 = smul.addr %s408, 8
        %s410 = scalar_lea.vmem %s0, %s409
        %s411 = smul.u32 4, %s20
      $region72: #{gen_forward.1} parent=67 // pred_fallthru
        _
    $region68: #{gen_forward.1} parent=5 // pred_fallthru
      _
    %p412 = scmp.le.s32.totalorder 1, %s20
    %p413 = scmp.lt.s32.totalorder %s20, 3
    %p414 = pnand %p412, %p413
    %p415 = pneg %p414
    // Predicated region
    $region73: #{gen_forward.1} parent=5 // pred_check
      _
    $region74: #{gen_forward.1} parent=5 // pred_check_branch
      %417 = sbr.rel (%p414) target = $region76
    $region75: #{gen_forward.1} parent=5 // pred_region
      %s418 = ssub.s32 %s20, 1
      %s419 = smul.u32 4, %s25
      %p420 = scmp.lt.s32.totalorder %s419, 7
      %s421 = scalar_select %p420, %s419, 7
      %s422 = smul.addr %s421, 8
      %s423 = scalar_lea.vmem %s0, %s422
      %p424 = pneg %p46
      %p425 = pneg %p43
      %p426 = pneg %p67
      %p427 = pneg %p64
      %p428 = pneg %p88
      %p429 = pneg %p85
      %p430 = pneg %p109
      %p431 = pneg %p106
      %p432 = pneg %p130
      %p433 = pneg %p127
      %p434 = pneg %p151
      %p435 = pneg %p148
      %p436 = pneg %p172
      %p437 = pneg %p169
      %p438 = pneg %p193
      %p439 = pneg %p190
      %p440 = pneg %p214
      %p441 = pneg %p211
      %p442 = pneg %p235
      %p443 = pneg %p232
      %p444 = pneg %p256
      %p445 = pneg %p253
      %p446 = pneg %p277
      %p447 = pneg %p274
      %p448 = pneg %p298
      %p449 = pneg %p295
      %p450 = pneg %p319
      %p451 = pneg %p316
      %p452 = pneg %p345
      %p453 = pneg %p342
      %s454 = smul.u32 4, %s25
      %p455 = scmp.lt.s32.totalorder %s454, 7
      %s456 = scalar_select %p455, %s454, 7
      %s457 = smul.addr %s456, 8
      %s458 = scalar_lea.vmem %s14, %s457
      %s459 = smul.u32 4, %s25
      %p460 = scmp.lt.s32.totalorder %s459, 7
      %s461 = scalar_select %p460, %s459, 7
      %s462 = smul.addr %s461, 8
      %s463 = scalar_lea.vmem %s0, %s462
      %s464 = smul.u32 4, %s25
      %s465 = smul.u32 4, %s25
      %p466 = scmp.lt.s32.totalorder %s465, 7
      %s467 = scalar_select %p466, %s465, 7
      %s468 = smul.addr %s467, 8
      %s469 = scalar_lea.vmem %s14, %s468
      %s470 = smul.u32 4, %s25
      %vm472 = vcmask 44032
      %473 = vst.msk [vmem:[#allocation2] sm:$0xf] %vm472, 0.0
      %474 = vst.msk [vmem:[#allocation2 + $0x24] sm:$0xf] %vm472, 0.0
      %vm475 = vcmask 517120
      %476 = vst.msk [vmem:[#allocation3] sm:$0x3] %vm475, 0.0
      %477 = vst.msk [vmem:[#allocation3 + $0x22] sm:$0x3] %vm475, 0.0
      %vm478 = vcmask 516096
      %479 = vst.msk [vmem:[#allocation4] sm:$0x1] %vm478, 0.0
      %480 = vst.msk [vmem:[#allocation4 + $0x21] sm:$0x1] %vm478, 0.0
      %481 = vst [vmem:[#allocation6] sm:$0x1] 0.0
      %482 = vst [vmem:[#allocation6 + $0x21] sm:$0x1] 0.0
      %v483 = vlaneseq
      %vm484 = vcmp.ge.s32.totalorder %v483, 0
      %vm485 = vcmp.lt.s32.totalorder %v483, 384
      %vm486 = vmand %vm484, %vm485
      %487 = vst.msk [vmem:[#allocation7] ss:$8 sm:$0x7] %vm486, 0.0
      %488 = vst.msk [vmem:[#allocation7] ss:$8 sm:$0x0] %vm486, 0.0
      %s489 = scalar_lea.vmem [#allocation7], 97
      %490 = vst.msk [vmem:[%s489] ss:$8 sm:$0x7] %vm486, 0.0
      %491 = vst.msk [vmem:[%s489] ss:$8 sm:$0x0] %vm486, 0.0
      %v492 = vld [vmem:[%s463] sm:$0xff]
      %v493 = vld [vmem:[%s463 + $0x8] sm:$0xff]
      %v494 = vld [vmem:[%s463 + $0x10] sm:$0xff]
      %v495 = vld [vmem:[%s463 + $0x18] sm:$0xff]
      %vm496 = vcmask 48128
      %497 = vst.msk [vmem:[#allocation2 + $0x4] sm:$0xff] %vm496, %v492
      %498 = vst.msk [vmem:[#allocation2 + $0xc] sm:$0xff] %vm496, %v493
      %499 = vst.msk [vmem:[#allocation2 + $0x14] sm:$0xff] %vm496, %v494
      %500 = vst.msk [vmem:[#allocation2 + $0x1c] sm:$0xff] %vm496, %v495
      %v501 = vld [vmem:[#allocation2] sm:$0xff]
      %v502 = vld [vmem:[#allocation2 + $0x8] sm:$0xff]
      %v503 = vld [vmem:[#allocation2 + $0x10] sm:$0xff]
      %v504 = vld [vmem:[#allocation2 + $0x18] sm:$0xff]
      %v505 = vld [vmem:[#allocation2 + $0x20] sm:$0xff]
      %v506 = vpack.c.bf16 %v502, %v501
      %v507 = vpack.c.bf16 %v504, %v503
      %v508 = vpack.c.bf16 %v505, %v505
      %v509 = vpack.c.bf16 %v503, %v502
      %v510 = vpack.c.bf16 %v505, %v504
      %vm511 = vsmask.f32 7424
      %v513 = vshrl.u32 %v506, 16
      %v515 = vshll.u32 %v506, 16
      %v517 = vrot.slane %v515, 1
      %v518 = vor.u32 %v513, %v517
      %v520 = vshll.u32 %v507, 16
      %v522 = vrot.slane %v520, 1
      %v523 = vsel %vm511, %v518, %v522
      %v524 = vshrl.u32 %v507, 16
      %v526 = vor.u32 %v524, %v522
      %v528 = vshll.u32 %v508, 16
      %v530 = vrot.slane %v528, 1
      %v531 = vsel %vm511, %v526, %v530
      %532 = vrot.lane.b32.xlu0 %v523, 6
      %v533 = vpop.permute.xlu0 %532
      %534 = vrot.lane.b32.xlu0 %v531, 6
      %v535 = vpop.permute.xlu0 %534
      %vm539 = vcmask 1046528
      %v540 = vrot.slane %v506, 1
      %v541 = vrot.slane %v507, 1
      %v542 = vsel %vm539, %v540, %v541
      %v543 = vrot.slane %v508, 1
      %v544 = vsel %vm539, %v541, %v543
      %545 = vrot.lane.b32.xlu0 %v542, 12
      %v546 = vpop.permute.xlu0 %545
      %547 = vrot.lane.b32.xlu0 %v544, 12
      %v548 = vpop.permute.xlu0 %547
      %vm549 = vsmask.f32 6400
      %v550 = vrot.slane %v513, 1
      %v551 = vrot.slane %v515, 2
      %v552 = vor.u32 %v550, %v551
      %v553 = vrot.slane %v524, 1
      %v554 = vrot.slane %v520, 2
      %v555 = vor.u32 %v553, %v554
      %v556 = vsel %vm549, %v552, %v555
      %v557 = vshrl.u32 %v508, 16
      %v559 = vrot.slane %v557, 1
      %v560 = vrot.slane %v528, 2
      %v561 = vor.u32 %v559, %v560
      %v562 = vsel %vm549, %v555, %v561
      %563 = vrot.lane.b32.xlu0 %v556, 18
      %v564 = vpop.permute.xlu0 %563
      %565 = vrot.lane.b32.xlu0 %v562, 18
      %v566 = vpop.permute.xlu0 %565
      %vm567 = vcmask 1045504
      %v568 = vrot.slane %v506, 2
      %v569 = vrot.slane %v507, 2
      %v570 = vsel %vm567, %v568, %v569
      %v571 = vrot.slane %v508, 2
      %v572 = vsel %vm567, %v569, %v571
      %573 = vrot.lane.b32.xlu0 %v570, 24
      %v574 = vpop.permute.xlu0 %573
      %575 = vrot.lane.b32.xlu0 %v572, 24
      %v576 = vpop.permute.xlu0 %575
      %vm577 = vsmask.f32 5376
      %v578 = vrot.slane %v513, 2
      %v579 = vrot.slane %v515, 3
      %v580 = vor.u32 %v578, %v579
      %v581 = vrot.slane %v524, 2
      %v582 = vrot.slane %v520, 3
      %v583 = vor.u32 %v581, %v582
      %v584 = vsel %vm577, %v580, %v583
      %v585 = vrot.slane %v557, 2
      %v586 = vrot.slane %v528, 3
      %v587 = vor.u32 %v585, %v586
      %v588 = vsel %vm577, %v583, %v587
      %589 = vrot.lane.b32.xlu0 %v584, 30
      %v590 = vpop.permute.xlu0 %589
      %591 = vrot.lane.b32.xlu0 %v588, 30
      %v592 = vpop.permute.xlu0 %591
      %vm593 = vcmask 1044480
      %v594 = vrot.slane %v506, 3
      %v595 = vrot.slane %v507, 3
      %v596 = vsel %vm593, %v594, %v595
      %v597 = vrot.slane %v508, 3
      %v598 = vsel %vm593, %v595, %v597
      %599 = vrot.lane.b32.xlu0 %v596, 36
      %v600 = vpop.permute.xlu0 %599
      %601 = vrot.lane.b32.xlu0 %v598, 36
      %v602 = vpop.permute.xlu0 %601
      %vm603 = vsmask.f32 4352
      %v604 = vrot.slane %v513, 3
      %v605 = vrot.slane %v515, 4
      %v606 = vor.u32 %v604, %v605
      %v607 = vrot.slane %v524, 3
      %v608 = vrot.slane %v520, 4
      %v609 = vor.u32 %v607, %v608
      %v610 = vsel %vm603, %v606, %v609
      %v611 = vrot.slane %v557, 3
      %v612 = vrot.slane %v528, 4
      %v613 = vor.u32 %v611, %v612
      %v614 = vsel %vm603, %v609, %v613
      %615 = vrot.lane.b32.xlu0 %v610, 42
      %v616 = vpop.permute.xlu0 %615
      %617 = vrot.lane.b32.xlu0 %v614, 42
      %v618 = vpop.permute.xlu0 %617
      %621 = vrot.lane.b32.xlu0 %v509, 48
      %v622 = vpop.permute.xlu0 %621
      %623 = vrot.lane.b32.xlu0 %v510, 48
      %v624 = vpop.permute.xlu0 %623
      %v626 = vsel %vm496, %v506, %v533
      %v628 = vsel %vm496, %v507, %v535
      %vm629 = vcmask 97280
      %v631 = vsel %vm629, %v626, %v546
      %v633 = vsel %vm629, %v628, %v548
      %vm634 = vcmask 146432
      %v636 = vsel %vm634, %v631, %v564
      %v638 = vsel %vm634, %v633, %v566
      %vm639 = vcmask 195584
      %v641 = vsel %vm639, %v636, %v574
      %v643 = vsel %vm639, %v638, %v576
      %vm644 = vcmask 244736
      %v646 = vsel %vm644, %v641, %v590
      %v648 = vsel %vm644, %v643, %v592
      %vm649 = vcmask 293888
      %v651 = vsel %vm649, %v646, %v600
      %v653 = vsel %vm649, %v648, %v602
      %vm654 = vcmask 343040
      %v656 = vsel %vm654, %v651, %v616
      %v658 = vsel %vm654, %v653, %v618
      %vm659 = vcmask 392192
      %v661 = vsel %vm659, %v656, %v622
      %v663 = vsel %vm659, %v658, %v624
      %v664 = vld [vmem:[%s1] sm:$0xf]
      %v665 = vld [vmem:[%s1 + $0x4] sm:$0xf]
      %v666 = vld [vmem:[%s1 + $0x8] sm:$0xf]
      %v667 = vld [vmem:[%s1 + $0xc] sm:$0xf]
      %v668 = vld [vmem:[%s1 + $0x10] sm:$0xf]
      %v669 = vld [vmem:[%s1 + $0x14] sm:$0xf]
      %v670 = vld [vmem:[%s1 + $0x18] sm:$0x7]
      %v671 = vld [vmem:[%s2] sm:$0x1]
      %v672 = vlaneseq
      %v673 = vshrl.u32 %v672, 7
      %v674 = vsub.s32 0, %v673
      %v675 = vrot.slane %v671, %v674
      %v683 = vunpack.c.l.b16 %v664
      %v684 = vunpack.c.l.b16 %v665
      %v685 = vunpack.c.l.b16 %v666
      %v686 = vunpack.c.l.b16 %v667
      %v687 = vunpack.c.l.b16 %v668
      %v688 = vunpack.c.l.b16 %v669
      %v689 = vunpack.c.l.b16 %v670
      %v690 = vpack.c.b16 %v684, %v683
      %v691 = vpack.c.b16 %v686, %v685
      %v692 = vpack.c.b16 %v688, %v687
      %v693 = vpack.c.b16 %v689, %v689
      %vm697 = vcmask 441344
      %v698 = vsel %vm697, %v661, 0
      %v700 = vsel %vm697, %v663, 0
      %vm702 = vcmask 1042432
      %v704 = vsel %vm702, %v693, 0
      %706 = vmatprep.subr.bf16.mxu0 0
      %707 = vmatpush1.bf16.msra.mxu0 %v690
      %708 = vmatprep.subr.bf16.mxu0 0
      %709 = vmatpush1.bf16.msra.mxu0 %v691
      %710 = vmatprep.subr.bf16.mxu0 0
      %711 = vmatpush1.bf16.msra.mxu0 %v692
      %712 = vmatprep.subr.bf16.mxu0 0
      %713 = vmatpush1.bf16.msra.mxu0 %v704
      %714 = vmatprep.subr.bf16.mxu0 0
      %715 = vmatpush1.bf16.msra.mxu0 0
      %716 = vmatprep.subr.bf16.mxu0 0
      %717 = vmatpush1.bf16.msra.mxu0 0
      %718 = vmatprep.subr.bf16.mxu0 0
      %719 = vmatpush1.bf16.msra.mxu0 0
      %720 = vmatprep.subr.bf16.mxu0 0
      %721 = vmatpush1.bf16.msra.mxu0 0
      %722 = vmatprep.subr.bf16.mxu0 0
      %723 = vmatpush1.bf16.msra.mxu0 0
      %724 = vmatprep.subr.bf16.mxu0 0
      %725 = vmatpush1.bf16.msra.mxu0 0
      %726 = vmatprep.subr.bf16.mxu0 0
      %727 = vmatpush1.bf16.msra.mxu0 0
      %728 = vmatprep.subr.bf16.mxu0 0
      %729 = vmatpush1.bf16.msra.mxu0 0
      %730 = vmatprep.subr.bf16.mxu0 0
      %731 = vmatpush1.bf16.msra.mxu0 0
      %732 = vmatprep.subr.bf16.mxu0 0
      %733 = vmatpush1.bf16.msra.mxu0 0
      %734 = vmatprep.subr.bf16.mxu0 0
      %735 = vmatpush1.bf16.msra.mxu0 0
      %736 = vmatprep.subr.bf16.mxu0 0
      %737 = vmatpush1.bf16.msra.mxu0 0
      %738 = vmatprep.mubr.bf16.mxu0 0
      %739 = vmatmul.mubr.bf16.gmra.mrb[0].mxu0 %v698
      %v740 = vpop.f32.mrb[0].mxu0
      %v741 = vadd.f32 %v675, %v740
      %v742 = vpop.f32.mrb[0].mxu0
      %v743 = vpop.f32.mrb[0].mxu0
      %v744 = vadd.f32 %v675, %v743
      %v745 = vpop.f32.mrb[0].mxu0
      %746 = vmatprep.mubr.bf16.mxu0 0
      %747 = vmatmul.mubr.bf16.gmra.mrb[0].mxu0 %v700
      %v748 = vpop.f32.mrb[0].mxu0
      %v749 = vadd.f32 %v675, %v748
      %v750 = vpop.f32.mrb[0].mxu0
      %v751 = vpop.f32.mrb[0].mxu0
      %v752 = vadd.f32 %v675, %v751
      %v753 = vpop.f32.mrb[0].mxu0
      %754 = vdwg.mxu0
      %v755 = vld [vmem:[%s2 + $0x1] sm:$0x1]
      %vm756 = vcmp.ge.f32.partialorder %v741, 0.0
      %vm757 = vcmp.ge.f32.partialorder %v744, 0.0
      %vm758 = vcmp.ge.f32.partialorder %v749, 0.0
      %vm759 = vcmp.ge.f32.partialorder %v752, 0.0
      %v760 = vlaneseq
      %v761 = vshrl.u32 %v760, 7
      %v762 = vsub.s32 0, %v761
      %v763 = vrot.slane %v755, %v762
      %v764 = vmul.f32 %v763, %v741
      %v765 = vmul.f32 %v763, %v744
      %v766 = vmul.f32 %v763, %v749
      %v767 = vmul.f32 %v763, %v752
      %v768 = vsel %vm756, %v741, %v764
      %v769 = vsel %vm757, %v744, %v765
      %v770 = vsel %vm758, %v749, %v766
      %v771 = vsel %vm759, %v752, %v767
      %vm772 = vcmask 523264
      %773 = vst.msk [vmem:[#allocation5] sm:$0xff] %vm772, %v768
      %774 = vst.msk [vmem:[#allocation5 + $0x8] sm:$0xff] %vm772, %v769
      %775 = vst.msk [vmem:[#allocation5 + $0x10] sm:$0xff] %vm772, %v770
      %776 = vst.msk [vmem:[#allocation5 + $0x18] sm:$0xff] %vm772, %v771
      %777 = vst.msk [vmem:[#allocation3 + $0x2] sm:$0xff] %vm772, %v768
      %778 = vst.msk [vmem:[#allocation3 + $0xa] sm:$0xff] %vm772, %v769
      %779 = vst.msk [vmem:[#allocation3 + $0x12] sm:$0xff] %vm772, %v770
      %780 = vst.msk [vmem:[#allocation3 + $0x1a] sm:$0xff] %vm772, %v771
      %v781 = vld [vmem:[#allocation3] sm:$0xff]
      %v782 = vld [vmem:[#allocation3 + $0x8] sm:$0xff]
      %v783 = vld [vmem:[#allocation3 + $0x10] sm:$0xff]
      %v784 = vld [vmem:[#allocation3 + $0x18] sm:$0xff]
      %v785 = vld [vmem:[#allocation3 + $0x20] sm:$0xf]
      %v786 = vpack.c.bf16 %v782, %v781
      %v787 = vpack.c.bf16 %v784, %v783
      %v788 = vpack.c.bf16 %v785, %v785
      %v790 = vshrl.u32 %v786, 16
      %v792 = vshll.u32 %v786, 16
      %v794 = vrot.slane %v792, 1
      %v795 = vor.u32 %v790, %v794
      %v797 = vshll.u32 %v787, 16
      %v799 = vrot.slane %v797, 1
      %v800 = vsel %vm511, %v795, %v799
      %v801 = vshrl.u32 %v787, 16
      %v803 = vor.u32 %v801, %v799
      %v805 = vshll.u32 %v788, 16
      %v807 = vrot.slane %v805, 1
      %v808 = vsel %vm511, %v803, %v807
      %v809 = vshrl.u32 %v788, 16
      %811 = vrot.lane.b32.xlu0 %v800, 64
      %v812 = vpop.permute.xlu0 %811
      %813 = vrot.lane.b32.xlu0 %v808, 64
      %v814 = vpop.permute.xlu0 %813
      %815 = vrot.lane.b32.xlu0 %v809, 64
      %v816 = vpop.permute.xlu0 %815
      %v820 = vrot.slane %v786, 1
      %v821 = vrot.slane %v787, 1
      %v822 = vsel %vm539, %v820, %v821
      %v823 = vrot.slane %v788, 1
      %v824 = vsel %vm539, %v821, %v823
      %v826 = vsel %vm772, %v786, %v812
      %v828 = vsel %vm772, %v787, %v814
      %v830 = vsel %vm772, %v788, %v816
      %v831 = vld [vmem:[%s3] sm:$0xf]
      %v832 = vld [vmem:[%s3 + $0x4] sm:$0xf]
      %v833 = vld [vmem:[%s3 + $0x8] sm:$0xf]
      %v834 = vld [vmem:[%s3 + $0xc] sm:$0xf]
      %v835 = vld [vmem:[%s3 + $0x10] sm:$0xf]
      %v836 = vld [vmem:[%s3 + $0x14] sm:$0xf]
      %v837 = vld [vmem:[%s3 + $0x18] sm:$0xf]
      %v838 = vld [vmem:[%s3 + $0x1c] sm:$0xf]
      %v839 = vld [vmem:[%s3 + $0x20] sm:$0xf]
      %v840 = vld [vmem:[%s3 + $0x24] sm:$0xf]
      %v841 = vld [vmem:[%s3 + $0x28] sm:$0xf]
      %v842 = vld [vmem:[%s3 + $0x2c] sm:$0xf]
      %v843 = vld [vmem:[%s3 + $0x30] sm:$0xf]
      %v844 = vld [vmem:[%s3 + $0x34] sm:$0xf]
      %v845 = vld [vmem:[%s3 + $0x38] sm:$0xf]
      %v846 = vld [vmem:[%s3 + $0x3c] sm:$0xf]
      %v847 = vld [vmem:[%s3 + $0x40] sm:$0xf]
      %v848 = vld [vmem:[%s3 + $0x44] sm:$0xf]
      %v849 = vld [vmem:[%s3 + $0x48] sm:$0xf]
      %v850 = vld [vmem:[%s3 + $0x4c] sm:$0xf]
      %v851 = vld [vmem:[%s3 + $0x50] sm:$0xf]
      %v852 = vld [vmem:[%s3 + $0x54] sm:$0xf]
      %v853 = vld [vmem:[%s3 + $0x58] sm:$0xf]
      %v854 = vld [vmem:[%s3 + $0x5c] sm:$0xf]
      %v855 = vld [vmem:[%s5] sm:$0x1]
      %v856 = vlaneseq
      %v857 = vshrl.u32 %v856, 7
      %v858 = vsub.s32 0, %v857
      %v859 = vrot.slane %v855, %v858
      %v860 = vshrl.u32 %v826, 16
      %v862 = vshll.u32 %v826, 16
      %v864 = vrot.slane %v862, 1
      %v865 = vor.u32 %v860, %v864
      %v866 = vshll.u32 %v828, 16
      %v868 = vrot.slane %v866, 1
      %v869 = vsel %vm511, %v865, %v868
      %v871 = vshrl.u32 %v822, 16
      %v873 = vshll.u32 %v822, 16
      %v875 = vrot.slane %v873, 1
      %v876 = vor.u32 %v871, %v875
      %v878 = vshll.u32 %v824, 16
      %v880 = vrot.slane %v878, 1
      %v881 = vsel %vm511, %v876, %v880
      %v882 = vshrl.u32 %v828, 16
      %v884 = vor.u32 %v882, %v868
      %v885 = vshll.u32 %v830, 16
      %v887 = vrot.slane %v885, 1
      %v888 = vsel %vm511, %v884, %v887
      %v889 = vshrl.u32 %v824, 16
      %v891 = vor.u32 %v889, %v880
      %v893 = vshll.u32 %v823, 16
      %v895 = vrot.slane %v893, 1
      %v896 = vsel %vm511, %v891, %v895
      %v923 = vunpack.c.l.b16 %v831
      %v924 = vunpack.c.l.b16 %v832
      %v925 = vunpack.c.l.b16 %v833
      %v926 = vunpack.c.l.b16 %v834
      %v927 = vunpack.c.l.b16 %v835
      %v928 = vunpack.c.l.b16 %v836
      %v929 = vunpack.c.l.b16 %v837
      %v930 = vunpack.c.l.b16 %v838
      %v931 = vunpack.c.l.b16 %v839
      %v932 = vunpack.c.l.b16 %v840
      %v933 = vunpack.c.l.b16 %v841
      %v934 = vunpack.c.l.b16 %v842
      %v935 = vunpack.c.l.b16 %v843
      %v936 = vunpack.c.l.b16 %v844
      %v937 = vunpack.c.l.b16 %v845
      %v938 = vunpack.c.l.b16 %v846
      %v939 = vunpack.c.l.b16 %v847
      %v940 = vunpack.c.l.b16 %v848
      %v941 = vunpack.c.l.b16 %v849
      %v942 = vunpack.c.l.b16 %v850
      %v943 = vunpack.c.l.b16 %v851
      %v944 = vunpack.c.l.b16 %v852
      %v945 = vunpack.c.l.b16 %v853
      %v946 = vunpack.c.l.b16 %v854
      %v947 = vpack.c.b16 %v924, %v923
      %v948 = vpack.c.b16 %v926, %v925
      %v949 = vpack.c.b16 %v928, %v927
      %v950 = vpack.c.b16 %v930, %v929
      %v951 = vpack.c.b16 %v932, %v931
      %v952 = vpack.c.b16 %v934, %v933
      %v953 = vpack.c.b16 %v936, %v935
      %v954 = vpack.c.b16 %v938, %v937
      %v955 = vpack.c.b16 %v940, %v939
      %v956 = vpack.c.b16 %v942, %v941
      %v957 = vpack.c.b16 %v944, %v943
      %v958 = vpack.c.b16 %v946, %v945
      %v972 = vsel %vm772, %v881, 0
      %v975 = vsel %vm772, %v896, 0
      %977 = vmatprep.subr.bf16.mxu0 0
      %978 = vmatpush1.bf16.msra.mxu0 %v947
      %979 = vmatprep.subr.bf16.mxu0 0
      %980 = vmatpush1.bf16.msra.mxu0 %v948
      %981 = vmatprep.subr.bf16.mxu0 0
      %982 = vmatpush1.bf16.msra.mxu0 %v949
      %983 = vmatprep.subr.bf16.mxu0 0
      %984 = vmatpush1.bf16.msra.mxu0 %v950
      %985 = vmatprep.subr.bf16.mxu0 0
      %986 = vmatpush1.bf16.msra.mxu0 %v951
      %987 = vmatprep.subr.bf16.mxu0 0
      %988 = vmatpush1.bf16.msra.mxu0 %v952
      %989 = vmatprep.subr.bf16.mxu0 0
      %990 = vmatpush1.bf16.msra.mxu0 %v953
      %991 = vmatprep.subr.bf16.mxu0 0
      %992 = vmatpush1.bf16.msra.mxu0 %v954
      %993 = vmatprep.subr.bf16.mxu0 0
      %994 = vmatpush1.bf16.msra.mxu0 %v955
      %995 = vmatprep.subr.bf16.mxu0 0
      %996 = vmatpush1.bf16.msra.mxu0 %v956
      %997 = vmatprep.subr.bf16.mxu0 0
      %998 = vmatpush1.bf16.msra.mxu0 %v957
      %999 = vmatprep.subr.bf16.mxu0 0
      %1000 = vmatpush1.bf16.msra.mxu0 %v958
      %1001 = vmatprep.subr.bf16.mxu0 0
      %1002 = vmatpush1.bf16.msra.mxu0 0
      %1003 = vmatprep.subr.bf16.mxu0 0
      %1004 = vmatpush1.bf16.msra.mxu0 0
      %1005 = vmatprep.subr.bf16.mxu0 0
      %1006 = vmatpush1.bf16.msra.mxu0 0
      %1007 = vmatprep.subr.bf16.mxu0 0
      %1008 = vmatpush1.bf16.msra.mxu0 0
      %1009 = vmatprep.mubr.bf16.mxu0 %v972
      %1010 = vmatmul.mubr.bf16.gmra.mrb[0].mxu0 %v869
      %v1011 = vpop.f32.mrb[0].mxu0
      %v1012 = vadd.f32 %v859, %v1011
      %v1013 = vpop.f32.mrb[0].mxu0
      %v1014 = vpop.f32.mrb[0].mxu0
      %v1015 = vadd.f32 %v859, %v1014
      %v1016 = vpop.f32.mrb[0].mxu0
      %1017 = vmatprep.mubr.bf16.mxu0 %v975
      %1018 = vmatmul.mubr.bf16.gmra.mrb[0].mxu0 %v888
      %v1019 = vpop.f32.mrb[0].mxu0
      %v1020 = vadd.f32 %v859, %v1019
      %v1021 = vpop.f32.mrb[0].mxu0
      %v1022 = vpop.f32.mrb[0].mxu0
      %v1023 = vadd.f32 %v859, %v1022
      %v1024 = vpop.f32.mrb[0].mxu0
      %1025 = vdwg.mxu0
      %v1026 = vld [vmem:[%s5 + $0x1] sm:$0x1]
      %vm1027 = vcmp.ge.f32.partialorder %v1012, 0.0
      %vm1028 = vcmp.ge.f32.partialorder %v1015, 0.0
      %vm1029 = vcmp.ge.f32.partialorder %v1020, 0.0
      %vm1030 = vcmp.ge.f32.partialorder %v1023, 0.0
      %v1031 = vlaneseq
      %v1032 = vshrl.u32 %v1031, 7
      %v1033 = vsub.s32 0, %v1032
      %v1034 = vrot.slane %v1026, %v1033
      %v1035 = vmul.f32 %v1034, %v1012
      %v1036 = vmul.f32 %v1034, %v1015
      %v1037 = vmul.f32 %v1034, %v1020
      %v1038 = vmul.f32 %v1034, %v1023
      %v1039 = vsel %vm1027, %v1012, %v1035
      %v1040 = vsel %vm1028, %v1015, %v1036
      %v1041 = vsel %vm1029, %v1020, %v1037
      %v1042 = vsel %vm1030, %v1023, %v1038
      %1043 = vst.msk [vmem:[#allocation4 + $0x1] sm:$0xff] %vm772, %v1039
      %1044 = vst.msk [vmem:[#allocation4 + $0x9] sm:$0xff] %vm772, %v1040
      %1045 = vst.msk [vmem:[#allocation4 + $0x11] sm:$0xff] %vm772, %v1041
      %1046 = vst.msk [vmem:[#allocation4 + $0x19] sm:$0xff] %vm772, %v1042
      %v1047 = vld [vmem:[#allocation4] sm:$0xff]
      %v1048 = vld [vmem:[#allocation4 + $0x8] sm:$0xff]
      %v1049 = vld [vmem:[#allocation4 + $0x10] sm:$0xff]
      %v1050 = vld [vmem:[#allocation4 + $0x18] sm:$0xff]
      %v1051 = vld [vmem:[#allocation4 + $0x20] sm:$0x3]
      %v1052 = vpack.c.bf16 %v1048, %v1047
      %v1053 = vpack.c.bf16 %v1050, %v1049
      %v1054 = vpack.c.bf16 %v1051, %v1051
      %v1056 = vshrl.u32 %v1052, 16
      %v1058 = vshll.u32 %v1052, 16
      %v1060 = vrot.slane %v1058, 1
      %v1061 = vor.u32 %v1056, %v1060
      %v1063 = vshll.u32 %v1053, 16
      %v1065 = vrot.slane %v1063, 1
      %v1066 = vsel %vm511, %v1061, %v1065
      %v1067 = vshrl.u32 %v1053, 16
      %v1069 = vor.u32 %v1067, %v1065
      %v1071 = vshll.u32 %v1054, 16
      %v1073 = vrot.slane %v1071, 1
      %v1074 = vsel %vm511, %v1069, %v1073
      %1075 = vrot.lane.b32.xlu0 %v1066, 64
      %v1076 = vpop.permute.xlu0 %1075
      %1077 = vrot.lane.b32.xlu0 %v1074, 64
      %v1078 = vpop.permute.xlu0 %1077
      %v1082 = vrot.slane %v1052, 1
      %v1083 = vrot.slane %v1053, 1
      %v1084 = vsel %vm539, %v1082, %v1083
      %v1085 = vrot.slane %v1054, 1
      %v1086 = vsel %vm539, %v1083, %v1085
      %v1088 = vsel %vm772, %v1052, %v1076
      %v1091 = vsel %vm772, %v1053, %v1078
      %v1093 = vld [vmem:[%s4] sm:$0xf]
      %v1094 = vld [vmem:[%s4 + $0x4] sm:$0xf]
      %v1095 = vld [vmem:[%s4 + $0x8] sm:$0xf]
      %v1096 = vld [vmem:[%s4 + $0xc] sm:$0xf]
      %v1097 = vld [vmem:[%s4 + $0x10] sm:$0xf]
      %v1098 = vld [vmem:[%s4 + $0x14] sm:$0xf]
      %v1099 = vld [vmem:[%s4 + $0x18] sm:$0xf]
      %v1100 = vld [vmem:[%s4 + $0x1c] sm:$0xf]
      %v1101 = vld [vmem:[%s4 + $0x20] sm:$0xf]
      %v1102 = vld [vmem:[%s4 + $0x24] sm:$0xf]
      %v1103 = vld [vmem:[%s4 + $0x28] sm:$0xf]
      %v1104 = vld [vmem:[%s4 + $0x2c] sm:$0xf]
      %v1105 = vld [vmem:[%s4 + $0x30] sm:$0xf]
      %v1106 = vld [vmem:[%s4 + $0x34] sm:$0xf]
      %v1107 = vld [vmem:[%s4 + $0x38] sm:$0xf]
      %v1108 = vld [vmem:[%s4 + $0x3c] sm:$0xf]
      %v1109 = vld [vmem:[%s4 + $0x40] sm:$0xf]
      %v1110 = vld [vmem:[%s4 + $0x44] sm:$0xf]
      %v1111 = vld [vmem:[%s4 + $0x48] sm:$0xf]
      %v1112 = vld [vmem:[%s4 + $0x4c] sm:$0xf]
      %v1113 = vld [vmem:[%s4 + $0x50] sm:$0xf]
      %v1114 = vld [vmem:[%s4 + $0x54] sm:$0xf]
      %v1115 = vld [vmem:[%s4 + $0x58] sm:$0xf]
      %v1116 = vld [vmem:[%s4 + $0x5c] sm:$0xf]
      %v1117 = vld [vmem:[%s5 + $0x2] sm:$0x1]
      %v1118 = vlaneseq
      %v1119 = vshrl.u32 %v1118, 7
      %v1120 = vsub.s32 0, %v1119
      %v1121 = vrot.slane %v1117, %v1120
      %v1146 = vunpack.c.l.b16 %v1093
      %v1147 = vunpack.c.l.b16 %v1094
      %v1148 = vunpack.c.l.b16 %v1095
      %v1149 = vunpack.c.l.b16 %v1096
      %v1150 = vunpack.c.l.b16 %v1097
      %v1151 = vunpack.c.l.b16 %v1098
      %v1152 = vunpack.c.l.b16 %v1099
      %v1153 = vunpack.c.l.b16 %v1100
      %v1154 = vunpack.c.l.b16 %v1101
      %v1155 = vunpack.c.l.b16 %v1102
      %v1156 = vunpack.c.l.b16 %v1103
      %v1157 = vunpack.c.l.b16 %v1104
      %v1158 = vunpack.c.l.b16 %v1105
      %v1159 = vunpack.c.l.b16 %v1106
      %v1160 = vunpack.c.l.b16 %v1107
      %v1161 = vunpack.c.l.b16 %v1108
      %v1162 = vunpack.c.l.b16 %v1109
      %v1163 = vunpack.c.l.b16 %v1110
      %v1164 = vunpack.c.l.b16 %v1111
      %v1165 = vunpack.c.l.b16 %v1112
      %v1166 = vunpack.c.l.b16 %v1113
      %v1167 = vunpack.c.l.b16 %v1114
      %v1168 = vunpack.c.l.b16 %v1115
      %v1169 = vunpack.c.l.b16 %v1116
      %v1170 = vpack.c.b16 %v1147, %v1146
      %v1171 = vpack.c.b16 %v1149, %v1148
      %v1172 = vpack.c.b16 %v1151, %v1150
      %v1173 = vpack.c.b16 %v1153, %v1152
      %v1174 = vpack.c.b16 %v1155, %v1154
      %v1175 = vpack.c.b16 %v1157, %v1156
      %v1176 = vpack.c.b16 %v1159, %v1158
      %v1177 = vpack.c.b16 %v1161, %v1160
      %v1178 = vpack.c.b16 %v1163, %v1162
      %v1179 = vpack.c.b16 %v1165, %v1164
      %v1180 = vpack.c.b16 %v1167, %v1166
      %v1181 = vpack.c.b16 %v1169, %v1168
      %v1195 = vsel %vm772, %v1084, 0
      %v1198 = vsel %vm772, %v1086, 0
      %1200 = vmatprep.subr.bf16.mxu0 0
      %1201 = vmatpush1.bf16.msra.mxu0 %v1170
      %1202 = vmatprep.subr.bf16.mxu0 0
      %1203 = vmatpush1.bf16.msra.mxu0 %v1171
      %1204 = vmatprep.subr.bf16.mxu0 0
      %1205 = vmatpush1.bf16.msra.mxu0 %v1172
      %1206 = vmatprep.subr.bf16.mxu0 0
      %1207 = vmatpush1.bf16.msra.mxu0 %v1173
      %1208 = vmatprep.subr.bf16.mxu0 0
      %1209 = vmatpush1.bf16.msra.mxu0 %v1174
      %1210 = vmatprep.subr.bf16.mxu0 0
      %1211 = vmatpush1.bf16.msra.mxu0 %v1175
      %1212 = vmatprep.subr.bf16.mxu0 0
      %1213 = vmatpush1.bf16.msra.mxu0 %v1176
      %1214 = vmatprep.subr.bf16.mxu0 0
      %1215 = vmatpush1.bf16.msra.mxu0 %v1177
      %1216 = vmatprep.subr.bf16.mxu0 0
      %1217 = vmatpush1.bf16.msra.mxu0 %v1178
      %1218 = vmatprep.subr.bf16.mxu0 0
      %1219 = vmatpush1.bf16.msra.mxu0 %v1179
      %1220 = vmatprep.subr.bf16.mxu0 0
      %1221 = vmatpush1.bf16.msra.mxu0 %v1180
      %1222 = vmatprep.subr.bf16.mxu0 0
      %1223 = vmatpush1.bf16.msra.mxu0 %v1181
      %1224 = vmatprep.subr.bf16.mxu0 0
      %1225 = vmatpush1.bf16.msra.mxu0 0
      %1226 = vmatprep.subr.bf16.mxu0 0
      %1227 = vmatpush1.bf16.msra.mxu0 0
      %1228 = vmatprep.subr.bf16.mxu0 0
      %1229 = vmatpush1.bf16.msra.mxu0 0
      %1230 = vmatprep.subr.bf16.mxu0 0
      %1231 = vmatpush1.bf16.msra.mxu0 0
      %1232 = vmatprep.mubr.bf16.mxu0 %v1195
      %1233 = vmatmul.mubr.bf16.gmra.mrb[0].mxu0 %v1088
      %v1234 = vpop.f32.mrb[0].mxu0
      %v1235 = vadd.f32 %v1121, %v1234
      %v1236 = vpop.f32.mrb[0].mxu0
      %v1237 = vpop.f32.mrb[0].mxu0
      %v1238 = vadd.f32 %v1121, %v1237
      %v1239 = vpop.f32.mrb[0].mxu0
      %1240 = vmatprep.mubr.bf16.mxu0 %v1198
      %1241 = vmatmul.mubr.bf16.gmra.mrb[0].mxu0 %v1091
      %v1242 = vpop.f32.mrb[0].mxu0
      %v1243 = vadd.f32 %v1121, %v1242
      %v1244 = vpop.f32.mrb[0].mxu0
      %v1245 = vpop.f32.mrb[0].mxu0
      %v1246 = vadd.f32 %v1121, %v1245
      %v1247 = vpop.f32.mrb[0].mxu0
      %1248 = vdwg.mxu0
      %v1249 = vld [vmem:[#allocation3 + $0x2] sm:$0xff]
      %v1250 = vld [vmem:[#allocation3 + $0xa] sm:$0xff]
      %v1251 = vld [vmem:[#allocation3 + $0x12] sm:$0xff]
      %v1252 = vld [vmem:[#allocation3 + $0x1a] sm:$0xff]
      %v1253 = vadd.f32 %v1235, %v1249
      %v1254 = vadd.f32 %v1238, %v1250
      %v1255 = vadd.f32 %v1243, %v1251
      %v1256 = vadd.f32 %v1246, %v1252
      %1257 = vst.msk [vmem:[#allocation3 + $0x2] sm:$0xff] %vm772, %v1253
      %1258 = vst.msk [vmem:[#allocation3 + $0xa] sm:$0xff] %vm772, %v1254
      %1259 = vst.msk [vmem:[#allocation3 + $0x12] sm:$0xff] %vm772, %v1255
      %1260 = vst.msk [vmem:[#allocation3 + $0x1a] sm:$0xff] %vm772, %v1256
      %v1261 = vld [vmem:[#allocation3] sm:$0xff]
      %v1262 = vld [vmem:[#allocation3 + $0x8] sm:$0xff]
      %v1263 = vld [vmem:[#allocation3 + $0x10] sm:$0xff]
      %v1264 = vld [vmem:[#allocation3 + $0x18] sm:$0xff]
      %v1265 = vld [vmem:[#allocation3 + $0x20] sm:$0xf]
      %v1266 = vpack.c.bf16 %v1262, %v1261
      %v1267 = vpack.c.bf16 %v1264, %v1263
      %v1268 = vpack.c.bf16 %v1265, %v1265
      %v1270 = vshrl.u32 %v1266, 16
      %v1272 = vshll.u32 %v1266, 16
      %v1274 = vrot.slane %v1272, 1
      %v1275 = vor.u32 %v1270, %v1274
      %v1277 = vshll.u32 %v1267, 16
      %v1279 = vrot.slane %v1277, 1
      %v1280 = vsel %vm511, %v1275, %v1279
      %v1281 = vshrl.u32 %v1267, 16
      %v1283 = vor.u32 %v1281, %v1279
      %v1285 = vshll.u32 %v1268, 16
      %v1287 = vrot.slane %v1285, 1
      %v1288 = vsel %vm511, %v1283, %v1287
      %v1289 = vshrl.u32 %v1268, 16
      %1291 = vrot.lane.b32.xlu0 %v1280, 64
      %v1292 = vpop.permute.xlu0 %1291
      %1293 = vrot.lane.b32.xlu0 %v1288, 64
      %v1294 = vpop.permute.xlu0 %1293
      %1295 = vrot.lane.b32.xlu0 %v1289, 64
      %v1296 = vpop.permute.xlu0 %1295
      %v1300 = vrot.slane %v1266, 1
      %v1301 = vrot.slane %v1267, 1
      %v1302 = vsel %vm539, %v1300, %v1301
      %v1303 = vrot.slane %v1268, 1
      %v1304 = vsel %vm539, %v1301, %v1303
      %v1306 = vsel %vm772, %v1266, %v1292
      %v1308 = vsel %vm772, %v1267, %v1294
      %v1310 = vsel %vm772, %v1268, %v1296
      %s1311 = scalar_lea.vmem %s3, 96
      %v1312 = vld [vmem:[%s1311] sm:$0xf]
      %v1313 = vld [vmem:[%s1311 + $0x4] sm:$0xf]
      %v1314 = vld [vmem:[%s1311 + $0x8] sm:$0xf]
      %v1315 = vld [vmem:[%s1311 + $0xc] sm:$0xf]
      %v1316 = vld [vmem:[%s1311 + $0x10] sm:$0xf]
      %v1317 = vld [vmem:[%s1311 + $0x14] sm:$0xf]
      %v1318 = vld [vmem:[%s1311 + $0x18] sm:$0xf]
      %v1319 = vld [vmem:[%s1311 + $0x1c] sm:$0xf]
      %v1320 = vld [vmem:[%s1311 + $0x20] sm:$0xf]
      %v1321 = vld [vmem:[%s1311 + $0x24] sm:$0xf]
      %v1322 = vld [vmem:[%s1311 + $0x28] sm:$0xf]
      %v1323 = vld [vmem:[%s1311 + $0x2c] sm:$0xf]
      %v1324 = vld [vmem:[%s1311 + $0x30] sm:$0xf]
      %v1325 = vld [vmem:[%s1311 + $0x34] sm:$0xf]
      %v1326 = vld [vmem:[%s1311 + $0x38] sm:$0xf]
      %v1327 = vld [vmem:[%s1311 + $0x3c] sm:$0xf]
      %v1328 = vld [vmem:[%s1311 + $0x40] sm:$0xf]
      %v1329 = vld [vmem:[%s1311 + $0x44] sm:$0xf]
      %v1330 = vld [vmem:[%s1311 + $0x48] sm:$0xf]
      %v1331 = vld [vmem:[%s1311 + $0x4c] sm:$0xf]
      %v1332 = vld [vmem:[%s1311 + $0x50] sm:$0xf]
      %v1333 = vld [vmem:[%s1311 + $0x54] sm:$0xf]
      %v1334 = vld [vmem:[%s1311 + $0x58] sm:$0xf]
      %v1335 = vld [vmem:[%s1311 + $0x5c] sm:$0xf]
      %s1336 = scalar_lea.vmem %s5, 4
      %v1337 = vld [vmem:[%s1336] sm:$0x1]
      %v1338 = vlaneseq
      %v1339 = vshrl.u32 %v1338, 7
      %v1340 = vsub.s32 0, %v1339
      %v1341 = vrot.slane %v1337, %v1340
      %v1342 = vshrl.u32 %v1306, 16
      %v1344 = vshll.u32 %v1306, 16
      %v1346 = vrot.slane %v1344, 1
      %v1347 = vor.u32 %v1342, %v1346
      %v1348 = vshll.u32 %v1308, 16
      %v1350 = vrot.slane %v1348, 1
      %v1351 = vsel %vm511, %v1347, %v1350
      %v1353 = vshrl.u32 %v1302, 16
      %v1355 = vshll.u32 %v1302, 16
      %v1357 = vrot.slane %v1355, 1
      %v1358 = vor.u32 %v1353, %v1357
      %v1360 = vshll.u32 %v1304, 16
      %v1362 = vrot.slane %v1360, 1
      %v1363 = vsel %vm511, %v1358, %v1362
      %v1364 = vshrl.u32 %v1308, 16
      %v1366 = vor.u32 %v1364, %v1350
      %v1367 = vshll.u32 %v1310, 16
      %v1369 = vrot.slane %v1367, 1
      %v1370 = vsel %vm511, %v1366, %v1369
      %v1371 = vshrl.u32 %v1304, 16
      %v1373 = vor.u32 %v1371, %v1362
      %v1375 = vshll.u32 %v1303, 16
      %v1377 = vrot.slane %v1375, 1
      %v1378 = vsel %vm511, %v1373, %v1377
      %v1405 = vunpack.c.l.b16 %v1312
      %v1406 = vunpack.c.l.b16 %v1313
      %v1407 = vunpack.c.l.b16 %v1314
      %v1408 = vunpack.c.l.b16 %v1315
      %v1409 = vunpack.c.l.b16 %v1316
      %v1410 = vunpack.c.l.b16 %v1317
      %v1411 = vunpack.c.l.b16 %v1318
      %v1412 = vunpack.c.l.b16 %v1319
      %v1413 = vunpack.c.l.b16 %v1320
      %v1414 = vunpack.c.l.b16 %v1321
      %v1415 = vunpack.c.l.b16 %v1322
      %v1416 = vunpack.c.l.b16 %v1323
      %v1417 = vunpack.c.l.b16 %v1324
      %v1418 = vunpack.c.l.b16 %v1325
      %v1419 = vunpack.c.l.b16 %v1326
      %v1420 = vunpack.c.l.b16 %v1327
      %v1421 = vunpack.c.l.b16 %v1328
      %v1422 = vunpack.c.l.b16 %v1329
      %v1423 = vunpack.c.l.b16 %v1330
      %v1424 = vunpack.c.l.b16 %v1331
      %v1425 = vunpack.c.l.b16 %v1332
      %v1426 = vunpack.c.l.b16 %v1333
      %v1427 = vunpack.c.l.b16 %v1334
      %v1428 = vunpack.c.l.b16 %v1335
      %v1429 = vpack.c.b16 %v1406, %v1405
      %v1430 = vpack.c.b16 %v1408, %v1407
      %v1431 = vpack.c.b16 %v1410, %v1409
      %v1432 = vpack.c.b16 %v1412, %v1411
      %v1433 = vpack.c.b16 %v1414, %v1413
      %v1434 = vpack.c.b16 %v1416, %v1415
      %v1435 = vpack.c.b16 %v1418, %v1417
      %v1436 = vpack.c.b16 %v1420, %v1419
      %v1437 = vpack.c.b16 %v1422, %v1421
      %v1438 = vpack.c.b16 %v1424, %v1423
      %v1439 = vpack.c.b16 %v1426, %v1425
      %v1440 = vpack.c.b16 %v1428, %v1427
      %v1454 = vsel %vm772, %v1363, 0
      %v1457 = vsel %vm772, %v1378, 0
      %1459 = vmatprep.subr.bf16.mxu0 0
      %1460 = vmatpush1.bf16.msra.mxu0 %v1429
      %1461 = vmatprep.subr.bf16.mxu0 0
      %1462 = vmatpush1.bf16.msra.mxu0 %v1430
      %1463 = vmatprep.subr.bf16.mxu0 0
      %1464 = vmatpush1.bf16.msra.mxu0 %v1431
      %1465 = vmatprep.subr.bf16.mxu0 0
      %1466 = vmatpush1.bf16.msra.mxu0 %v1432
      %1467 = vmatprep.subr.bf16.mxu0 0
      %1468 = vmatpush1.bf16.msra.mxu0 %v1433
      %1469 = vmatprep.subr.bf16.mxu0 0
      %1470 = vmatpush1.bf16.msra.mxu0 %v1434
      %1471 = vmatprep.subr.bf16.mxu0 0
      %1472 = vmatpush1.bf16.msra.mxu0 %v1435
      %1473 = vmatprep.subr.bf16.mxu0 0
      %1474 = vmatpush1.bf16.msra.mxu0 %v1436
      %1475 = vmatprep.subr.bf16.mxu0 0
      %1476 = vmatpush1.bf16.msra.mxu0 %v1437
      %1477 = vmatprep.subr.bf16.mxu0 0
      %1478 = vmatpush1.bf16.msra.mxu0 %v1438
      %1479 = vmatprep.subr.bf16.mxu0 0
      %1480 = vmatpush1.bf16.msra.mxu0 %v1439
      %1481 = vmatprep.subr.bf16.mxu0 0
      %1482 = vmatpush1.bf16.msra.mxu0 %v1440
      %1483 = vmatprep.subr.bf16.mxu0 0
      %1484 = vmatpush1.bf16.msra.mxu0 0
      %1485 = vmatprep.subr.bf16.mxu0 0
      %1486 = vmatpush1.bf16.msra.mxu0 0
      %1487 = vmatprep.subr.bf16.mxu0 0
      %1488 = vmatpush1.bf16.msra.mxu0 0
      %1489 = vmatprep.subr.bf16.mxu0 0
      %1490 = vmatpush1.bf16.msra.mxu0 0
      %1491 = vmatprep.mubr.bf16.mxu0 %v1454
      %1492 = vmatmul.mubr.bf16.gmra.mrb[0].mxu0 %v1351
      %v1493 = vpop.f32.mrb[0].mxu0
      %v1494 = vadd.f32 %v1341, %v1493
      %v1495 = vpop.f32.mrb[0].mxu0
      %v1496 = vpop.f32.mrb[0].mxu0
      %v1497 = vadd.f32 %v1341, %v1496
      %v1498 = vpop.f32.mrb[0].mxu0
      %1499 = vmatprep.mubr.bf16.mxu0 %v1457
      %1500 = vmatmul.mubr.bf16.gmra.mrb[0].mxu0 %v1370
      %v1501 = vpop.f32.mrb[0].mxu0
      %v1502 = vadd.f32 %v1341, %v1501
      %v1503 = vpop.f32.mrb[0].mxu0
      %v1504 = vpop.f32.mrb[0].mxu0
      %v1505 = vadd.f32 %v1341, %v1504
      %v1506 = vpop.f32.mrb[0].mxu0
      %1507 = vdwg.mxu0
      %v1508 = vld [vmem:[%s1336 + $0x1] sm:$0x1]
      %vm1509 = vcmp.ge.f32.partialorder %v1494, 0.0
      %vm1510 = vcmp.ge.f32.partialorder %v1497, 0.0
      %vm1511 = vcmp.ge.f32.partialorder %v1502, 0.0
      %vm1512 = vcmp.ge.f32.partialorder %v1505, 0.0
      %v1513 = vlaneseq
      %v1514 = vshrl.u32 %v1513, 7
      %v1515 = vsub.s32 0, %v1514
      %v1516 = vrot.slane %v1508, %v1515
      %v1517 = vmul.f32 %v1516, %v1494
      %v1518 = vmul.f32 %v1516, %v1497
      %v1519 = vmul.f32 %v1516, %v1502
      %v1520 = vmul.f32 %v1516, %v1505
      %v1521 = vsel %vm1509, %v1494, %v1517
      %v1522 = vsel %vm1510, %v1497, %v1518
      %v1523 = vsel %vm1511, %v1502, %v1519
      %v1524 = vsel %vm1512, %v1505, %v1520
      %1525 = vst.msk [vmem:[#allocation4 + $0x1] sm:$0xff] %vm772, %v1521
      %1526 = vst.msk [vmem:[#allocation4 + $0x9] sm:$0xff] %vm772, %v1522
      %1527 = vst.msk [vmem:[#allocation4 + $0x11] sm:$0xff] %vm772, %v1523
      %1528 = vst.msk [vmem:[#allocation4 + $0x19] sm:$0xff] %vm772, %v1524
      %v1529 = vld [vmem:[#allocation4] sm:$0xff]
      %v1530 = vld [vmem:[#allocation4 + $0x8] sm:$0xff]
      %v1531 = vld [vmem:[#allocation4 + $0x10] sm:$0xff]
      %v1532 = vld [vmem:[#allocation4 + $0x18] sm:$0xff]
      %v1533 = vld [vmem:[#allocation4 + $0x20] sm:$0x3]
      %v1534 = vpack.c.bf16 %v1530, %v1529
      %v1535 = vpack.c.bf16 %v1532, %v1531
      %v1536 = vpack.c.bf16 %v1533, %v1533
      %v1538 = vshrl.u32 %v1534, 16
      %v1540 = vshll.u32 %v1534, 16
      %v1542 = vrot.slane %v1540, 1
      %v1543 = vor.u32 %v1538, %v1542
      %v1545 = vshll.u32 %v1535, 16
      %v1547 = vrot.slane %v1545, 1
      %v1548 = vsel %vm511, %v1543, %v1547
      %v1549 = vshrl.u32 %v1535, 16
      %v1551 = vor.u32 %v1549, %v1547
      %v1553 = vshll.u32 %v1536, 16
      %v1555 = vrot.slane %v1553, 1
      %v1556 = vsel %vm511, %v1551, %v1555
      %1557 = vrot.lane.b32.xlu0 %v1548, 64
      %v1558 = vpop.permute.xlu0 %1557
      %1559 = vrot.lane.b32.xlu0 %v1556, 64
      %v1560 = vpop.permute.xlu0 %1559
      %v1564 = vrot.slane %v1534, 1
      %v1565 = vrot.slane %v1535, 1
      %v1566 = vsel %vm539, %v1564, %v1565
      %v1567 = vrot.slane %v1536, 1
      %v1568 = vsel %vm539, %v1565, %v1567
      %v1570 = vsel %vm772, %v1534, %v1558
      %v1573 = vsel %vm772, %v1535, %v1560
      %s1575 = scalar_lea.vmem %s4, 96
      %v1576 = vld [vmem:[%s1575] sm:$0xf]
      %v1577 = vld [vmem:[%s1575 + $0x4] sm:$0xf]
      %v1578 = vld [vmem:[%s1575 + $0x8] sm:$0xf]
      %v1579 = vld [vmem:[%s1575 + $0xc] sm:$0xf]
      %v1580 = vld [vmem:[%s1575 + $0x10] sm:$0xf]
      %v1581 = vld [vmem:[%s1575 + $0x14] sm:$0xf]
      %v1582 = vld [vmem:[%s1575 + $0x18] sm:$0xf]
      %v1583 = vld [vmem:[%s1575 + $0x1c] sm:$0xf]
      %v1584 = vld [vmem:[%s1575 + $0x20] sm:$0xf]
      %v1585 = vld [vmem:[%s1575 + $0x24] sm:$0xf]
      %v1586 = vld [vmem:[%s1575 + $0x28] sm:$0xf]
      %v1587 = vld [vmem:[%s1575 + $0x2c] sm:$0xf]
      %v1588 = vld [vmem:[%s1575 + $0x30] sm:$0xf]
      %v1589 = vld [vmem:[%s1575 + $0x34] sm:$0xf]
      %v1590 = vld [vmem:[%s1575 + $0x38] sm:$0xf]
      %v1591 = vld [vmem:[%s1575 + $0x3c] sm:$0xf]
      %v1592 = vld [vmem:[%s1575 + $0x40] sm:$0xf]
      %v1593 = vld [vmem:[%s1575 + $0x44] sm:$0xf]
      %v1594 = vld [vmem:[%s1575 + $0x48] sm:$0xf]
      %v1595 = vld [vmem:[%s1575 + $0x4c] sm:$0xf]
      %v1596 = vld [vmem:[%s1575 + $0x50] sm:$0xf]
      %v1597 = vld [vmem:[%s1575 + $0x54] sm:$0xf]
      %v1598 = vld [vmem:[%s1575 + $0x58] sm:$0xf]
      %v1599 = vld [vmem:[%s1575 + $0x5c] sm:$0xf]
      %v1600 = vld [vmem:[%s1336 + $0x2] sm:$0x1]
      %v1601 = vlaneseq
      %v1602 = vshrl.u32 %v1601, 7
      %v1603 = vsub.s32 0, %v1602
      %v1604 = vrot.slane %v1600, %v1603
      %v1629 = vunpack.c.l.b16 %v1576
      %v1630 = vunpack.c.l.b16 %v1577
      %v1631 = vunpack.c.l.b16 %v1578
      %v1632 = vunpack.c.l.b16 %v1579
      %v1633 = vunpack.c.l.b16 %v1580
      %v1634 = vunpack.c.l.b16 %v1581
      %v1635 = vunpack.c.l.b16 %v1582
      %v1636 = vunpack.c.l.b16 %v1583
      %v1637 = vunpack.c.l.b16 %v1584
      %v1638 = vunpack.c.l.b16 %v1585
      %v1639 = vunpack.c.l.b16 %v1586
      %v1640 = vunpack.c.l.b16 %v1587
      %v1641 = vunpack.c.l.b16 %v1588
      %v1642 = vunpack.c.l.b16 %v1589
      %v1643 = vunpack.c.l.b16 %v1590
      %v1644 = vunpack.c.l.b16 %v1591
      %v1645 = vunpack.c.l.b16 %v1592
      %v1646 = vunpack.c.l.b16 %v1593
      %v1647 = vunpack.c.l.b16 %v1594
      %v1648 = vunpack.c.l.b16 %v1595
      %v1649 = vunpack.c.l.b16 %v1596
      %v1650 = vunpack.c.l.b16 %v1597
      %v1651 = vunpack.c.l.b16 %v1598
      %v1652 = vunpack.c.l.b16 %v1599
      %v1653 = vpack.c.b16 %v1630, %v1629
      %v1654 = vpack.c.b16 %v1632, %v1631
      %v1655 = vpack.c.b16 %v1634, %v1633
      %v1656 = vpack.c.b16 %v1636, %v1635
      %v1657 = vpack.c.b16 %v1638, %v1637
      %v1658 = vpack.c.b16 %v1640, %v1639
      %v1659 = vpack.c.b16 %v1642, %v1641
      %v1660 = vpack.c.b16 %v1644, %v1643
      %v1661 = vpack.c.b16 %v1646, %v1645
      %v1662 = vpack.c.b16 %v1648, %v1647
      %v1663 = vpack.c.b16 %v1650, %v1649
      %v1664 = vpack.c.b16 %v1652, %v1651
      %v1678 = vsel %vm772, %v1566, 0
      %v1681 = vsel %vm772, %v1568, 0
      %1683 = vmatprep.subr.bf16.mxu0 0
      %1684 = vmatpush1.bf16.msra.mxu0 %v1653
      %1685 = vmatprep.subr.bf16.mxu0 0
      %1686 = vmatpush1.bf16.msra.mxu0 %v1654
      %1687 = vmatprep.subr.bf16.mxu0 0
      %1688 = vmatpush1.bf16.msra.mxu0 %v1655
      %1689 = vmatprep.subr.bf16.mxu0 0
      %1690 = vmatpush1.bf16.msra.mxu0 %v1656
      %1691 = vmatprep.subr.bf16.mxu0 0
      %1692 = vmatpush1.bf16.msra.mxu0 %v1657
      %1693 = vmatprep.subr.bf16.mxu0 0
      %1694 = vmatpush1.bf16.msra.mxu0 %v1658
      %1695 = vmatprep.subr.bf16.mxu0 0
      %1696 = vmatpush1.bf16.msra.mxu0 %v1659
      %1697 = vmatprep.subr.bf16.mxu0 0
      %1698 = vmatpush1.bf16.msra.mxu0 %v1660
      %1699 = vmatprep.subr.bf16.mxu0 0
      %1700 = vmatpush1.bf16.msra.mxu0 %v1661
      %1701 = vmatprep.subr.bf16.mxu0 0
      %1702 = vmatpush1.bf16.msra.mxu0 %v1662
      %1703 = vmatprep.subr.bf16.mxu0 0
      %1704 = vmatpush1.bf16.msra.mxu0 %v1663
      %1705 = vmatprep.subr.bf16.mxu0 0
      %1706 = vmatpush1.bf16.msra.mxu0 %v1664
      %1707 = vmatprep.subr.bf16.mxu0 0
      %1708 = vmatpush1.bf16.msra.mxu0 0
      %1709 = vmatprep.subr.bf16.mxu0 0
      %1710 = vmatpush1.bf16.msra.mxu0 0
      %1711 = vmatprep.subr.bf16.mxu0 0
      %1712 = vmatpush1.bf16.msra.mxu0 0
      %1713 = vmatprep.subr.bf16.mxu0 0
      %1714 = vmatpush1.bf16.msra.mxu0 0
      %1715 = vmatprep.mubr.bf16.mxu0 %v1678
      %1716 = vmatmul.mubr.bf16.gmra.mrb[0].mxu0 %v1570
      %v1717 = vpop.f32.mrb[0].mxu0
      %v1718 = vadd.f32 %v1604, %v1717
      %v1719 = vpop.f32.mrb[0].mxu0
      %v1720 = vpop.f32.mrb[0].mxu0
      %v1721 = vadd.f32 %v1604, %v1720
      %v1722 = vpop.f32.mrb[0].mxu0
      %1723 = vmatprep.mubr.bf16.mxu0 %v1681
      %1724 = vmatmul.mubr.bf16.gmra.mrb[0].mxu0 %v1573
      %v1725 = vpop.f32.mrb[0].mxu0
      %v1726 = vadd.f32 %v1604, %v1725
      %v1727 = vpop.f32.mrb[0].mxu0
      %v1728 = vpop.f32.mrb[0].mxu0
      %v1729 = vadd.f32 %v1604, %v1728
      %v1730 = vpop.f32.mrb[0].mxu0
      %1731 = vdwg.mxu0
      %v1732 = vld [vmem:[#allocation3 + $0x2] sm:$0xff]
      %v1733 = vld [vmem:[#allocation3 + $0xa] sm:$0xff]
      %v1734 = vld [vmem:[#allocation3 + $0x12] sm:$0xff]
      %v1735 = vld [vmem:[#allocation3 + $0x1a] sm:$0xff]
      %v1736 = vadd.f32 %v1718, %v1732
      %v1737 = vadd.f32 %v1721, %v1733
      %v1738 = vadd.f32 %v1726, %v1734
      %v1739 = vadd.f32 %v1729, %v1735
      %1740 = vst.msk [vmem:[#allocation3 + $0x2] sm:$0xff] %vm772, %v1736
      %1741 = vst.msk [vmem:[#allocation3 + $0xa] sm:$0xff] %vm772, %v1737
      %1742 = vst.msk [vmem:[#allocation3 + $0x12] sm:$0xff] %vm772, %v1738
      %1743 = vst.msk [vmem:[#allocation3 + $0x1a] sm:$0xff] %vm772, %v1739
      %v1744 = vld [vmem:[#allocation3] sm:$0xff]
      %v1745 = vld [vmem:[#allocation3 + $0x8] sm:$0xff]
      %v1746 = vld [vmem:[#allocation3 + $0x10] sm:$0xff]
      %v1747 = vld [vmem:[#allocation3 + $0x18] sm:$0xff]
      %v1748 = vld [vmem:[#allocation3 + $0x20] sm:$0xf]
      %v1749 = vpack.c.bf16 %v1745, %v1744
      %v1750 = vpack.c.bf16 %v1747, %v1746
      %v1751 = vpack.c.bf16 %v1748, %v1748
      %v1753 = vshrl.u32 %v1749, 16
      %v1755 = vshll.u32 %v1749, 16
      %v1757 = vrot.slane %v1755, 1
      %v1758 = vor.u32 %v1753, %v1757
      %v1760 = vshll.u32 %v1750, 16
      %v1762 = vrot.slane %v1760, 1
      %v1763 = vsel %vm511, %v1758, %v1762
      %v1764 = vshrl.u32 %v1750, 16
      %v1766 = vor.u32 %v1764, %v1762
      %v1768 = vshll.u32 %v1751, 16
      %v1770 = vrot.slane %v1768, 1
      %v1771 = vsel %vm511, %v1766, %v1770
      %1772 = vrot.lane.b32.xlu0 %v1763, 64
      %v1773 = vpop.permute.xlu0 %1772
      %1774 = vrot.lane.b32.xlu0 %v1771, 64
      %v1775 = vpop.permute.xlu0 %1774
      %v1779 = vrot.slane %v1749, 1
      %v1780 = vrot.slane %v1750, 1
      %v1781 = vsel %vm539, %v1779, %v1780
      %v1782 = vrot.slane %v1751, 1
      %v1783 = vsel %vm539, %v1780, %v1782
      %v1784 = vrot.slane %v1753, 1
      %v1785 = vrot.slane %v1755, 2
      %v1786 = vor.u32 %v1784, %v1785
      %v1787 = vrot.slane %v1764, 1
      %v1788 = vrot.slane %v1760, 2
      %v1789 = vor.u32 %v1787, %v1788
      %v1790 = vsel %vm549, %v1786, %v1789
      %v1791 = vshrl.u32 %v1751, 16
      %v1793 = vrot.slane %v1791, 1
      %v1794 = vrot.slane %v1768, 2
      %v1795 = vor.u32 %v1793, %v1794
      %v1796 = vsel %vm549, %v1789, %v1795
      %1797 = vrot.lane.b32.xlu0 %v1790, 64
      %v1798 = vpop.permute.xlu0 %1797
      %1799 = vrot.lane.b32.xlu0 %v1796, 64
      %v1800 = vpop.permute.xlu0 %1799
      %v1801 = vrot.slane %v1749, 2
      %v1802 = vrot.slane %v1750, 2
      %v1803 = vsel %vm567, %v1801, %v1802
      %v1804 = vrot.slane %v1751, 2
      %v1805 = vsel %vm567, %v1802, %v1804
      %v1807 = vsel %vm772, %v1749, %v1773
      %v1810 = vsel %vm772, %v1750, %v1775
      %v1814 = vsel %vm772, %v1781, %v1798
      %v1818 = vsel %vm772, %v1783, %v1800
      %v1820 = vld [vmem:[%s6] sm:$0xf]
      %v1821 = vld [vmem:[%s6 + $0x4] sm:$0xf]
      %v1822 = vld [vmem:[%s6 + $0x8] sm:$0xf]
      %v1823 = vld [vmem:[%s6 + $0xc] sm:$0xf]
      %v1824 = vld [vmem:[%s6 + $0x10] sm:$0xf]
      %v1825 = vld [vmem:[%s6 + $0x14] sm:$0xf]
      %v1826 = vld [vmem:[%s6 + $0x18] sm:$0xf]
      %v1827 = vld [vmem:[%s6 + $0x1c] sm:$0xf]
      %v1828 = vld [vmem:[%s6 + $0x20] sm:$0xf]
      %v1829 = vld [vmem:[%s6 + $0x24] sm:$0xf]
      %v1830 = vld [vmem:[%s6 + $0x28] sm:$0xf]
      %v1831 = vld [vmem:[%s6 + $0x2c] sm:$0xf]
      %v1832 = vld [vmem:[%s6 + $0x30] sm:$0xf]
      %v1833 = vld [vmem:[%s6 + $0x34] sm:$0xf]
      %v1834 = vld [vmem:[%s6 + $0x38] sm:$0xf]
      %v1835 = vld [vmem:[%s6 + $0x3c] sm:$0xf]
      %v1836 = vld [vmem:[%s6 + $0x40] sm:$0xf]
      %v1837 = vld [vmem:[%s6 + $0x44] sm:$0xf]
      %v1838 = vld [vmem:[%s6 + $0x48] sm:$0xf]
      %v1839 = vld [vmem:[%s6 + $0x4c] sm:$0xf]
      %v1840 = vld [vmem:[%s6 + $0x50] sm:$0xf]
      %v1841 = vld [vmem:[%s6 + $0x54] sm:$0xf]
      %v1842 = vld [vmem:[%s6 + $0x58] sm:$0xf]
      %v1843 = vld [vmem:[%s6 + $0x5c] sm:$0xf]
      %v1844 = vld [vmem:[%s6 + $0x60] sm:$0xf]
      %v1845 = vld [vmem:[%s6 + $0x64] sm:$0xf]
      %v1846 = vld [vmem:[%s6 + $0x68] sm:$0xf]
      %v1847 = vld [vmem:[%s6 + $0x6c] sm:$0xf]
      %v1848 = vld [vmem:[%s6 + $0x70] sm:$0xf]
      %v1849 = vld [vmem:[%s6 + $0x74] sm:$0xf]
      %v1850 = vld [vmem:[%s6 + $0x78] sm:$0xf]
      %v1851 = vld [vmem:[%s6 + $0x7c] sm:$0xf]
      %v1852 = vld [vmem:[%s6 + $0x80] sm:$0xf]
      %v1853 = vld [vmem:[%s6 + $0x84] sm:$0xf]
      %v1854 = vld [vmem:[%s6 + $0x88] sm:$0xf]
      %v1855 = vld [vmem:[%s6 + $0x8c] sm:$0xf]
      %v1856 = vld [vmem:[%s6 + $0x90] sm:$0xf]
      %v1857 = vld [vmem:[%s6 + $0x94] sm:$0xf]
      %v1858 = vld [vmem:[%s6 + $0x98] sm:$0xf]
      %v1859 = vld [vmem:[%s6 + $0x9c] sm:$0xf]
      %v1860 = vld [vmem:[%s7] sm:$0x1]
      %v1862 = vlaneseq
      %v1863 = vshrl.u32 %v1862, 7
      %v1864 = vsub.s32 0, %v1863
      %v1865 = vrot.slane %v1860, %v1864
      %v1907 = vunpack.c.l.b16 %v1820
      %v1908 = vunpack.c.l.b16 %v1821
      %v1909 = vunpack.c.l.b16 %v1822
      %v1910 = vunpack.c.l.b16 %v1823
      %v1911 = vunpack.c.l.b16 %v1824
      %v1912 = vunpack.c.l.b16 %v1825
      %v1913 = vunpack.c.l.b16 %v1826
      %v1914 = vunpack.c.l.b16 %v1827
      %v1915 = vunpack.c.l.b16 %v1828
      %v1916 = vunpack.c.l.b16 %v1829
      %v1917 = vunpack.c.l.b16 %v1830
      %v1918 = vunpack.c.l.b16 %v1831
      %v1919 = vunpack.c.l.b16 %v1832
      %v1920 = vunpack.c.l.b16 %v1833
      %v1921 = vunpack.c.l.b16 %v1834
      %v1922 = vunpack.c.l.b16 %v1835
      %v1923 = vunpack.c.l.b16 %v1836
      %v1924 = vunpack.c.l.b16 %v1837
      %v1925 = vunpack.c.l.b16 %v1838
      %v1926 = vunpack.c.l.b16 %v1839
      %v1927 = vunpack.c.l.b16 %v1840
      %v1928 = vunpack.c.l.b16 %v1841
      %v1929 = vunpack.c.l.b16 %v1842
      %v1930 = vunpack.c.l.b16 %v1843
      %v1931 = vunpack.c.l.b16 %v1844
      %v1932 = vunpack.c.l.b16 %v1845
      %v1933 = vunpack.c.l.b16 %v1846
      %v1934 = vunpack.c.l.b16 %v1847
      %v1935 = vunpack.c.l.b16 %v1848
      %v1936 = vunpack.c.l.b16 %v1849
      %v1937 = vunpack.c.l.b16 %v1850
      %v1938 = vunpack.c.l.b16 %v1851
      %v1939 = vunpack.c.l.b16 %v1852
      %v1940 = vunpack.c.l.b16 %v1853
      %v1941 = vunpack.c.l.b16 %v1854
      %v1942 = vunpack.c.l.b16 %v1855
      %v1943 = vunpack.c.l.b16 %v1856
      %v1944 = vunpack.c.l.b16 %v1857
      %v1945 = vunpack.c.l.b16 %v1858
      %v1946 = vunpack.c.l.b16 %v1859
      %v1947 = vpack.c.b16 %v1908, %v1907
      %v1948 = vpack.c.b16 %v1910, %v1909
      %v1949 = vpack.c.b16 %v1912, %v1911
      %v1950 = vpack.c.b16 %v1914, %v1913
      %v1951 = vpack.c.b16 %v1916, %v1915
      %v1952 = vpack.c.b16 %v1918, %v1917
      %v1953 = vpack.c.b16 %v1920, %v1919
      %v1954 = vpack.c.b16 %v1922, %v1921
      %v1955 = vpack.c.b16 %v1924, %v1923
      %v1956 = vpack.c.b16 %v1926, %v1925
      %v1957 = vpack.c.b16 %v1928, %v1927
      %v1958 = vpack.c.b16 %v1930, %v1929
      %v1959 = vpack.c.b16 %v1932, %v1931
      %v1960 = vpack.c.b16 %v1934, %v1933
      %v1961 = vpack.c.b16 %v1936, %v1935
      %v1962 = vpack.c.b16 %v1938, %v1937
      %v1963 = vpack.c.b16 %v1940, %v1939
      %v1964 = vpack.c.b16 %v1942, %v1941
      %v1965 = vpack.c.b16 %v1944, %v1943
      %v1966 = vpack.c.b16 %v1946, %v1945
      %v1988 = vsel %vm772, %v1803, 0
      %v1991 = vsel %vm772, %v1805, 0
      %1993 = vmatprep.subr.bf16.mxu0 0
      %1994 = vmatpush1.bf16.msra.mxu0 %v1947
      %1995 = vmatprep.subr.bf16.mxu0 0
      %1996 = vmatpush1.bf16.msra.mxu0 %v1948
      %1997 = vmatprep.subr.bf16.mxu0 0
      %1998 = vmatpush1.bf16.msra.mxu0 %v1949
      %1999 = vmatprep.subr.bf16.mxu0 0
      %2000 = vmatpush1.bf16.msra.mxu0 %v1950
      %2001 = vmatprep.subr.bf16.mxu0 0
      %2002 = vmatpush1.bf16.msra.mxu0 %v1951
      %2003 = vmatprep.subr.bf16.mxu0 0
      %2004 = vmatpush1.bf16.msra.mxu0 %v1952
      %2005 = vmatprep.subr.bf16.mxu0 0
      %2006 = vmatpush1.bf16.msra.mxu0 %v1953
      %2007 = vmatprep.subr.bf16.mxu0 0
      %2008 = vmatpush1.bf16.msra.mxu0 %v1954
      %2009 = vmatprep.subr.bf16.mxu0 0
      %2010 = vmatpush1.bf16.msra.mxu0 %v1955
      %2011 = vmatprep.subr.bf16.mxu0 0
      %2012 = vmatpush1.bf16.msra.mxu0 %v1956
      %2013 = vmatprep.subr.bf16.mxu0 0
      %2014 = vmatpush1.bf16.msra.mxu0 %v1957
      %2015 = vmatprep.subr.bf16.mxu0 0
      %2016 = vmatpush1.bf16.msra.mxu0 %v1958
      %2017 = vmatprep.subr.bf16.mxu0 0
      %2018 = vmatpush1.bf16.msra.mxu0 %v1959
      %2019 = vmatprep.subr.bf16.mxu0 0
      %2020 = vmatpush1.bf16.msra.mxu0 %v1960
      %2021 = vmatprep.subr.bf16.mxu0 0
      %2022 = vmatpush1.bf16.msra.mxu0 %v1961
      %2023 = vmatprep.subr.bf16.mxu0 0
      %2024 = vmatpush1.bf16.msra.mxu0 %v1962
      %2025 = vmatprep.mubr.bf16.mxu0 %v1814
      %2026 = vmatmul.mubr.bf16.gmra.mrb[0].mxu0 %v1807
      %v2027 = vpop.f32.mrb[0].mxu0
      %v2028 = vadd.f32 %v1865, %v2027
      %v2029 = vpop.f32.mrb[0].mxu0
      %v2030 = vpop.f32.mrb[0].mxu0
      %v2031 = vadd.f32 %v1865, %v2030
      %v2032 = vpop.f32.mrb[0].mxu0
      %2033 = vmatprep.mubr.bf16.mxu0 %v1818
      %2034 = vmatmul.mubr.bf16.gmra.mrb[0].mxu0 %v1810
      %v2035 = vpop.f32.mrb[0].mxu0
      %v2036 = vadd.f32 %v1865, %v2035
      %v2037 = vpop.f32.mrb[0].mxu0
      %v2038 = vpop.f32.mrb[0].mxu0
      %v2039 = vadd.f32 %v1865, %v2038
      %v2040 = vpop.f32.mrb[0].mxu0
      %2041 = vdwg.mxu0
      %2042 = vmatprep.subr.bf16.mxu0 0
      %2043 = vmatpush1.bf16.msra.mxu0 %v1963
      %2044 = vmatprep.subr.bf16.mxu0 0
      %2045 = vmatpush1.bf16.msra.mxu0 %v1964
      %2046 = vmatprep.subr.bf16.mxu0 0
      %2047 = vmatpush1.bf16.msra.mxu0 %v1965
      %2048 = vmatprep.subr.bf16.mxu0 0
      %2049 = vmatpush1.bf16.msra.mxu0 %v1966
      %2050 = vmatprep.subr.bf16.mxu0 0
      %2051 = vmatpush1.bf16.msra.mxu0 0
      %2052 = vmatprep.subr.bf16.mxu0 0
      %2053 = vmatpush1.bf16.msra.mxu0 0
      %2054 = vmatprep.subr.bf16.mxu0 0
      %2055 = vmatpush1.bf16.msra.mxu0 0
      %2056 = vmatprep.subr.bf16.mxu0 0
      %2057 = vmatpush1.bf16.msra.mxu0 0
      %2058 = vmatprep.subr.bf16.mxu0 0
      %2059 = vmatpush1.bf16.msra.mxu0 0
      %2060 = vmatprep.subr.bf16.mxu0 0
      %2061 = vmatpush1.bf16.msra.mxu0 0
      %2062 = vmatprep.subr.bf16.mxu0 0
      %2063 = vmatpush1.bf16.msra.mxu0 0
      %2064 = vmatprep.subr.bf16.mxu0 0
      %2065 = vmatpush1.bf16.msra.mxu0 0
      %2066 = vmatprep.subr.bf16.mxu0 0
      %2067 = vmatpush1.bf16.msra.mxu0 0
      %2068 = vmatprep.subr.bf16.mxu0 0
      %2069 = vmatpush1.bf16.msra.mxu0 0
      %2070 = vmatprep.subr.bf16.mxu0 0
      %2071 = vmatpush1.bf16.msra.mxu0 0
      %2072 = vmatprep.subr.bf16.mxu0 0
      %2073 = vmatpush1.bf16.msra.mxu0 0
      %2074 = vmatprep.mubr.bf16.mxu0 0
      %2075 = vmatmul.mubr.bf16.gmra.mrb[0].mxu0 %v1988
      %v2076 = vpop.f32.mrb[0].mxu0
      %v2077 = vadd.f32 %v2028, %v2076
      %v2078 = vpop.f32.mrb[0].mxu0
      %v2079 = vpop.f32.mrb[0].mxu0
      %v2080 = vadd.f32 %v2031, %v2079
      %v2081 = vpop.f32.mrb[0].mxu0
      %2082 = vmatprep.mubr.bf16.mxu0 0
      %2083 = vmatmul.mubr.bf16.gmra.mrb[0].mxu0 %v1991
      %v2084 = vpop.f32.mrb[0].mxu0
      %v2085 = vadd.f32 %v2036, %v2084
      %v2086 = vpop.f32.mrb[0].mxu0
      %v2087 = vpop.f32.mrb[0].mxu0
      %v2088 = vadd.f32 %v2039, %v2087
      %v2089 = vpop.f32.mrb[0].mxu0
      %2090 = vdwg.mxu0
      %v2091 = vld [vmem:[#allocation5] sm:$0xff]
      %v2092 = vld [vmem:[#allocation5 + $0x8] sm:$0xff]
      %v2093 = vld [vmem:[#allocation5 + $0x10] sm:$0xff]
      %v2094 = vld [vmem:[#allocation5 + $0x18] sm:$0xff]
      %v2095 = vadd.f32 %v2077, %v2091
      %v2096 = vadd.f32 %v2080, %v2092
      %v2097 = vadd.f32 %v2085, %v2093
      %v2098 = vadd.f32 %v2088, %v2094
      %2099 = vst.msk [vmem:[#allocation3 + $0x2] sm:$0xff] %vm772, %v2095
      %2100 = vst.msk [vmem:[#allocation3 + $0xa] sm:$0xff] %vm772, %v2096
      %2101 = vst.msk [vmem:[#allocation3 + $0x12] sm:$0xff] %vm772, %v2097
      %2102 = vst.msk [vmem:[#allocation3 + $0x1a] sm:$0xff] %vm772, %v2098
      %v2103 = vld [vmem:[#allocation3] sm:$0xff]
      %v2104 = vld [vmem:[#allocation3 + $0x8] sm:$0xff]
      %v2105 = vld [vmem:[#allocation3 + $0x10] sm:$0xff]
      %v2106 = vld [vmem:[#allocation3 + $0x18] sm:$0xff]
      %v2107 = vld [vmem:[#allocation3 + $0x20] sm:$0xf]
      %v2108 = vpack.c.bf16 %v2104, %v2103
      %v2109 = vpack.c.bf16 %v2106, %v2105
      %v2110 = vpack.c.bf16 %v2107, %v2107
      %v2112 = vshrl.u32 %v2108, 16
      %v2114 = vshll.u32 %v2108, 16
      %v2116 = vrot.slane %v2114, 1
      %v2117 = vor.u32 %v2112, %v2116
      %v2119 = vshll.u32 %v2109, 16
      %v2121 = vrot.slane %v2119, 1
      %v2122 = vsel %vm511, %v2117, %v2121
      %v2123 = vshrl.u32 %v2109, 16
      %v2125 = vor.u32 %v2123, %v2121
      %v2127 = vshll.u32 %v2110, 16
      %v2129 = vrot.slane %v2127, 1
      %v2130 = vsel %vm511, %v2125, %v2129
      %2131 = vrot.lane.b32.xlu0 %v2122, 64
      %v2132 = vpop.permute.xlu0 %2131
      %2133 = vrot.lane.b32.xlu0 %v2130, 64
      %v2134 = vpop.permute.xlu0 %2133
      %v2138 = vrot.slane %v2108, 1
      %v2139 = vrot.slane %v2109, 1
      %v2140 = vsel %vm539, %v2138, %v2139
      %v2141 = vrot.slane %v2110, 1
      %v2142 = vsel %vm539, %v2139, %v2141
      %v2143 = vrot.slane %v2112, 1
      %v2144 = vrot.slane %v2114, 2
      %v2145 = vor.u32 %v2143, %v2144
      %v2146 = vrot.slane %v2123, 1
      %v2147 = vrot.slane %v2119, 2
      %v2148 = vor.u32 %v2146, %v2147
      %v2149 = vsel %vm549, %v2145, %v2148
      %v2150 = vshrl.u32 %v2110, 16
      %v2152 = vrot.slane %v2150, 1
      %v2153 = vrot.slane %v2127, 2
      %v2154 = vor.u32 %v2152, %v2153
      %v2155 = vsel %vm549, %v2148, %v2154
      %2156 = vrot.lane.b32.xlu0 %v2149, 64
      %v2157 = vpop.permute.xlu0 %2156
      %2158 = vrot.lane.b32.xlu0 %v2155, 64
      %v2159 = vpop.permute.xlu0 %2158
      %v2160 = vrot.slane %v2108, 2
      %v2161 = vrot.slane %v2109, 2
      %v2162 = vsel %vm567, %v2160, %v2161
      %v2163 = vrot.slane %v2110, 2
      %v2164 = vsel %vm567, %v2161, %v2163
      %v2166 = vsel %vm772, %v2108, %v2132
      %v2169 = vsel %vm772, %v2109, %v2134
      %v2173 = vsel %vm772, %v2140, %v2157
      %v2177 = vsel %vm772, %v2142, %v2159
      %v2179 = vld [vmem:[%s8] sm:$0xf]
      %v2180 = vld [vmem:[%s8 + $0x4] sm:$0xf]
      %v2181 = vld [vmem:[%s8 + $0x8] sm:$0xf]
      %v2182 = vld [vmem:[%s8 + $0xc] sm:$0xf]
      %v2183 = vld [vmem:[%s8 + $0x10] sm:$0xf]
      %v2184 = vld [vmem:[%s8 + $0x14] sm:$0xf]
      %v2185 = vld [vmem:[%s8 + $0x18] sm:$0xf]
      %v2186 = vld [vmem:[%s8 + $0x1c] sm:$0xf]
      %v2187 = vld [vmem:[%s8 + $0x20] sm:$0xf]
      %v2188 = vld [vmem:[%s8 + $0x24] sm:$0xf]
      %v2189 = vld [vmem:[%s8 + $0x28] sm:$0xf]
      %v2190 = vld [vmem:[%s8 + $0x2c] sm:$0xf]
      %v2191 = vld [vmem:[%s8 + $0x30] sm:$0xf]
      %v2192 = vld [vmem:[%s8 + $0x34] sm:$0xf]
      %v2193 = vld [vmem:[%s8 + $0x38] sm:$0xf]
      %v2194 = vld [vmem:[%s8 + $0x3c] sm:$0xf]
      %v2195 = vld [vmem:[%s8 + $0x40] sm:$0xf]
      %v2196 = vld [vmem:[%s8 + $0x44] sm:$0xf]
      %v2197 = vld [vmem:[%s8 + $0x48] sm:$0xf]
      %v2198 = vld [vmem:[%s8 + $0x4c] sm:$0xf]
      %v2199 = vld [vmem:[%s8 + $0x50] sm:$0xf]
      %v2200 = vld [vmem:[%s8 + $0x54] sm:$0xf]
      %v2201 = vld [vmem:[%s8 + $0x58] sm:$0xf]
      %v2202 = vld [vmem:[%s8 + $0x5c] sm:$0xf]
      %v2203 = vld [vmem:[%s8 + $0x60] sm:$0xf]
      %v2204 = vld [vmem:[%s8 + $0x64] sm:$0xf]
      %v2205 = vld [vmem:[%s8 + $0x68] sm:$0xf]
      %v2206 = vld [vmem:[%s8 + $0x6c] sm:$0xf]
      %v2207 = vld [vmem:[%s8 + $0x70] sm:$0xf]
      %v2208 = vld [vmem:[%s8 + $0x74] sm:$0xf]
      %v2209 = vld [vmem:[%s8 + $0x78] sm:$0xf]
      %v2210 = vld [vmem:[%s8 + $0x7c] sm:$0xf]
      %v2211 = vld [vmem:[%s8 + $0x80] sm:$0xf]
      %v2212 = vld [vmem:[%s8 + $0x84] sm:$0xf]
      %v2213 = vld [vmem:[%s8 + $0x88] sm:$0xf]
      %v2214 = vld [vmem:[%s8 + $0x8c] sm:$0xf]
      %v2215 = vld [vmem:[%s8 + $0x90] sm:$0xf]
      %v2216 = vld [vmem:[%s8 + $0x94] sm:$0xf]
      %v2217 = vld [vmem:[%s8 + $0x98] sm:$0xf]
      %v2218 = vld [vmem:[%s8 + $0x9c] sm:$0xf]
      %v2219 = vld [vmem:[%s9] sm:$0x1]
      %v2220 = vlaneseq
      %v2221 = vshrl.u32 %v2220, 7
      %v2222 = vsub.s32 0, %v2221
      %v2223 = vrot.slane %v2219, %v2222
      %v2264 = vunpack.c.l.b16 %v2179
      %v2265 = vunpack.c.l.b16 %v2180
      %v2266 = vunpack.c.l.b16 %v2181
      %v2267 = vunpack.c.l.b16 %v2182
      %v2268 = vunpack.c.l.b16 %v2183
      %v2269 = vunpack.c.l.b16 %v2184
      %v2270 = vunpack.c.l.b16 %v2185
      %v2271 = vunpack.c.l.b16 %v2186
      %v2272 = vunpack.c.l.b16 %v2187
      %v2273 = vunpack.c.l.b16 %v2188
      %v2274 = vunpack.c.l.b16 %v2189
      %v2275 = vunpack.c.l.b16 %v2190
      %v2276 = vunpack.c.l.b16 %v2191
      %v2277 = vunpack.c.l.b16 %v2192
      %v2278 = vunpack.c.l.b16 %v2193
      %v2279 = vunpack.c.l.b16 %v2194
      %v2280 = vunpack.c.l.b16 %v2195
      %v2281 = vunpack.c.l.b16 %v2196
      %v2282 = vunpack.c.l.b16 %v2197
      %v2283 = vunpack.c.l.b16 %v2198
      %v2284 = vunpack.c.l.b16 %v2199
      %v2285 = vunpack.c.l.b16 %v2200
      %v2286 = vunpack.c.l.b16 %v2201
      %v2287 = vunpack.c.l.b16 %v2202
      %v2288 = vunpack.c.l.b16 %v2203
      %v2289 = vunpack.c.l.b16 %v2204
      %v2290 = vunpack.c.l.b16 %v2205
      %v2291 = vunpack.c.l.b16 %v2206
      %v2292 = vunpack.c.l.b16 %v2207
      %v2293 = vunpack.c.l.b16 %v2208
      %v2294 = vunpack.c.l.b16 %v2209
      %v2295 = vunpack.c.l.b16 %v2210
      %v2296 = vunpack.c.l.b16 %v2211
      %v2297 = vunpack.c.l.b16 %v2212
      %v2298 = vunpack.c.l.b16 %v2213
      %v2299 = vunpack.c.l.b16 %v2214
      %v2300 = vunpack.c.l.b16 %v2215
      %v2301 = vunpack.c.l.b16 %v2216
      %v2302 = vunpack.c.l.b16 %v2217
      %v2303 = vunpack.c.l.b16 %v2218
      %v2304 = vpack.c.b16 %v2265, %v2264
      %v2305 = vpack.c.b16 %v2267, %v2266
      %v2306 = vpack.c.b16 %v2269, %v2268
      %v2307 = vpack.c.b16 %v2271, %v2270
      %v2308 = vpack.c.b16 %v2273, %v2272
      %v2309 = vpack.c.b16 %v2275, %v2274
      %v2310 = vpack.c.b16 %v2277, %v2276
      %v2311 = vpack.c.b16 %v2279, %v2278
      %v2312 = vpack.c.b16 %v2281, %v2280
      %v2313 = vpack.c.b16 %v2283, %v2282
      %v2314 = vpack.c.b16 %v2285, %v2284
      %v2315 = vpack.c.b16 %v2287, %v2286
      %v2316 = vpack.c.b16 %v2289, %v2288
      %v2317 = vpack.c.b16 %v2291, %v2290
      %v2318 = vpack.c.b16 %v2293, %v2292
      %v2319 = vpack.c.b16 %v2295, %v2294
      %v2320 = vpack.c.b16 %v2297, %v2296
      %v2321 = vpack.c.b16 %v2299, %v2298
      %v2322 = vpack.c.b16 %v2301, %v2300
      %v2323 = vpack.c.b16 %v2303, %v2302
      %v2345 = vsel %vm772, %v2162, 0
      %v2348 = vsel %vm772, %v2164, 0
      %2350 = vmatprep.subr.bf16.mxu0 0
      %2351 = vmatpush1.bf16.msra.mxu0 %v2304
      %2352 = vmatprep.subr.bf16.mxu0 0
      %2353 = vmatpush1.bf16.msra.mxu0 %v2305
      %2354 = vmatprep.subr.bf16.mxu0 0
      %2355 = vmatpush1.bf16.msra.mxu0 %v2306
      %2356 = vmatprep.subr.bf16.mxu0 0
      %2357 = vmatpush1.bf16.msra.mxu0 %v2307
      %2358 = vmatprep.subr.bf16.mxu0 0
      %2359 = vmatpush1.bf16.msra.mxu0 %v2308
      %2360 = vmatprep.subr.bf16.mxu0 0
      %2361 = vmatpush1.bf16.msra.mxu0 %v2309
      %2362 = vmatprep.subr.bf16.mxu0 0
      %2363 = vmatpush1.bf16.msra.mxu0 %v2310
      %2364 = vmatprep.subr.bf16.mxu0 0
      %2365 = vmatpush1.bf16.msra.mxu0 %v2311
      %2366 = vmatprep.subr.bf16.mxu0 0
      %2367 = vmatpush1.bf16.msra.mxu0 %v2312
      %2368 = vmatprep.subr.bf16.mxu0 0
      %2369 = vmatpush1.bf16.msra.mxu0 %v2313
      %2370 = vmatprep.subr.bf16.mxu0 0
      %2371 = vmatpush1.bf16.msra.mxu0 %v2314
      %2372 = vmatprep.subr.bf16.mxu0 0
      %2373 = vmatpush1.bf16.msra.mxu0 %v2315
      %2374 = vmatprep.subr.bf16.mxu0 0
      %2375 = vmatpush1.bf16.msra.mxu0 %v2316
      %2376 = vmatprep.subr.bf16.mxu0 0
      %2377 = vmatpush1.bf16.msra.mxu0 %v2317
      %2378 = vmatprep.subr.bf16.mxu0 0
      %2379 = vmatpush1.bf16.msra.mxu0 %v2318
      %2380 = vmatprep.subr.bf16.mxu0 0
      %2381 = vmatpush1.bf16.msra.mxu0 %v2319
      %2382 = vmatprep.mubr.bf16.mxu0 %v2173
      %2383 = vmatmul.mubr.bf16.gmra.mrb[0].mxu0 %v2166
      %v2384 = vpop.f32.mrb[0].mxu0
      %v2385 = vadd.f32 %v2223, %v2384
      %v2386 = vpop.f32.mrb[0].mxu0
      %v2387 = vpop.f32.mrb[0].mxu0
      %v2388 = vadd.f32 %v2223, %v2387
      %v2389 = vpop.f32.mrb[0].mxu0
      %2390 = vmatprep.mubr.bf16.mxu0 %v2177
      %2391 = vmatmul.mubr.bf16.gmra.mrb[0].mxu0 %v2169
      %v2392 = vpop.f32.mrb[0].mxu0
      %v2393 = vadd.f32 %v2223, %v2392
      %v2394 = vpop.f32.mrb[0].mxu0
      %v2395 = vpop.f32.mrb[0].mxu0
      %v2396 = vadd.f32 %v2223, %v2395
      %v2397 = vpop.f32.mrb[0].mxu0
      %2398 = vdwg.mxu0
      %2399 = vmatprep.subr.bf16.mxu0 0
      %2400 = vmatpush1.bf16.msra.mxu0 %v2320
      %2401 = vmatprep.subr.bf16.mxu0 0
      %2402 = vmatpush1.bf16.msra.mxu0 %v2321
      %2403 = vmatprep.subr.bf16.mxu0 0
      %2404 = vmatpush1.bf16.msra.mxu0 %v2322
      %2405 = vmatprep.subr.bf16.mxu0 0
      %2406 = vmatpush1.bf16.msra.mxu0 %v2323
      %2407 = vmatprep.subr.bf16.mxu0 0
      %2408 = vmatpush1.bf16.msra.mxu0 0
      %2409 = vmatprep.subr.bf16.mxu0 0
      %2410 = vmatpush1.bf16.msra.mxu0 0
      %2411 = vmatprep.subr.bf16.mxu0 0
      %2412 = vmatpush1.bf16.msra.mxu0 0
      %2413 = vmatprep.subr.bf16.mxu0 0
      %2414 = vmatpush1.bf16.msra.mxu0 0
      %2415 = vmatprep.subr.bf16.mxu0 0
      %2416 = vmatpush1.bf16.msra.mxu0 0
      %2417 = vmatprep.subr.bf16.mxu0 0
      %2418 = vmatpush1.bf16.msra.mxu0 0
      %2419 = vmatprep.subr.bf16.mxu0 0
      %2420 = vmatpush1.bf16.msra.mxu0 0
      %2421 = vmatprep.subr.bf16.mxu0 0
      %2422 = vmatpush1.bf16.msra.mxu0 0
      %2423 = vmatprep.subr.bf16.mxu0 0
      %2424 = vmatpush1.bf16.msra.mxu0 0
      %2425 = vmatprep.subr.bf16.mxu0 0
      %2426 = vmatpush1.bf16.msra.mxu0 0
      %2427 = vmatprep.subr.bf16.mxu0 0
      %2428 = vmatpush1.bf16.msra.mxu0 0
      %2429 = vmatprep.subr.bf16.mxu0 0
      %2430 = vmatpush1.bf16.msra.mxu0 0
      %2431 = vmatprep.mubr.bf16.mxu0 0
      %2432 = vmatmul.mubr.bf16.gmra.mrb[0].mxu0 %v2345
      %v2433 = vpop.f32.mrb[0].mxu0
      %v2434 = vadd.f32 %v2385, %v2433
      %v2435 = vpop.f32.mrb[0].mxu0
      %v2436 = vpop.f32.mrb[0].mxu0
      %v2437 = vadd.f32 %v2388, %v2436
      %v2438 = vpop.f32.mrb[0].mxu0
      %2439 = vmatprep.mubr.bf16.mxu0 0
      %2440 = vmatmul.mubr.bf16.gmra.mrb[0].mxu0 %v2348
      %v2441 = vpop.f32.mrb[0].mxu0
      %v2442 = vadd.f32 %v2393, %v2441
      %v2443 = vpop.f32.mrb[0].mxu0
      %v2444 = vpop.f32.mrb[0].mxu0
      %v2445 = vadd.f32 %v2396, %v2444
      %v2446 = vpop.f32.mrb[0].mxu0
      %2447 = vdwg.mxu0
      %v2448 = vld [vmem:[%s9 + $0x1] sm:$0x1]
      %vm2449 = vcmp.ge.f32.partialorder %v2434, 0.0
      %vm2450 = vcmp.ge.f32.partialorder %v2437, 0.0
      %vm2451 = vcmp.ge.f32.partialorder %v2442, 0.0
      %vm2452 = vcmp.ge.f32.partialorder %v2445, 0.0
      %v2453 = vlaneseq
      %v2454 = vshrl.u32 %v2453, 7
      %v2455 = vsub.s32 0, %v2454
      %v2456 = vrot.slane %v2448, %v2455
      %v2457 = vmul.f32 %v2456, %v2434
      %v2458 = vmul.f32 %v2456, %v2437
      %v2459 = vmul.f32 %v2456, %v2442
      %v2460 = vmul.f32 %v2456, %v2445
      %v2461 = vsel %vm2449, %v2434, %v2457
      %v2462 = vsel %vm2450, %v2437, %v2458
      %v2463 = vsel %vm2451, %v2442, %v2459
      %v2464 = vsel %vm2452, %v2445, %v2460
      %2465 = vst [vmem:[#allocation6 + $0x1] sm:$0xff] %v2461
      %2466 = vst [vmem:[#allocation6 + $0x9] sm:$0xff] %v2462
      %2467 = vst [vmem:[#allocation6 + $0x11] sm:$0xff] %v2463
      %2468 = vst [vmem:[#allocation6 + $0x19] sm:$0xff] %v2464
      %v2469 = vld [vmem:[#allocation6] sm:$0xff]
      %v2470 = vld [vmem:[#allocation6 + $0x8] sm:$0xff]
      %v2471 = vld [vmem:[#allocation6 + $0x10] sm:$0xff]
      %v2472 = vld [vmem:[#allocation6 + $0x18] sm:$0xff]
      %v2473 = vld [vmem:[#allocation6 + $0x20] sm:$0x3]
      %v2474 = vpack.c.bf16 %v2470, %v2469
      %v2475 = vpack.c.bf16 %v2472, %v2471
      %v2476 = vpack.c.bf16 %v2473, %v2473
      %v2478 = vshrl.u32 %v2474, 16
      %v2480 = vshll.u32 %v2474, 16
      %v2482 = vrot.slane %v2480, 1
      %v2483 = vor.u32 %v2478, %v2482
      %v2485 = vshll.u32 %v2475, 16
      %v2487 = vrot.slane %v2485, 1
      %v2488 = vsel %vm511, %v2483, %v2487
      %v2489 = vshrl.u32 %v2475, 16
      %v2491 = vor.u32 %v2489, %v2487
      %v2493 = vshll.u32 %v2476, 16
      %v2495 = vrot.slane %v2493, 1
      %v2496 = vsel %vm511, %v2491, %v2495
      %v2502 = vrot.slane %v2474, 1
      %v2503 = vrot.slane %v2475, 1
      %v2504 = vsel %vm539, %v2502, %v2503
      %v2505 = vrot.slane %v2476, 1
      %v2506 = vsel %vm539, %v2503, %v2505
      %v2509 = vld [vmem:[%s10] sm:$0xff]
      %v2510 = vld [vmem:[%s10 + $0x8] sm:$0xf]
      %v2511 = vld [vmem:[%s10 + $0xc] sm:$0xff]
      %v2512 = vld [vmem:[%s10 + $0x14] sm:$0xf]
      %v2513 = vld [vmem:[%s10 + $0x18] sm:$0xff]
      %v2514 = vld [vmem:[%s10 + $0x20] sm:$0xf]
      %v2515 = vld [vmem:[%s10 + $0x24] sm:$0xff]
      %v2516 = vld [vmem:[%s10 + $0x2c] sm:$0xf]
      %v2517 = vld [vmem:[%s10 + $0x30] sm:$0xff]
      %v2518 = vld [vmem:[%s10 + $0x38] sm:$0xf]
      %v2519 = vld [vmem:[%s10 + $0x3c] sm:$0xff]
      %v2520 = vld [vmem:[%s10 + $0x44] sm:$0xf]
      %v2521 = vld [vmem:[%s10 + $0x48] sm:$0xff]
      %v2522 = vld [vmem:[%s10 + $0x50] sm:$0xf]
      %v2523 = vld [vmem:[%s10 + $0x54] sm:$0xff]
      %v2524 = vld [vmem:[%s10 + $0x5c] sm:$0xf]
      %v2525 = vld [vmem:[%s10 + $0x60] sm:$0xff]
      %v2526 = vld [vmem:[%s10 + $0x68] sm:$0xf]
      %v2527 = vld [vmem:[%s10 + $0x6c] sm:$0xff]
      %v2528 = vld [vmem:[%s10 + $0x74] sm:$0xf]
      %v2529 = vld [vmem:[%s10 + $0x78] sm:$0xff]
      %v2530 = vld [vmem:[%s10 + $0x80] sm:$0xf]
      %v2531 = vld [vmem:[%s10 + $0x84] sm:$0xff]
      %v2532 = vld [vmem:[%s10 + $0x8c] sm:$0xf]
      %v2533 = vld [vmem:[%s10 + $0x90] sm:$0xff]
      %v2534 = vld [vmem:[%s10 + $0x98] sm:$0xf]
      %v2535 = vld [vmem:[%s10 + $0x9c] sm:$0xff]
      %v2536 = vld [vmem:[%s10 + $0xa4] sm:$0xf]
      %v2537 = vld [vmem:[%s10 + $0xa8] sm:$0xff]
      %v2538 = vld [vmem:[%s10 + $0xb0] sm:$0xf]
      %v2539 = vld [vmem:[%s10 + $0xb4] sm:$0xff]
      %v2540 = vld [vmem:[%s10 + $0xbc] sm:$0xf]
      %v2541 = vld [vmem:[%s10 + $0xc0] sm:$0xff]
      %v2542 = vld [vmem:[%s10 + $0xc8] sm:$0xf]
      %v2543 = vld [vmem:[%s10 + $0xcc] sm:$0xff]
      %v2544 = vld [vmem:[%s10 + $0xd4] sm:$0xf]
      %v2545 = vld [vmem:[%s10 + $0xd8] sm:$0xff]
      %v2546 = vld [vmem:[%s10 + $0xe0] sm:$0xf]
      %v2547 = vld [vmem:[%s10 + $0xe4] sm:$0xff]
      %v2548 = vld [vmem:[%s10 + $0xec] sm:$0xf]
      %v2549 = vld [vmem:[%s10 + $0xf0] sm:$0xff]
      %v2550 = vld [vmem:[%s10 + $0xf8] sm:$0xf]
      %v2551 = vld [vmem:[%s10 + $0xfc] sm:$0xff]
      %v2552 = vld [vmem:[%s10 + $0x104] sm:$0xf]
      %v2553 = vld [vmem:[%s10 + $0x108] sm:$0xff]
      %v2554 = vld [vmem:[%s10 + $0x110] sm:$0xf]
      %v2555 = vld [vmem:[%s10 + $0x114] sm:$0xff]
      %v2556 = vld [vmem:[%s10 + $0x11c] sm:$0xf]
      %v2557 = vld [vmem:[%s10 + $0x120] sm:$0xff]
      %v2558 = vld [vmem:[%s10 + $0x128] sm:$0xf]
      %v2559 = vld [vmem:[%s10 + $0x12c] sm:$0xff]
      %v2560 = vld [vmem:[%s10 + $0x134] sm:$0xf]
      %v2561 = vld [vmem:[%s10 + $0x138] sm:$0xff]
      %v2562 = vld [vmem:[%s10 + $0x140] sm:$0xf]
      %v2563 = vld [vmem:[%s10 + $0x144] sm:$0xff]
      %v2564 = vld [vmem:[%s10 + $0x14c] sm:$0xf]
      %v2565 = vld [vmem:[%s10 + $0x150] sm:$0xff]
      %v2566 = vld [vmem:[%s10 + $0x158] sm:$0xf]
      %v2567 = vld [vmem:[%s10 + $0x15c] sm:$0xff]
      %v2568 = vld [vmem:[%s10 + $0x164] sm:$0xf]
      %v2569 = vld [vmem:[%s10 + $0x168] sm:$0xff]
      %v2570 = vld [vmem:[%s10 + $0x170] sm:$0xf]
      %v2571 = vld [vmem:[%s10 + $0x174] sm:$0xff]
      %v2572 = vld [vmem:[%s10 + $0x17c] sm:$0xf]
      %v2573 = vld [vmem:[%s10 + $0x180] sm:$0xff]
      %v2574 = vld [vmem:[%s10 + $0x188] sm:$0xf]
      %v2575 = vld [vmem:[%s10 + $0x18c] sm:$0xff]
      %v2576 = vld [vmem:[%s10 + $0x194] sm:$0xf]
      %v2577 = vld [vmem:[%s10 + $0x198] sm:$0xff]
      %v2578 = vld [vmem:[%s10 + $0x1a0] sm:$0xf]
      %v2579 = vld [vmem:[%s10 + $0x1a4] sm:$0xff]
      %v2580 = vld [vmem:[%s10 + $0x1ac] sm:$0xf]
      %v2581 = vld [vmem:[%s10 + $0x1b0] sm:$0xff]
      %v2582 = vld [vmem:[%s10 + $0x1b8] sm:$0xf]
      %v2583 = vld [vmem:[%s10 + $0x1bc] sm:$0xff]
      %v2584 = vld [vmem:[%s10 + $0x1c4] sm:$0xf]
      %v2585 = vld [vmem:[%s10 + $0x1c8] sm:$0xff]
      %v2586 = vld [vmem:[%s10 + $0x1d0] sm:$0xf]
      %v2587 = vld [vmem:[%s10 + $0x1d4] sm:$0xff]
      %v2588 = vld [vmem:[%s10 + $0x1dc] sm:$0xf]
      %v2589 = vld [vmem:[%s10 + $0x1e0] sm:$0xff]
      %v2590 = vld [vmem:[%s10 + $0x1e8] sm:$0xf]
      %v2591 = vld [vmem:[%s10 + $0x1ec] sm:$0xff]
      %v2592 = vld [vmem:[%s10 + $0x1f4] sm:$0xf]
      %v2593 = vld [vmem:[%s10 + $0x1f8] sm:$0xff]
      %v2594 = vld [vmem:[%s10 + $0x200] sm:$0xf]
      %v2595 = vld [vmem:[%s10 + $0x204] sm:$0xff]
      %v2596 = vld [vmem:[%s10 + $0x20c] sm:$0xf]
      %v2597 = vld [vmem:[%s10 + $0x210] sm:$0xff]
      %v2598 = vld [vmem:[%s10 + $0x218] sm:$0xf]
      %v2599 = vld [vmem:[%s10 + $0x21c] sm:$0xff]
      %v2600 = vld [vmem:[%s10 + $0x224] sm:$0xf]
      %v2601 = vld [vmem:[%s10 + $0x228] sm:$0xff]
      %v2602 = vld [vmem:[%s10 + $0x230] sm:$0xf]
      %v2603 = vld [vmem:[%s10 + $0x234] sm:$0xff]
      %v2604 = vld [vmem:[%s10 + $0x23c] sm:$0xf]
      %v2605 = vld [vmem:[%s11] ss:$2 sm:$0x7]
      %v2607 = vlaneseq
      %v2608 = vshrl.u32 %v2607, 7
      %v2609 = vsub.s32 0, %v2608
      %v2610 = vrot.slane %v2605, %v2609
      %v2611 = vlaneseq
      %v2612 = vshrl.u32 %v2611, 7
      %v2613 = vsub.s32 1, %v2612
      %v2614 = vrot.slane %v2605, %v2613
      %v2615 = vlaneseq
      %v2616 = vshrl.u32 %v2615, 7
      %v2617 = vsub.s32 2, %v2616
      %v2618 = vrot.slane %v2605, %v2617
      %v2718 = vunpack.c.l.b16 %v2509
      %v2719 = vunpack.c.h.b16 %v2509
      %v2720 = vunpack.c.l.b16 %v2510
      %v2721 = vunpack.c.l.b16 %v2511
      %v2722 = vunpack.c.h.b16 %v2511
      %v2723 = vunpack.c.l.b16 %v2512
      %v2724 = vunpack.c.l.b16 %v2513
      %v2725 = vunpack.c.h.b16 %v2513
      %v2726 = vunpack.c.l.b16 %v2514
      %v2727 = vunpack.c.l.b16 %v2515
      %v2728 = vunpack.c.h.b16 %v2515
      %v2729 = vunpack.c.l.b16 %v2516
      %v2730 = vunpack.c.l.b16 %v2517
      %v2731 = vunpack.c.h.b16 %v2517
      %v2732 = vunpack.c.l.b16 %v2518
      %v2733 = vunpack.c.l.b16 %v2519
      %v2734 = vunpack.c.h.b16 %v2519
      %v2735 = vunpack.c.l.b16 %v2520
      %v2736 = vunpack.c.l.b16 %v2521
      %v2737 = vunpack.c.h.b16 %v2521
      %v2738 = vunpack.c.l.b16 %v2522
      %v2739 = vunpack.c.l.b16 %v2523
      %v2740 = vunpack.c.h.b16 %v2523
      %v2741 = vunpack.c.l.b16 %v2524
      %v2742 = vunpack.c.l.b16 %v2525
      %v2743 = vunpack.c.h.b16 %v2525
      %v2744 = vunpack.c.l.b16 %v2526
      %v2745 = vunpack.c.l.b16 %v2527
      %v2746 = vunpack.c.h.b16 %v2527
      %v2747 = vunpack.c.l.b16 %v2528
      %v2748 = vunpack.c.l.b16 %v2529
      %v2749 = vunpack.c.h.b16 %v2529
      %v2750 = vunpack.c.l.b16 %v2530
      %v2751 = vunpack.c.l.b16 %v2531
      %v2752 = vunpack.c.h.b16 %v2531
      %v2753 = vunpack.c.l.b16 %v2532
      %v2754 = vunpack.c.l.b16 %v2533
      %v2755 = vunpack.c.h.b16 %v2533
      %v2756 = vunpack.c.l.b16 %v2534
      %v2757 = vunpack.c.l.b16 %v2535
      %v2758 = vunpack.c.h.b16 %v2535
      %v2759 = vunpack.c.l.b16 %v2536
      %v2760 = vunpack.c.l.b16 %v2537
      %v2761 = vunpack.c.h.b16 %v2537
      %v2762 = vunpack.c.l.b16 %v2538
      %v2763 = vunpack.c.l.b16 %v2539
      %v2764 = vunpack.c.h.b16 %v2539
      %v2765 = vunpack.c.l.b16 %v2540
      %v2766 = vunpack.c.l.b16 %v2541
      %v2767 = vunpack.c.h.b16 %v2541
      %v2768 = vunpack.c.l.b16 %v2542
      %v2769 = vunpack.c.l.b16 %v2543
      %v2770 = vunpack.c.h.b16 %v2543
      %v2771 = vunpack.c.l.b16 %v2544
      %v2772 = vunpack.c.l.b16 %v2545
      %v2773 = vunpack.c.h.b16 %v2545
      %v2774 = vunpack.c.l.b16 %v2546
      %v2775 = vunpack.c.l.b16 %v2547
      %v2776 = vunpack.c.h.b16 %v2547
      %v2777 = vunpack.c.l.b16 %v2548
      %v2778 = vunpack.c.l.b16 %v2549
      %v2779 = vunpack.c.h.b16 %v2549
      %v2780 = vunpack.c.l.b16 %v2550
      %v2781 = vunpack.c.l.b16 %v2551
      %v2782 = vunpack.c.h.b16 %v2551
      %v2783 = vunpack.c.l.b16 %v2552
      %v2784 = vunpack.c.l.b16 %v2553
      %v2785 = vunpack.c.h.b16 %v2553
      %v2786 = vunpack.c.l.b16 %v2554
      %v2787 = vunpack.c.l.b16 %v2555
      %v2788 = vunpack.c.h.b16 %v2555
      %v2789 = vunpack.c.l.b16 %v2556
      %v2790 = vunpack.c.l.b16 %v2557
      %v2791 = vunpack.c.h.b16 %v2557
      %v2792 = vunpack.c.l.b16 %v2558
      %v2793 = vunpack.c.l.b16 %v2559
      %v2794 = vunpack.c.h.b16 %v2559
      %v2795 = vunpack.c.l.b16 %v2560
      %v2796 = vunpack.c.l.b16 %v2561
      %v2797 = vunpack.c.h.b16 %v2561
      %v2798 = vunpack.c.l.b16 %v2562
      %v2799 = vunpack.c.l.b16 %v2563
      %v2800 = vunpack.c.h.b16 %v2563
      %v2801 = vunpack.c.l.b16 %v2564
      %v2802 = vunpack.c.l.b16 %v2565
      %v2803 = vunpack.c.h.b16 %v2565
      %v2804 = vunpack.c.l.b16 %v2566
      %v2805 = vunpack.c.l.b16 %v2567
      %v2806 = vunpack.c.h.b16 %v2567
      %v2807 = vunpack.c.l.b16 %v2568
      %v2808 = vunpack.c.l.b16 %v2569
      %v2809 = vunpack.c.h.b16 %v2569
      %v2810 = vunpack.c.l.b16 %v2570
      %v2811 = vunpack.c.l.b16 %v2571
      %v2812 = vunpack.c.h.b16 %v2571
      %v2813 = vunpack.c.l.b16 %v2572
      %v2814 = vunpack.c.l.b16 %v2573
      %v2815 = vunpack.c.h.b16 %v2573
      %v2816 = vunpack.c.l.b16 %v2574
      %v2817 = vunpack.c.l.b16 %v2575
      %v2818 = vunpack.c.h.b16 %v2575
      %v2819 = vunpack.c.l.b16 %v2576
      %v2820 = vunpack.c.l.b16 %v2577
      %v2821 = vunpack.c.h.b16 %v2577
      %v2822 = vunpack.c.l.b16 %v2578
      %v2823 = vunpack.c.l.b16 %v2579
      %v2824 = vunpack.c.h.b16 %v2579
      %v2825 = vunpack.c.l.b16 %v2580
      %v2826 = vunpack.c.l.b16 %v2581
      %v2827 = vunpack.c.h.b16 %v2581
      %v2828 = vunpack.c.l.b16 %v2582
      %v2829 = vunpack.c.l.b16 %v2583
      %v2830 = vunpack.c.h.b16 %v2583
      %v2831 = vunpack.c.l.b16 %v2584
      %v2832 = vunpack.c.l.b16 %v2585
      %v2833 = vunpack.c.h.b16 %v2585
      %v2834 = vunpack.c.l.b16 %v2586
      %v2835 = vunpack.c.l.b16 %v2587
      %v2836 = vunpack.c.h.b16 %v2587
      %v2837 = vunpack.c.l.b16 %v2588
      %v2838 = vunpack.c.l.b16 %v2589
      %v2839 = vunpack.c.h.b16 %v2589
      %v2840 = vunpack.c.l.b16 %v2590
      %v2841 = vunpack.c.l.b16 %v2591
      %v2842 = vunpack.c.h.b16 %v2591
      %v2843 = vunpack.c.l.b16 %v2592
      %v2844 = vunpack.c.l.b16 %v2593
      %v2845 = vunpack.c.h.b16 %v2593
      %v2846 = vunpack.c.l.b16 %v2594
      %v2847 = vunpack.c.l.b16 %v2595
      %v2848 = vunpack.c.h.b16 %v2595
      %v2849 = vunpack.c.l.b16 %v2596
      %v2850 = vunpack.c.l.b16 %v2597
      %v2851 = vunpack.c.h.b16 %v2597
      %v2852 = vunpack.c.l.b16 %v2598
      %v2853 = vunpack.c.l.b16 %v2599
      %v2854 = vunpack.c.h.b16 %v2599
      %v2855 = vunpack.c.l.b16 %v2600
      %v2856 = vunpack.c.l.b16 %v2601
      %v2857 = vunpack.c.h.b16 %v2601
      %v2858 = vunpack.c.l.b16 %v2602
      %v2859 = vunpack.c.l.b16 %v2603
      %v2860 = vunpack.c.h.b16 %v2603
      %v2861 = vunpack.c.l.b16 %v2604
      %v2862 = vpack.c.b16 %v2721, %v2718
      %v2863 = vpack.c.b16 %v2722, %v2719
      %v2864 = vpack.c.b16 %v2723, %v2720
      %v2865 = vpack.c.b16 %v2727, %v2724
      %v2866 = vpack.c.b16 %v2728, %v2725
      %v2867 = vpack.c.b16 %v2729, %v2726
      %v2868 = vpack.c.b16 %v2733, %v2730
      %v2869 = vpack.c.b16 %v2734, %v2731
      %v2870 = vpack.c.b16 %v2735, %v2732
      %v2871 = vpack.c.b16 %v2739, %v2736
      %v2872 = vpack.c.b16 %v2740, %v2737
      %v2873 = vpack.c.b16 %v2741, %v2738
      %v2874 = vpack.c.b16 %v2745, %v2742
      %v2875 = vpack.c.b16 %v2746, %v2743
      %v2876 = vpack.c.b16 %v2747, %v2744
      %v2877 = vpack.c.b16 %v2751, %v2748
      %v2878 = vpack.c.b16 %v2752, %v2749
      %v2879 = vpack.c.b16 %v2753, %v2750
      %v2880 = vpack.c.b16 %v2757, %v2754
      %v2881 = vpack.c.b16 %v2758, %v2755
      %v2882 = vpack.c.b16 %v2759, %v2756
      %v2883 = vpack.c.b16 %v2763, %v2760
      %v2884 = vpack.c.b16 %v2764, %v2761
      %v2885 = vpack.c.b16 %v2765, %v2762
      %v2886 = vpack.c.b16 %v2769, %v2766
      %v2887 = vpack.c.b16 %v2770, %v2767
      %v2888 = vpack.c.b16 %v2771, %v2768
      %v2889 = vpack.c.b16 %v2775, %v2772
      %v2890 = vpack.c.b16 %v2776, %v2773
      %v2891 = vpack.c.b16 %v2777, %v2774
      %v2892 = vpack.c.b16 %v2781, %v2778
      %v2893 = vpack.c.b16 %v2782, %v2779
      %v2894 = vpack.c.b16 %v2783, %v2780
      %v2895 = vpack.c.b16 %v2787, %v2784
      %v2896 = vpack.c.b16 %v2788, %v2785
      %v2897 = vpack.c.b16 %v2789, %v2786
      %v2898 = vpack.c.b16 %v2793, %v2790
      %v2899 = vpack.c.b16 %v2794, %v2791
      %v2900 = vpack.c.b16 %v2795, %v2792
      %v2901 = vpack.c.b16 %v2799, %v2796
      %v2902 = vpack.c.b16 %v2800, %v2797
      %v2903 = vpack.c.b16 %v2801, %v2798
      %v2904 = vpack.c.b16 %v2805, %v2802
      %v2905 = vpack.c.b16 %v2806, %v2803
      %v2906 = vpack.c.b16 %v2807, %v2804
      %v2907 = vpack.c.b16 %v2811, %v2808
      %v2908 = vpack.c.b16 %v2812, %v2809
      %v2909 = vpack.c.b16 %v2813, %v2810
      %v2910 = vpack.c.b16 %v2817, %v2814
      %v2911 = vpack.c.b16 %v2818, %v2815
      %v2912 = vpack.c.b16 %v2819, %v2816
      %v2913 = vpack.c.b16 %v2823, %v2820
      %v2914 = vpack.c.b16 %v2824, %v2821
      %v2915 = vpack.c.b16 %v2825, %v2822
      %v2916 = vpack.c.b16 %v2829, %v2826
      %v2917 = vpack.c.b16 %v2830, %v2827
      %v2918 = vpack.c.b16 %v2831, %v2828
      %v2919 = vpack.c.b16 %v2835, %v2832
      %v2920 = vpack.c.b16 %v2836, %v2833
      %v2921 = vpack.c.b16 %v2837, %v2834
      %v2922 = vpack.c.b16 %v2841, %v2838
      %v2923 = vpack.c.b16 %v2842, %v2839
      %v2924 = vpack.c.b16 %v2843, %v2840
      %v2925 = vpack.c.b16 %v2847, %v2844
      %v2926 = vpack.c.b16 %v2848, %v2845
      %v2927 = vpack.c.b16 %v2849, %v2846
      %v2928 = vpack.c.b16 %v2853, %v2850
      %v2929 = vpack.c.b16 %v2854, %v2851
      %v2930 = vpack.c.b16 %v2855, %v2852
      %v2931 = vpack.c.b16 %v2859, %v2856
      %v2932 = vpack.c.b16 %v2860, %v2857
      %v2933 = vpack.c.b16 %v2861, %v2858
      %3006 = vmatprep.subr.bf16.mxu0 %v2863
      %3007 = vmatpush1.bf16.msra.mxu0 %v2862
      %3008 = vmatprep.subr.bf16.mxu0 %v2866
      %3009 = vmatpush1.bf16.msra.mxu0 %v2865
      %3010 = vmatprep.subr.bf16.mxu0 %v2869
      %3011 = vmatpush1.bf16.msra.mxu0 %v2868
      %3012 = vmatprep.subr.bf16.mxu0 %v2872
      %3013 = vmatpush1.bf16.msra.mxu0 %v2871
      %3014 = vmatprep.subr.bf16.mxu0 %v2875
      %3015 = vmatpush1.bf16.msra.mxu0 %v2874
      %3016 = vmatprep.subr.bf16.mxu0 %v2878
      %3017 = vmatpush1.bf16.msra.mxu0 %v2877
      %3018 = vmatprep.subr.bf16.mxu0 %v2881
      %3019 = vmatpush1.bf16.msra.mxu0 %v2880
      %3020 = vmatprep.subr.bf16.mxu0 %v2884
      %3021 = vmatpush1.bf16.msra.mxu0 %v2883
      %3022 = vmatprep.subr.bf16.mxu0 %v2887
      %3023 = vmatpush1.bf16.msra.mxu0 %v2886
      %3024 = vmatprep.subr.bf16.mxu0 %v2890
      %3025 = vmatpush1.bf16.msra.mxu0 %v2889
      %3026 = vmatprep.subr.bf16.mxu0 %v2893
      %3027 = vmatpush1.bf16.msra.mxu0 %v2892
      %3028 = vmatprep.subr.bf16.mxu0 %v2896
      %3029 = vmatpush1.bf16.msra.mxu0 %v2895
      %3030 = vmatprep.subr.bf16.mxu0 %v2899
      %3031 = vmatpush1.bf16.msra.mxu0 %v2898
      %3032 = vmatprep.subr.bf16.mxu0 %v2902
      %3033 = vmatpush1.bf16.msra.mxu0 %v2901
      %3034 = vmatprep.subr.bf16.mxu0 %v2905
      %3035 = vmatpush1.bf16.msra.mxu0 %v2904
      %3036 = vmatprep.subr.bf16.mxu0 %v2908
      %3037 = vmatpush1.bf16.msra.mxu0 %v2907
      %3038 = vmatprep.mubr.bf16.mxu0 %v2488
      %3039 = vmatmul.mubr.bf16.gmra.mrb[0].mxu0 %v2474
      %v3040 = vpop.f32.mrb[0].mxu0
      %v3041 = vadd.f32 %v2610, %v3040
      %v3042 = vpop.f32.mrb[0].mxu0
      %v3043 = vadd.f32 %v2614, %v3042
      %v3044 = vpop.f32.mrb[0].mxu0
      %v3045 = vadd.f32 %v2610, %v3044
      %v3046 = vpop.f32.mrb[0].mxu0
      %v3047 = vadd.f32 %v2614, %v3046
      %3048 = vmatprep.mubr.bf16.mxu0 %v2496
      %3049 = vmatmul.mubr.bf16.gmra.mrb[0].mxu0 %v2475
      %v3050 = vpop.f32.mrb[0].mxu0
      %v3051 = vadd.f32 %v2610, %v3050
      %v3052 = vpop.f32.mrb[0].mxu0
      %v3053 = vadd.f32 %v2614, %v3052
      %v3054 = vpop.f32.mrb[0].mxu0
      %v3055 = vadd.f32 %v2610, %v3054
      %v3056 = vpop.f32.mrb[0].mxu0
      %v3057 = vadd.f32 %v2614, %v3056
      %3058 = vdwg.mxu0
      %3059 = vmatprep.subr.bf16.mxu0 %v2911
      %3060 = vmatpush1.bf16.msra.mxu0 %v2910
      %3061 = vmatprep.subr.bf16.mxu0 %v2914
      %3062 = vmatpush1.bf16.msra.mxu0 %v2913
      %3063 = vmatprep.subr.bf16.mxu0 %v2917
      %3064 = vmatpush1.bf16.msra.mxu0 %v2916
      %3065 = vmatprep.subr.bf16.mxu0 %v2920
      %3066 = vmatpush1.bf16.msra.mxu0 %v2919
      %3067 = vmatprep.subr.bf16.mxu0 %v2923
      %3068 = vmatpush1.bf16.msra.mxu0 %v2922
      %3069 = vmatprep.subr.bf16.mxu0 %v2926
      %3070 = vmatpush1.bf16.msra.mxu0 %v2925
      %3071 = vmatprep.subr.bf16.mxu0 %v2929
      %3072 = vmatpush1.bf16.msra.mxu0 %v2928
      %3073 = vmatprep.subr.bf16.mxu0 %v2932
      %3074 = vmatpush1.bf16.msra.mxu0 %v2931
      %3075 = vmatprep.subr.bf16.mxu0 0
      %3076 = vmatpush1.bf16.msra.mxu0 0
      %3077 = vmatprep.subr.bf16.mxu0 0
      %3078 = vmatpush1.bf16.msra.mxu0 0
      %3079 = vmatprep.subr.bf16.mxu0 0
      %3080 = vmatpush1.bf16.msra.mxu0 0
      %3081 = vmatprep.subr.bf16.mxu0 0
      %3082 = vmatpush1.bf16.msra.mxu0 0
      %3083 = vmatprep.subr.bf16.mxu0 0
      %3084 = vmatpush1.bf16.msra.mxu0 0
      %3085 = vmatprep.subr.bf16.mxu0 0
      %3086 = vmatpush1.bf16.msra.mxu0 0
      %3087 = vmatprep.subr.bf16.mxu0 0
      %3088 = vmatpush1.bf16.msra.mxu0 0
      %3089 = vmatprep.subr.bf16.mxu0 0
      %3090 = vmatpush1.bf16.msra.mxu0 0
      %3091 = vmatprep.mubr.bf16.mxu0 0
      %3092 = vmatmul.mubr.bf16.gmra.mrb[0].mxu0 %v2504
      %v3093 = vpop.f32.mrb[0].mxu0
      %v3094 = vadd.f32 %v3041, %v3093
      %v3095 = vpop.f32.mrb[0].mxu0
      %v3096 = vadd.f32 %v3043, %v3095
      %v3097 = vpop.f32.mrb[0].mxu0
      %v3098 = vadd.f32 %v3045, %v3097
      %v3099 = vpop.f32.mrb[0].mxu0
      %v3100 = vadd.f32 %v3047, %v3099
      %3101 = vmatprep.mubr.bf16.mxu0 0
      %3102 = vmatmul.mubr.bf16.gmra.mrb[0].mxu0 %v2506
      %v3103 = vpop.f32.mrb[0].mxu0
      %v3104 = vadd.f32 %v3051, %v3103
      %v3105 = vpop.f32.mrb[0].mxu0
      %v3106 = vadd.f32 %v3053, %v3105
      %v3107 = vpop.f32.mrb[0].mxu0
      %v3108 = vadd.f32 %v3055, %v3107
      %v3109 = vpop.f32.mrb[0].mxu0
      %v3110 = vadd.f32 %v3057, %v3109
      %3111 = vdwg.mxu0
      %3112 = vmatprep.subr.bf16.mxu0 0
      %3113 = vmatpush1.bf16.msra.mxu0 %v2864
      %3114 = vmatprep.subr.bf16.mxu0 0
      %3115 = vmatpush1.bf16.msra.mxu0 %v2867
      %3116 = vmatprep.subr.bf16.mxu0 0
      %3117 = vmatpush1.bf16.msra.mxu0 %v2870
      %3118 = vmatprep.subr.bf16.mxu0 0
      %3119 = vmatpush1.bf16.msra.mxu0 %v2873
      %3120 = vmatprep.subr.bf16.mxu0 0
      %3121 = vmatpush1.bf16.msra.mxu0 %v2876
      %3122 = vmatprep.subr.bf16.mxu0 0
      %3123 = vmatpush1.bf16.msra.mxu0 %v2879
      %3124 = vmatprep.subr.bf16.mxu0 0
      %3125 = vmatpush1.bf16.msra.mxu0 %v2882
      %3126 = vmatprep.subr.bf16.mxu0 0
      %3127 = vmatpush1.bf16.msra.mxu0 %v2885
      %3128 = vmatprep.subr.bf16.mxu0 0
      %3129 = vmatpush1.bf16.msra.mxu0 %v2888
      %3130 = vmatprep.subr.bf16.mxu0 0
      %3131 = vmatpush1.bf16.msra.mxu0 %v2891
      %3132 = vmatprep.subr.bf16.mxu0 0
      %3133 = vmatpush1.bf16.msra.mxu0 %v2894
      %3134 = vmatprep.subr.bf16.mxu0 0
      %3135 = vmatpush1.bf16.msra.mxu0 %v2897
      %3136 = vmatprep.subr.bf16.mxu0 0
      %3137 = vmatpush1.bf16.msra.mxu0 %v2900
      %3138 = vmatprep.subr.bf16.mxu0 0
      %3139 = vmatpush1.bf16.msra.mxu0 %v2903
      %3140 = vmatprep.subr.bf16.mxu0 0
      %3141 = vmatpush1.bf16.msra.mxu0 %v2906
      %3142 = vmatprep.subr.bf16.mxu0 0
      %3143 = vmatpush1.bf16.msra.mxu0 %v2909
      %3144 = vmatprep.mubr.bf16.mxu0 %v2488
      %3145 = vmatmul.mubr.bf16.gmra.mrb[0].mxu0 %v2474
      %v3146 = vpop.f32.mrb[0].mxu0
      %v3147 = vadd.f32 %v2618, %v3146
      %v3148 = vpop.f32.mrb[0].mxu0
      %v3149 = vpop.f32.mrb[0].mxu0
      %v3150 = vadd.f32 %v2618, %v3149
      %v3151 = vpop.f32.mrb[0].mxu0
      %3152 = vmatprep.mubr.bf16.mxu0 %v2496
      %3153 = vmatmul.mubr.bf16.gmra.mrb[0].mxu0 %v2475
      %v3154 = vpop.f32.mrb[0].mxu0
      %v3155 = vadd.f32 %v2618, %v3154
      %v3156 = vpop.f32.mrb[0].mxu0
      %v3157 = vpop.f32.mrb[0].mxu0
      %v3158 = vadd.f32 %v2618, %v3157
      %v3159 = vpop.f32.mrb[0].mxu0
      %3160 = vdwg.mxu0
      %3161 = vmatprep.subr.bf16.mxu0 0
      %3162 = vmatpush1.bf16.msra.mxu0 %v2912
      %3163 = vmatprep.subr.bf16.mxu0 0
      %3164 = vmatpush1.bf16.msra.mxu0 %v2915
      %3165 = vmatprep.subr.bf16.mxu0 0
      %3166 = vmatpush1.bf16.msra.mxu0 %v2918
      %3167 = vmatprep.subr.bf16.mxu0 0
      %3168 = vmatpush1.bf16.msra.mxu0 %v2921
      %3169 = vmatprep.subr.bf16.mxu0 0
      %3170 = vmatpush1.bf16.msra.mxu0 %v2924
      %3171 = vmatprep.subr.bf16.mxu0 0
      %3172 = vmatpush1.bf16.msra.mxu0 %v2927
      %3173 = vmatprep.subr.bf16.mxu0 0
      %3174 = vmatpush1.bf16.msra.mxu0 %v2930
      %3175 = vmatprep.subr.bf16.mxu0 0
      %3176 = vmatpush1.bf16.msra.mxu0 %v2933
      %3177 = vmatprep.subr.bf16.mxu0 0
      %3178 = vmatpush1.bf16.msra.mxu0 0
      %3179 = vmatprep.subr.bf16.mxu0 0
      %3180 = vmatpush1.bf16.msra.mxu0 0
      %3181 = vmatprep.subr.bf16.mxu0 0
      %3182 = vmatpush1.bf16.msra.mxu0 0
      %3183 = vmatprep.subr.bf16.mxu0 0
      %3184 = vmatpush1.bf16.msra.mxu0 0
      %3185 = vmatprep.subr.bf16.mxu0 0
      %3186 = vmatpush1.bf16.msra.mxu0 0
      %3187 = vmatprep.subr.bf16.mxu0 0
      %3188 = vmatpush1.bf16.msra.mxu0 0
      %3189 = vmatprep.subr.bf16.mxu0 0
      %3190 = vmatpush1.bf16.msra.mxu0 0
      %3191 = vmatprep.subr.bf16.mxu0 0
      %3192 = vmatpush1.bf16.msra.mxu0 0
      %3193 = vmatprep.mubr.bf16.mxu0 0
      %3194 = vmatmul.mubr.bf16.gmra.mrb[0].mxu0 %v2504
      %v3195 = vpop.f32.mrb[0].mxu0
      %v3196 = vadd.f32 %v3147, %v3195
      %v3197 = vpop.f32.mrb[0].mxu0
      %v3198 = vpop.f32.mrb[0].mxu0
      %v3199 = vadd.f32 %v3150, %v3198
      %v3200 = vpop.f32.mrb[0].mxu0
      %3201 = vmatprep.mubr.bf16.mxu0 0
      %3202 = vmatmul.mubr.bf16.gmra.mrb[0].mxu0 %v2506
      %v3203 = vpop.f32.mrb[0].mxu0
      %v3204 = vadd.f32 %v3155, %v3203
      %v3205 = vpop.f32.mrb[0].mxu0
      %v3206 = vpop.f32.mrb[0].mxu0
      %v3207 = vadd.f32 %v3158, %v3206
      %v3208 = vpop.f32.mrb[0].mxu0
      %3209 = vdwg.mxu0
      %s3210 = scalar_lea.vmem %s11, 1
      %v3211 = vld [vmem:[%s3210] ss:$2 sm:$0x7]
      %vm3212 = vcmp.ge.f32.partialorder %v3094, 0.0
      %vm3213 = vcmp.ge.f32.partialorder %v3096, 0.0
      %vm3214 = vcmp.ge.f32.partialorder %v3196, 0.0
      %vm3215 = vcmp.ge.f32.partialorder %v3098, 0.0
      %vm3216 = vcmp.ge.f32.partialorder %v3100, 0.0
      %vm3217 = vcmp.ge.f32.partialorder %v3199, 0.0
      %vm3218 = vcmp.ge.f32.partialorder %v3104, 0.0
      %vm3219 = vcmp.ge.f32.partialorder %v3106, 0.0
      %vm3220 = vcmp.ge.f32.partialorder %v3204, 0.0
      %vm3221 = vcmp.ge.f32.partialorder %v3108, 0.0
      %vm3222 = vcmp.ge.f32.partialorder %v3110, 0.0
      %vm3223 = vcmp.ge.f32.partialorder %v3207, 0.0
      %v3225 = vlaneseq
      %v3226 = vshrl.u32 %v3225, 7
      %v3227 = vsub.s32 0, %v3226
      %v3228 = vrot.slane %v3211, %v3227
      %v3229 = vlaneseq
      %v3230 = vshrl.u32 %v3229, 7
      %v3231 = vsub.s32 1, %v3230
      %v3232 = vrot.slane %v3211, %v3231
      %v3233 = vlaneseq
      %v3234 = vshrl.u32 %v3233, 7
      %v3235 = vsub.s32 2, %v3234
      %v3236 = vrot.slane %v3211, %v3235
      %v3240 = vmul.f32 %v3228, %v3094
      %v3241 = vmul.f32 %v3232, %v3096
      %v3242 = vmul.f32 %v3236, %v3196
      %v3243 = vmul.f32 %v3228, %v3098
      %v3244 = vmul.f32 %v3232, %v3100
      %v3245 = vmul.f32 %v3236, %v3199
      %v3246 = vmul.f32 %v3228, %v3104
      %v3247 = vmul.f32 %v3232, %v3106
      %v3248 = vmul.f32 %v3236, %v3204
      %v3249 = vmul.f32 %v3228, %v3108
      %v3250 = vmul.f32 %v3232, %v3110
      %v3251 = vmul.f32 %v3236, %v3207
      %v3252 = vsel %vm3212, %v3094, %v3240
      %v3253 = vsel %vm3213, %v3096, %v3241
      %v3254 = vsel %vm3214, %v3196, %v3242
      %v3255 = vsel %vm3215, %v3098, %v3243
      %v3256 = vsel %vm3216, %v3100, %v3244
      %v3257 = vsel %vm3217, %v3199, %v3245
      %v3258 = vsel %vm3218, %v3104, %v3246
      %v3259 = vsel %vm3219, %v3106, %v3247
      %v3260 = vsel %vm3220, %v3204, %v3248
      %v3261 = vsel %vm3221, %v3108, %v3249
      %v3262 = vsel %vm3222, %v3110, %v3250
      %v3263 = vsel %vm3223, %v3207, %v3251
      %vm3276 = vcmask 1040384
      %v3277 = vrot.slane %v3252, 7
      %v3278 = vrot.slane %v3253, 7
      %v3279 = vrot.slane %v3254, 7
      %v3280 = vrot.slane %v3255, 7
      %v3281 = vsel %vm3276, %v3277, %v3280
      %v3282 = vrot.slane %v3256, 7
      %v3283 = vsel %vm3276, %v3278, %v3282
      %v3284 = vrot.slane %v3257, 7
      %v3285 = vsel %vm3276, %v3279, %v3284
      %v3286 = vrot.slane %v3258, 7
      %v3287 = vsel %vm3276, %v3280, %v3286
      %v3288 = vrot.slane %v3259, 7
      %v3289 = vsel %vm3276, %v3282, %v3288
      %v3290 = vrot.slane %v3260, 7
      %v3291 = vsel %vm3276, %v3284, %v3290
      %v3292 = vrot.slane %v3261, 7
      %v3293 = vsel %vm3276, %v3286, %v3292
      %v3294 = vrot.slane %v3262, 7
      %v3295 = vsel %vm3276, %v3288, %v3294
      %v3296 = vrot.slane %v3263, 7
      %v3297 = vsel %vm3276, %v3290, %v3296
      %3313 = vst [vmem:[#allocation7] sm:$0xfe] %v3277
      %3314 = vst [vmem:[#allocation7 + $0x8] sm:$0xfe] %v3278
      %3315 = vst [vmem:[#allocation7 + $0x10] sm:$0xfe] %v3279
      %3316 = vst [vmem:[#allocation7 + $0x18] sm:$0xff] %v3281
      %3317 = vst [vmem:[#allocation7 + $0x20] sm:$0xff] %v3283
      %3318 = vst [vmem:[#allocation7 + $0x28] sm:$0xff] %v3285
      %3319 = vst [vmem:[#allocation7 + $0x30] sm:$0xff] %v3287
      %3320 = vst [vmem:[#allocation7 + $0x38] sm:$0xff] %v3289
      %3321 = vst [vmem:[#allocation7 + $0x40] sm:$0xff] %v3291
      %3322 = vst [vmem:[#allocation7 + $0x48] sm:$0xff] %v3293
      %3323 = vst [vmem:[#allocation7 + $0x50] sm:$0xff] %v3295
      %3324 = vst [vmem:[#allocation7 + $0x58] sm:$0xff] %v3297
      %3325 = vst [vmem:[#allocation7 + $0x60] sm:$0x1] %v3292
      %3326 = vst [vmem:[#allocation7 + $0x68] sm:$0x1] %v3294
      %3327 = vst [vmem:[#allocation7 + $0x70] sm:$0x1] %v3296
      %v3328 = vld [vmem:[#allocation7] sm:$0xff]
      %v3329 = vld [vmem:[#allocation7 + $0x8] sm:$0xff]
      %v3330 = vld [vmem:[#allocation7 + $0x10] sm:$0xff]
      %v3331 = vld [vmem:[#allocation7 + $0x18] sm:$0xff]
      %v3332 = vld [vmem:[#allocation7 + $0x20] sm:$0xff]
      %v3333 = vld [vmem:[#allocation7 + $0x28] sm:$0xff]
      %v3334 = vld [vmem:[#allocation7 + $0x30] sm:$0xff]
      %v3335 = vld [vmem:[#allocation7 + $0x38] sm:$0xff]
      %v3336 = vld [vmem:[#allocation7 + $0x40] sm:$0xff]
      %v3337 = vld [vmem:[#allocation7 + $0x48] sm:$0xff]
      %v3338 = vld [vmem:[#allocation7 + $0x50] sm:$0xff]
      %v3339 = vld [vmem:[#allocation7 + $0x58] sm:$0xff]
      %v3340 = vld [vmem:[#allocation7 + $0x60] sm:$0x3]
      %v3341 = vld [vmem:[#allocation7 + $0x68] sm:$0x3]
      %v3342 = vld [vmem:[#allocation7 + $0x70] sm:$0x3]
      %v3343 = vpack.c.bf16 %v3331, %v3328
      %v3344 = vpack.c.bf16 %v3332, %v3329
      %v3345 = vpack.c.bf16 %v3333, %v3330
      %v3346 = vpack.c.bf16 %v3337, %v3334
      %v3347 = vpack.c.bf16 %v3338, %v3335
      %v3348 = vpack.c.bf16 %v3339, %v3336
      %v3349 = vpack.c.bf16 %v3340, %v3340
      %v3350 = vpack.c.bf16 %v3341, %v3341
      %v3351 = vpack.c.bf16 %v3342, %v3342
      %v3353 = vshrl.u32 %v3343, 16
      %v3355 = vshll.u32 %v3343, 16
      %v3357 = vrot.slane %v3355, 1
      %v3358 = vor.u32 %v3353, %v3357
      %v3360 = vshll.u32 %v3346, 16
      %v3362 = vrot.slane %v3360, 1
      %v3363 = vsel %vm511, %v3358, %v3362
      %v3365 = vshrl.u32 %v3344, 16
      %v3367 = vshll.u32 %v3344, 16
      %v3369 = vrot.slane %v3367, 1
      %v3370 = vor.u32 %v3365, %v3369
      %v3372 = vshll.u32 %v3347, 16
      %v3374 = vrot.slane %v3372, 1
      %v3375 = vsel %vm511, %v3370, %v3374
      %v3377 = vshrl.u32 %v3345, 16
      %v3379 = vshll.u32 %v3345, 16
      %v3381 = vrot.slane %v3379, 1
      %v3382 = vor.u32 %v3377, %v3381
      %v3384 = vshll.u32 %v3348, 16
      %v3386 = vrot.slane %v3384, 1
      %v3387 = vsel %vm511, %v3382, %v3386
      %v3388 = vshrl.u32 %v3346, 16
      %v3390 = vor.u32 %v3388, %v3362
      %v3392 = vshll.u32 %v3349, 16
      %v3394 = vrot.slane %v3392, 1
      %v3395 = vsel %vm511, %v3390, %v3394
      %v3396 = vshrl.u32 %v3347, 16
      %v3398 = vor.u32 %v3396, %v3374
      %v3400 = vshll.u32 %v3350, 16
      %v3402 = vrot.slane %v3400, 1
      %v3403 = vsel %vm511, %v3398, %v3402
      %v3404 = vshrl.u32 %v3348, 16
      %v3406 = vor.u32 %v3404, %v3386
      %v3408 = vshll.u32 %v3351, 16
      %v3410 = vrot.slane %v3408, 1
      %v3411 = vsel %vm511, %v3406, %v3410
      %v3427 = vrot.slane %v3343, 1
      %v3428 = vrot.slane %v3346, 1
      %v3429 = vsel %vm539, %v3427, %v3428
      %v3430 = vrot.slane %v3344, 1
      %v3431 = vrot.slane %v3347, 1
      %v3432 = vsel %vm539, %v3430, %v3431
      %v3433 = vrot.slane %v3345, 1
      %v3434 = vrot.slane %v3348, 1
      %v3435 = vsel %vm539, %v3433, %v3434
      %v3436 = vrot.slane %v3349, 1
      %v3437 = vsel %vm539, %v3428, %v3436
      %v3438 = vrot.slane %v3350, 1
      %v3439 = vsel %vm539, %v3431, %v3438
      %v3440 = vrot.slane %v3351, 1
      %v3441 = vsel %vm539, %v3434, %v3440
      %v3448 = vld [vmem:[%s12] sm:$0xf]
      %v3449 = vld [vmem:[%s12 + $0x4] sm:$0xf]
      %v3450 = vld [vmem:[%s12 + $0x8] sm:$0xf]
      %v3451 = vld [vmem:[%s12 + $0xc] sm:$0xf]
      %v3452 = vld [vmem:[%s12 + $0x10] sm:$0xf]
      %v3453 = vld [vmem:[%s12 + $0x14] sm:$0xf]
      %v3454 = vld [vmem:[%s12 + $0x18] sm:$0xf]
      %v3455 = vld [vmem:[%s12 + $0x1c] sm:$0xf]
      %v3456 = vld [vmem:[%s12 + $0x20] sm:$0xf]
      %v3457 = vld [vmem:[%s12 + $0x24] sm:$0xf]
      %v3458 = vld [vmem:[%s12 + $0x28] sm:$0xf]
      %v3459 = vld [vmem:[%s12 + $0x2c] sm:$0xf]
      %v3460 = vld [vmem:[%s12 + $0x30] sm:$0xf]
      %v3461 = vld [vmem:[%s12 + $0x34] sm:$0xf]
      %v3462 = vld [vmem:[%s12 + $0x38] sm:$0xf]
      %v3463 = vld [vmem:[%s12 + $0x3c] sm:$0xf]
      %v3464 = vld [vmem:[%s12 + $0x40] sm:$0xf]
      %v3465 = vld [vmem:[%s12 + $0x44] sm:$0xf]
      %v3466 = vld [vmem:[%s12 + $0x48] sm:$0xf]
      %v3467 = vld [vmem:[%s12 + $0x4c] sm:$0xf]
      %v3468 = vld [vmem:[%s12 + $0x50] sm:$0xf]
      %v3469 = vld [vmem:[%s12 + $0x54] sm:$0xf]
      %v3470 = vld [vmem:[%s12 + $0x58] sm:$0xf]
      %v3471 = vld [vmem:[%s12 + $0x5c] sm:$0xf]
      %v3472 = vld [vmem:[%s12 + $0x60] sm:$0xf]
      %v3473 = vld [vmem:[%s12 + $0x64] sm:$0xf]
      %v3474 = vld [vmem:[%s12 + $0x68] sm:$0xf]
      %v3475 = vld [vmem:[%s12 + $0x6c] sm:$0xf]
      %v3476 = vld [vmem:[%s12 + $0x70] sm:$0xf]
      %v3477 = vld [vmem:[%s12 + $0x74] sm:$0xf]
      %v3478 = vld [vmem:[%s12 + $0x78] sm:$0xf]
      %v3479 = vld [vmem:[%s12 + $0x7c] sm:$0xf]
      %v3480 = vld [vmem:[%s12 + $0x80] sm:$0xf]
      %v3481 = vld [vmem:[%s12 + $0x84] sm:$0xf]
      %v3482 = vld [vmem:[%s12 + $0x88] sm:$0xf]
      %v3483 = vld [vmem:[%s12 + $0x8c] sm:$0xf]
      %v3484 = vld [vmem:[%s12 + $0x90] sm:$0xf]
      %v3485 = vld [vmem:[%s12 + $0x94] sm:$0xf]
      %v3486 = vld [vmem:[%s12 + $0x98] sm:$0xf]
      %v3487 = vld [vmem:[%s12 + $0x9c] sm:$0xf]
      %v3488 = vld [vmem:[%s12 + $0xa0] sm:$0xf]
      %v3489 = vld [vmem:[%s12 + $0xa4] sm:$0xf]
      %v3490 = vld [vmem:[%s12 + $0xa8] sm:$0xf]
      %v3491 = vld [vmem:[%s12 + $0xac] sm:$0xf]
      %v3492 = vld [vmem:[%s12 + $0xb0] sm:$0xf]
      %v3493 = vld [vmem:[%s12 + $0xb4] sm:$0xf]
      %v3494 = vld [vmem:[%s12 + $0xb8] sm:$0xf]
      %v3495 = vld [vmem:[%s12 + $0xbc] sm:$0xf]
      %v3496 = vld [vmem:[%s12 + $0xc0] sm:$0xf]
      %v3497 = vld [vmem:[%s12 + $0xc4] sm:$0xf]
      %v3498 = vld [vmem:[%s12 + $0xc8] sm:$0xf]
      %v3499 = vld [vmem:[%s12 + $0xcc] sm:$0xf]
      %v3500 = vld [vmem:[%s12 + $0xd0] sm:$0xf]
      %v3501 = vld [vmem:[%s12 + $0xd4] sm:$0xf]
      %v3502 = vld [vmem:[%s12 + $0xd8] sm:$0xf]
      %v3503 = vld [vmem:[%s12 + $0xdc] sm:$0xf]
      %v3504 = vld [vmem:[%s12 + $0xe0] sm:$0xf]
      %v3505 = vld [vmem:[%s12 + $0xe4] sm:$0xf]
      %v3506 = vld [vmem:[%s12 + $0xe8] sm:$0xf]
      %v3507 = vld [vmem:[%s12 + $0xec] sm:$0xf]
      %v3508 = vld [vmem:[%s12 + $0xf0] sm:$0xf]
      %v3509 = vld [vmem:[%s12 + $0xf4] sm:$0xf]
      %v3510 = vld [vmem:[%s12 + $0xf8] sm:$0xf]
      %v3511 = vld [vmem:[%s12 + $0xfc] sm:$0xf]
      %v3512 = vld [vmem:[%s12 + $0x100] sm:$0xf]
      %v3513 = vld [vmem:[%s12 + $0x104] sm:$0xf]
      %v3514 = vld [vmem:[%s12 + $0x108] sm:$0xf]
      %v3515 = vld [vmem:[%s12 + $0x10c] sm:$0xf]
      %v3516 = vld [vmem:[%s12 + $0x110] sm:$0xf]
      %v3517 = vld [vmem:[%s12 + $0x114] sm:$0xf]
      %v3518 = vld [vmem:[%s12 + $0x118] sm:$0xf]
      %v3519 = vld [vmem:[%s12 + $0x11c] sm:$0xf]
      %v3520 = vld [vmem:[%s12 + $0x120] sm:$0xf]
      %v3521 = vld [vmem:[%s12 + $0x124] sm:$0xf]
      %v3522 = vld [vmem:[%s12 + $0x128] sm:$0xf]
      %v3523 = vld [vmem:[%s12 + $0x12c] sm:$0xf]
      %v3524 = vld [vmem:[%s12 + $0x130] sm:$0xf]
      %v3525 = vld [vmem:[%s12 + $0x134] sm:$0xf]
      %v3526 = vld [vmem:[%s12 + $0x138] sm:$0xf]
      %v3527 = vld [vmem:[%s12 + $0x13c] sm:$0xf]
      %v3528 = vld [vmem:[%s12 + $0x140] sm:$0xf]
      %v3529 = vld [vmem:[%s12 + $0x144] sm:$0xf]
      %v3530 = vld [vmem:[%s12 + $0x148] sm:$0xf]
      %v3531 = vld [vmem:[%s12 + $0x14c] sm:$0xf]
      %v3532 = vld [vmem:[%s12 + $0x150] sm:$0xf]
      %v3533 = vld [vmem:[%s12 + $0x154] sm:$0xf]
      %v3534 = vld [vmem:[%s12 + $0x158] sm:$0xf]
      %v3535 = vld [vmem:[%s12 + $0x15c] sm:$0xf]
      %v3536 = vld [vmem:[%s12 + $0x160] sm:$0xf]
      %v3537 = vld [vmem:[%s12 + $0x164] sm:$0xf]
      %v3538 = vld [vmem:[%s12 + $0x168] sm:$0xf]
      %v3539 = vld [vmem:[%s12 + $0x16c] sm:$0xf]
      %v3540 = vld [vmem:[%s12 + $0x170] sm:$0xf]
      %v3541 = vld [vmem:[%s12 + $0x174] sm:$0xf]
      %v3542 = vld [vmem:[%s12 + $0x178] sm:$0xf]
      %v3543 = vld [vmem:[%s12 + $0x17c] sm:$0xf]
      %v3544 = vld [vmem:[%s12 + $0x180] sm:$0xf]
      %v3545 = vld [vmem:[%s12 + $0x184] sm:$0xf]
      %v3546 = vld [vmem:[%s12 + $0x188] sm:$0xf]
      %v3547 = vld [vmem:[%s12 + $0x18c] sm:$0xf]
      %v3548 = vld [vmem:[%s12 + $0x190] sm:$0xf]
      %v3549 = vld [vmem:[%s12 + $0x194] sm:$0xf]
      %v3550 = vld [vmem:[%s12 + $0x198] sm:$0xf]
      %v3551 = vld [vmem:[%s12 + $0x19c] sm:$0xf]
      %v3552 = vld [vmem:[%s12 + $0x1a0] sm:$0xf]
      %v3553 = vld [vmem:[%s12 + $0x1a4] sm:$0xf]
      %v3554 = vld [vmem:[%s12 + $0x1a8] sm:$0xf]
      %v3555 = vld [vmem:[%s12 + $0x1ac] sm:$0xf]
      %v3556 = vld [vmem:[%s12 + $0x1b0] sm:$0xf]
      %v3557 = vld [vmem:[%s12 + $0x1b4] sm:$0xf]
      %v3558 = vld [vmem:[%s12 + $0x1b8] sm:$0xf]
      %v3559 = vld [vmem:[%s12 + $0x1bc] sm:$0xf]
      %v3560 = vld [vmem:[%s12 + $0x1c0] sm:$0xf]
      %v3561 = vld [vmem:[%s12 + $0x1c4] sm:$0xf]
      %v3562 = vld [vmem:[%s12 + $0x1c8] sm:$0xf]
      %v3563 = vld [vmem:[%s12 + $0x1cc] sm:$0xf]
      %v3564 = vld [vmem:[%s12 + $0x1d0] sm:$0xf]
      %v3565 = vld [vmem:[%s12 + $0x1d4] sm:$0xf]
      %v3566 = vld [vmem:[%s12 + $0x1d8] sm:$0xf]
      %v3567 = vld [vmem:[%s12 + $0x1dc] sm:$0xf]
      %v3568 = vld [vmem:[%s12 + $0x1e0] sm:$0xf]
      %v3569 = vld [vmem:[%s12 + $0x1e4] sm:$0xf]
      %v3570 = vld [vmem:[%s12 + $0x1e8] sm:$0xf]
      %v3571 = vld [vmem:[%s12 + $0x1ec] sm:$0xf]
      %v3572 = vld [vmem:[%s12 + $0x1f0] sm:$0xf]
      %v3573 = vld [vmem:[%s12 + $0x1f4] sm:$0xf]
      %v3574 = vld [vmem:[%s12 + $0x1f8] sm:$0xf]
      %v3575 = vld [vmem:[%s12 + $0x1fc] sm:$0xf]
      %v3576 = vld [vmem:[%s12 + $0x200] sm:$0xf]
      %v3577 = vld [vmem:[%s12 + $0x204] sm:$0xf]
      %v3578 = vld [vmem:[%s12 + $0x208] sm:$0xf]
      %v3579 = vld [vmem:[%s12 + $0x20c] sm:$0xf]
      %v3580 = vld [vmem:[%s12 + $0x210] sm:$0xf]
      %v3581 = vld [vmem:[%s12 + $0x214] sm:$0xf]
      %v3582 = vld [vmem:[%s12 + $0x218] sm:$0xf]
      %v3583 = vld [vmem:[%s12 + $0x21c] sm:$0xf]
      %v3584 = vld [vmem:[%s12 + $0x220] sm:$0xf]
      %v3585 = vld [vmem:[%s12 + $0x224] sm:$0xf]
      %v3586 = vld [vmem:[%s12 + $0x228] sm:$0xf]
      %v3587 = vld [vmem:[%s12 + $0x22c] sm:$0xf]
      %v3588 = vld [vmem:[%s12 + $0x230] sm:$0xf]
      %v3589 = vld [vmem:[%s12 + $0x234] sm:$0xf]
      %v3590 = vld [vmem:[%s12 + $0x238] sm:$0xf]
      %v3591 = vld [vmem:[%s12 + $0x23c] sm:$0xf]
      %v3592 = vld [vmem:[%s13] sm:$0x1]
      %v3594 = vlaneseq
      %v3595 = vshrl.u32 %v3594, 7
      %v3596 = vsub.s32 0, %v3595
      %v3597 = vrot.slane %v3592, %v3596
      %v3743 = vunpack.c.l.b16 %v3448
      %v3744 = vunpack.c.l.b16 %v3449
      %v3745 = vunpack.c.l.b16 %v3450
      %v3746 = vunpack.c.l.b16 %v3451
      %v3747 = vunpack.c.l.b16 %v3452
      %v3748 = vunpack.c.l.b16 %v3453
      %v3749 = vunpack.c.l.b16 %v3454
      %v3750 = vunpack.c.l.b16 %v3455
      %v3751 = vunpack.c.l.b16 %v3456
      %v3752 = vunpack.c.l.b16 %v3457
      %v3753 = vunpack.c.l.b16 %v3458
      %v3754 = vunpack.c.l.b16 %v3459
      %v3755 = vunpack.c.l.b16 %v3460
      %v3756 = vunpack.c.l.b16 %v3461
      %v3757 = vunpack.c.l.b16 %v3462
      %v3758 = vunpack.c.l.b16 %v3463
      %v3759 = vunpack.c.l.b16 %v3464
      %v3760 = vunpack.c.l.b16 %v3465
      %v3761 = vunpack.c.l.b16 %v3466
      %v3762 = vunpack.c.l.b16 %v3467
      %v3763 = vunpack.c.l.b16 %v3468
      %v3764 = vunpack.c.l.b16 %v3469
      %v3765 = vunpack.c.l.b16 %v3470
      %v3766 = vunpack.c.l.b16 %v3471
      %v3767 = vunpack.c.l.b16 %v3472
      %v3768 = vunpack.c.l.b16 %v3473
      %v3769 = vunpack.c.l.b16 %v3474
      %v3770 = vunpack.c.l.b16 %v3475
      %v3771 = vunpack.c.l.b16 %v3476
      %v3772 = vunpack.c.l.b16 %v3477
      %v3773 = vunpack.c.l.b16 %v3478
      %v3774 = vunpack.c.l.b16 %v3479
      %v3775 = vunpack.c.l.b16 %v3480
      %v3776 = vunpack.c.l.b16 %v3481
      %v3777 = vunpack.c.l.b16 %v3482
      %v3778 = vunpack.c.l.b16 %v3483
      %v3779 = vunpack.c.l.b16 %v3484
      %v3780 = vunpack.c.l.b16 %v3485
      %v3781 = vunpack.c.l.b16 %v3486
      %v3782 = vunpack.c.l.b16 %v3487
      %v3783 = vunpack.c.l.b16 %v3488
      %v3784 = vunpack.c.l.b16 %v3489
      %v3785 = vunpack.c.l.b16 %v3490
      %v3786 = vunpack.c.l.b16 %v3491
      %v3787 = vunpack.c.l.b16 %v3492
      %v3788 = vunpack.c.l.b16 %v3493
      %v3789 = vunpack.c.l.b16 %v3494
      %v3790 = vunpack.c.l.b16 %v3495
      %v3791 = vunpack.c.l.b16 %v3496
      %v3792 = vunpack.c.l.b16 %v3497
      %v3793 = vunpack.c.l.b16 %v3498
      %v3794 = vunpack.c.l.b16 %v3499
      %v3795 = vunpack.c.l.b16 %v3500
      %v3796 = vunpack.c.l.b16 %v3501
      %v3797 = vunpack.c.l.b16 %v3502
      %v3798 = vunpack.c.l.b16 %v3503
      %v3799 = vunpack.c.l.b16 %v3504
      %v3800 = vunpack.c.l.b16 %v3505
      %v3801 = vunpack.c.l.b16 %v3506
      %v3802 = vunpack.c.l.b16 %v3507
      %v3803 = vunpack.c.l.b16 %v3508
      %v3804 = vunpack.c.l.b16 %v3509
      %v3805 = vunpack.c.l.b16 %v3510
      %v3806 = vunpack.c.l.b16 %v3511
      %v3807 = vunpack.c.l.b16 %v3512
      %v3808 = vunpack.c.l.b16 %v3513
      %v3809 = vunpack.c.l.b16 %v3514
      %v3810 = vunpack.c.l.b16 %v3515
      %v3811 = vunpack.c.l.b16 %v3516
      %v3812 = vunpack.c.l.b16 %v3517
      %v3813 = vunpack.c.l.b16 %v3518
      %v3814 = vunpack.c.l.b16 %v3519
      %v3815 = vunpack.c.l.b16 %v3520
      %v3816 = vunpack.c.l.b16 %v3521
      %v3817 = vunpack.c.l.b16 %v3522
      %v3818 = vunpack.c.l.b16 %v3523
      %v3819 = vunpack.c.l.b16 %v3524
      %v3820 = vunpack.c.l.b16 %v3525
      %v3821 = vunpack.c.l.b16 %v3526
      %v3822 = vunpack.c.l.b16 %v3527
      %v3823 = vunpack.c.l.b16 %v3528
      %v3824 = vunpack.c.l.b16 %v3529
      %v3825 = vunpack.c.l.b16 %v3530
      %v3826 = vunpack.c.l.b16 %v3531
      %v3827 = vunpack.c.l.b16 %v3532
      %v3828 = vunpack.c.l.b16 %v3533
      %v3829 = vunpack.c.l.b16 %v3534
      %v3830 = vunpack.c.l.b16 %v3535
      %v3831 = vunpack.c.l.b16 %v3536
      %v3832 = vunpack.c.l.b16 %v3537
      %v3833 = vunpack.c.l.b16 %v3538
      %v3834 = vunpack.c.l.b16 %v3539
      %v3835 = vunpack.c.l.b16 %v3540
      %v3836 = vunpack.c.l.b16 %v3541
      %v3837 = vunpack.c.l.b16 %v3542
      %v3838 = vunpack.c.l.b16 %v3543
      %v3839 = vunpack.c.l.b16 %v3544
      %v3840 = vunpack.c.l.b16 %v3545
      %v3841 = vunpack.c.l.b16 %v3546
      %v3842 = vunpack.c.l.b16 %v3547
      %v3843 = vunpack.c.l.b16 %v3548
      %v3844 = vunpack.c.l.b16 %v3549
      %v3845 = vunpack.c.l.b16 %v3550
      %v3846 = vunpack.c.l.b16 %v3551
      %v3847 = vunpack.c.l.b16 %v3552
      %v3848 = vunpack.c.l.b16 %v3553
      %v3849 = vunpack.c.l.b16 %v3554
      %v3850 = vunpack.c.l.b16 %v3555
      %v3851 = vunpack.c.l.b16 %v3556
      %v3852 = vunpack.c.l.b16 %v3557
      %v3853 = vunpack.c.l.b16 %v3558
      %v3854 = vunpack.c.l.b16 %v3559
      %v3855 = vunpack.c.l.b16 %v3560
      %v3856 = vunpack.c.l.b16 %v3561
      %v3857 = vunpack.c.l.b16 %v3562
      %v3858 = vunpack.c.l.b16 %v3563
      %v3859 = vunpack.c.l.b16 %v3564
      %v3860 = vunpack.c.l.b16 %v3565
      %v3861 = vunpack.c.l.b16 %v3566
      %v3862 = vunpack.c.l.b16 %v3567
      %v3863 = vunpack.c.l.b16 %v3568
      %v3864 = vunpack.c.l.b16 %v3569
      %v3865 = vunpack.c.l.b16 %v3570
      %v3866 = vunpack.c.l.b16 %v3571
      %v3867 = vunpack.c.l.b16 %v3572
      %v3868 = vunpack.c.l.b16 %v3573
      %v3869 = vunpack.c.l.b16 %v3574
      %v3870 = vunpack.c.l.b16 %v3575
      %v3871 = vunpack.c.l.b16 %v3576
      %v3872 = vunpack.c.l.b16 %v3577
      %v3873 = vunpack.c.l.b16 %v3578
      %v3874 = vunpack.c.l.b16 %v3579
      %v3875 = vunpack.c.l.b16 %v3580
      %v3876 = vunpack.c.l.b16 %v3581
      %v3877 = vunpack.c.l.b16 %v3582
      %v3878 = vunpack.c.l.b16 %v3583
      %v3879 = vunpack.c.l.b16 %v3584
      %v3880 = vunpack.c.l.b16 %v3585
      %v3881 = vunpack.c.l.b16 %v3586
      %v3882 = vunpack.c.l.b16 %v3587
      %v3883 = vunpack.c.l.b16 %v3588
      %v3884 = vunpack.c.l.b16 %v3589
      %v3885 = vunpack.c.l.b16 %v3590
      %v3886 = vunpack.c.l.b16 %v3591
      %v3887 = vpack.c.b16 %v3744, %v3743
      %v3888 = vpack.c.b16 %v3746, %v3745
      %v3889 = vpack.c.b16 %v3748, %v3747
      %v3890 = vpack.c.b16 %v3750, %v3749
      %v3891 = vpack.c.b16 %v3752, %v3751
      %v3892 = vpack.c.b16 %v3754, %v3753
      %v3893 = vpack.c.b16 %v3756, %v3755
      %v3894 = vpack.c.b16 %v3758, %v3757
      %v3895 = vpack.c.b16 %v3760, %v3759
      %v3896 = vpack.c.b16 %v3762, %v3761
      %v3897 = vpack.c.b16 %v3764, %v3763
      %v3898 = vpack.c.b16 %v3766, %v3765
      %v3899 = vpack.c.b16 %v3768, %v3767
      %v3900 = vpack.c.b16 %v3770, %v3769
      %v3901 = vpack.c.b16 %v3772, %v3771
      %v3902 = vpack.c.b16 %v3774, %v3773
      %v3903 = vpack.c.b16 %v3776, %v3775
      %v3904 = vpack.c.b16 %v3778, %v3777
      %v3905 = vpack.c.b16 %v3780, %v3779
      %v3906 = vpack.c.b16 %v3782, %v3781
      %v3907 = vpack.c.b16 %v3784, %v3783
      %v3908 = vpack.c.b16 %v3786, %v3785
      %v3909 = vpack.c.b16 %v3788, %v3787
      %v3910 = vpack.c.b16 %v3790, %v3789
      %v3911 = vpack.c.b16 %v3792, %v3791
      %v3912 = vpack.c.b16 %v3794, %v3793
      %v3913 = vpack.c.b16 %v3796, %v3795
      %v3914 = vpack.c.b16 %v3798, %v3797
      %v3915 = vpack.c.b16 %v3800, %v3799
      %v3916 = vpack.c.b16 %v3802, %v3801
      %v3917 = vpack.c.b16 %v3804, %v3803
      %v3918 = vpack.c.b16 %v3806, %v3805
      %v3919 = vpack.c.b16 %v3808, %v3807
      %v3920 = vpack.c.b16 %v3810, %v3809
      %v3921 = vpack.c.b16 %v3812, %v3811
      %v3922 = vpack.c.b16 %v3814, %v3813
      %v3923 = vpack.c.b16 %v3816, %v3815
      %v3924 = vpack.c.b16 %v3818, %v3817
      %v3925 = vpack.c.b16 %v3820, %v3819
      %v3926 = vpack.c.b16 %v3822, %v3821
      %v3927 = vpack.c.b16 %v3824, %v3823
      %v3928 = vpack.c.b16 %v3826, %v3825
      %v3929 = vpack.c.b16 %v3828, %v3827
      %v3930 = vpack.c.b16 %v3830, %v3829
      %v3931 = vpack.c.b16 %v3832, %v3831
      %v3932 = vpack.c.b16 %v3834, %v3833
      %v3933 = vpack.c.b16 %v3836, %v3835
      %v3934 = vpack.c.b16 %v3838, %v3837
      %v3935 = vpack.c.b16 %v3840, %v3839
      %v3936 = vpack.c.b16 %v3842, %v3841
      %v3937 = vpack.c.b16 %v3844, %v3843
      %v3938 = vpack.c.b16 %v3846, %v3845
      %v3939 = vpack.c.b16 %v3848, %v3847
      %v3940 = vpack.c.b16 %v3850, %v3849
      %v3941 = vpack.c.b16 %v3852, %v3851
      %v3942 = vpack.c.b16 %v3854, %v3853
      %v3943 = vpack.c.b16 %v3856, %v3855
      %v3944 = vpack.c.b16 %v3858, %v3857
      %v3945 = vpack.c.b16 %v3860, %v3859
      %v3946 = vpack.c.b16 %v3862, %v3861
      %v3947 = vpack.c.b16 %v3864, %v3863
      %v3948 = vpack.c.b16 %v3866, %v3865
      %v3949 = vpack.c.b16 %v3868, %v3867
      %v3950 = vpack.c.b16 %v3870, %v3869
      %v3951 = vpack.c.b16 %v3872, %v3871
      %v3952 = vpack.c.b16 %v3874, %v3873
      %v3953 = vpack.c.b16 %v3876, %v3875
      %v3954 = vpack.c.b16 %v3878, %v3877
      %v3955 = vpack.c.b16 %v3880, %v3879
      %v3956 = vpack.c.b16 %v3882, %v3881
      %v3957 = vpack.c.b16 %v3884, %v3883
      %v3958 = vpack.c.b16 %v3886, %v3885
      %4031 = vmatprep.subr.bf16.mxu0 0
      %4032 = vmatpush1.bf16.msra.mxu0 %v3887
      %4033 = vmatprep.subr.bf16.mxu0 0
      %4034 = vmatpush1.bf16.msra.mxu0 %v3888
      %4035 = vmatprep.subr.bf16.mxu0 0
      %4036 = vmatpush1.bf16.msra.mxu0 %v3889
      %4037 = vmatprep.subr.bf16.mxu0 0
      %4038 = vmatpush1.bf16.msra.mxu0 %v3890
      %4039 = vmatprep.subr.bf16.mxu0 0
      %4040 = vmatpush1.bf16.msra.mxu0 %v3891
      %4041 = vmatprep.subr.bf16.mxu0 0
      %4042 = vmatpush1.bf16.msra.mxu0 %v3892
      %4043 = vmatprep.subr.bf16.mxu0 0
      %4044 = vmatpush1.bf16.msra.mxu0 %v3893
      %4045 = vmatprep.subr.bf16.mxu0 0
      %4046 = vmatpush1.bf16.msra.mxu0 %v3894
      %4047 = vmatprep.subr.bf16.mxu0 0
      %4048 = vmatpush1.bf16.msra.mxu0 %v3895
      %4049 = vmatprep.subr.bf16.mxu0 0
      %4050 = vmatpush1.bf16.msra.mxu0 %v3896
      %4051 = vmatprep.subr.bf16.mxu0 0
      %4052 = vmatpush1.bf16.msra.mxu0 %v3897
      %4053 = vmatprep.subr.bf16.mxu0 0
      %4054 = vmatpush1.bf16.msra.mxu0 %v3898
      %4055 = vmatprep.subr.bf16.mxu0 0
      %4056 = vmatpush1.bf16.msra.mxu0 %v3899
      %4057 = vmatprep.subr.bf16.mxu0 0
      %4058 = vmatpush1.bf16.msra.mxu0 %v3900
      %4059 = vmatprep.subr.bf16.mxu0 0
      %4060 = vmatpush1.bf16.msra.mxu0 %v3901
      %4061 = vmatprep.subr.bf16.mxu0 0
      %4062 = vmatpush1.bf16.msra.mxu0 %v3902
      %4063 = vmatprep.mubr.bf16.mxu0 %v3344
      %4064 = vmatmul.mubr.bf16.gmra.mrb[0].mxu0 %v3343
      %v4065 = vpop.f32.mrb[0].mxu0
      %v4066 = vadd.f32 %v3597, %v4065
      %v4067 = vpop.f32.mrb[0].mxu0
      %v4068 = vpop.f32.mrb[0].mxu0
      %v4069 = vadd.f32 %v3597, %v4068
      %v4070 = vpop.f32.mrb[0].mxu0
      %4071 = vmatprep.mubr.bf16.mxu0 %v3347
      %4072 = vmatmul.mubr.bf16.gmra.mrb[0].mxu0 %v3346
      %v4073 = vpop.f32.mrb[0].mxu0
      %v4074 = vadd.f32 %v3597, %v4073
      %v4075 = vpop.f32.mrb[0].mxu0
      %v4076 = vpop.f32.mrb[0].mxu0
      %v4077 = vadd.f32 %v3597, %v4076
      %v4078 = vpop.f32.mrb[0].mxu0
      %4079 = vdwg.mxu0
      %4080 = vmatprep.subr.bf16.mxu0 0
      %4081 = vmatpush1.bf16.msra.mxu0 %v3903
      %4082 = vmatprep.subr.bf16.mxu0 0
      %4083 = vmatpush1.bf16.msra.mxu0 %v3904
      %4084 = vmatprep.subr.bf16.mxu0 0
      %4085 = vmatpush1.bf16.msra.mxu0 %v3905
      %4086 = vmatprep.subr.bf16.mxu0 0
      %4087 = vmatpush1.bf16.msra.mxu0 %v3906
      %4088 = vmatprep.subr.bf16.mxu0 0
      %4089 = vmatpush1.bf16.msra.mxu0 %v3907
      %4090 = vmatprep.subr.bf16.mxu0 0
      %4091 = vmatpush1.bf16.msra.mxu0 %v3908
      %4092 = vmatprep.subr.bf16.mxu0 0
      %4093 = vmatpush1.bf16.msra.mxu0 %v3909
      %4094 = vmatprep.subr.bf16.mxu0 0
      %4095 = vmatpush1.bf16.msra.mxu0 %v3910
      %4096 = vmatprep.subr.bf16.mxu0 0
      %4097 = vmatpush1.bf16.msra.mxu0 %v3911
      %4098 = vmatprep.subr.bf16.mxu0 0
      %4099 = vmatpush1.bf16.msra.mxu0 %v3912
      %4100 = vmatprep.subr.bf16.mxu0 0
      %4101 = vmatpush1.bf16.msra.mxu0 %v3913
      %4102 = vmatprep.subr.bf16.mxu0 0
      %4103 = vmatpush1.bf16.msra.mxu0 %v3914
      %4104 = vmatprep.subr.bf16.mxu0 0
      %4105 = vmatpush1.bf16.msra.mxu0 %v3915
      %4106 = vmatprep.subr.bf16.mxu0 0
      %4107 = vmatpush1.bf16.msra.mxu0 %v3916
      %4108 = vmatprep.subr.bf16.mxu0 0
      %4109 = vmatpush1.bf16.msra.mxu0 %v3917
      %4110 = vmatprep.subr.bf16.mxu0 0
      %4111 = vmatpush1.bf16.msra.mxu0 %v3918
      %4112 = vmatprep.mubr.bf16.mxu0 %v3363
      %4113 = vmatmul.mubr.bf16.gmra.mrb[0].mxu0 %v3345
      %v4114 = vpop.f32.mrb[0].mxu0
      %v4115 = vadd.f32 %v4066, %v4114
      %v4116 = vpop.f32.mrb[0].mxu0
      %v4117 = vpop.f32.mrb[0].mxu0
      %v4118 = vadd.f32 %v4069, %v4117
      %v4119 = vpop.f32.mrb[0].mxu0
      %4120 = vmatprep.mubr.bf16.mxu0 %v3395
      %4121 = vmatmul.mubr.bf16.gmra.mrb[0].mxu0 %v3348
      %v4122 = vpop.f32.mrb[0].mxu0
      %v4123 = vadd.f32 %v4074, %v4122
      %v4124 = vpop.f32.mrb[0].mxu0
      %v4125 = vpop.f32.mrb[0].mxu0
      %v4126 = vadd.f32 %v4077, %v4125
      %v4127 = vpop.f32.mrb[0].mxu0
      %4128 = vdwg.mxu0
      %4129 = vmatprep.subr.bf16.mxu0 0
      %4130 = vmatpush1.bf16.msra.mxu0 %v3919
      %4131 = vmatprep.subr.bf16.mxu0 0
      %4132 = vmatpush1.bf16.msra.mxu0 %v3920
      %4133 = vmatprep.subr.bf16.mxu0 0
      %4134 = vmatpush1.bf16.msra.mxu0 %v3921
      %4135 = vmatprep.subr.bf16.mxu0 0
      %4136 = vmatpush1.bf16.msra.mxu0 %v3922
      %4137 = vmatprep.subr.bf16.mxu0 0
      %4138 = vmatpush1.bf16.msra.mxu0 %v3923
      %4139 = vmatprep.subr.bf16.mxu0 0
      %4140 = vmatpush1.bf16.msra.mxu0 %v3924
      %4141 = vmatprep.subr.bf16.mxu0 0
      %4142 = vmatpush1.bf16.msra.mxu0 %v3925
      %4143 = vmatprep.subr.bf16.mxu0 0
      %4144 = vmatpush1.bf16.msra.mxu0 %v3926
      %4145 = vmatprep.subr.bf16.mxu0 0
      %4146 = vmatpush1.bf16.msra.mxu0 %v3927
      %4147 = vmatprep.subr.bf16.mxu0 0
      %4148 = vmatpush1.bf16.msra.mxu0 %v3928
      %4149 = vmatprep.subr.bf16.mxu0 0
      %4150 = vmatpush1.bf16.msra.mxu0 %v3929
      %4151 = vmatprep.subr.bf16.mxu0 0
      %4152 = vmatpush1.bf16.msra.mxu0 %v3930
      %4153 = vmatprep.subr.bf16.mxu0 0
      %4154 = vmatpush1.bf16.msra.mxu0 %v3931
      %4155 = vmatprep.subr.bf16.mxu0 0
      %4156 = vmatpush1.bf16.msra.mxu0 %v3932
      %4157 = vmatprep.subr.bf16.mxu0 0
      %4158 = vmatpush1.bf16.msra.mxu0 %v3933
      %4159 = vmatprep.subr.bf16.mxu0 0
      %4160 = vmatpush1.bf16.msra.mxu0 %v3934
      %4161 = vmatprep.mubr.bf16.mxu0 %v3387
      %4162 = vmatmul.mubr.bf16.gmra.mrb[0].mxu0 %v3375
      %v4163 = vpop.f32.mrb[0].mxu0
      %v4164 = vadd.f32 %v4115, %v4163
      %v4165 = vpop.f32.mrb[0].mxu0
      %v4166 = vpop.f32.mrb[0].mxu0
      %v4167 = vadd.f32 %v4118, %v4166
      %v4168 = vpop.f32.mrb[0].mxu0
      %4169 = vmatprep.mubr.bf16.mxu0 %v3411
      %4170 = vmatmul.mubr.bf16.gmra.mrb[0].mxu0 %v3403
      %v4171 = vpop.f32.mrb[0].mxu0
      %v4172 = vadd.f32 %v4123, %v4171
      %v4173 = vpop.f32.mrb[0].mxu0
      %v4174 = vpop.f32.mrb[0].mxu0
      %v4175 = vadd.f32 %v4126, %v4174
      %v4176 = vpop.f32.mrb[0].mxu0
      %4177 = vdwg.mxu0
      %4178 = vmatprep.subr.bf16.mxu0 0
      %4179 = vmatpush1.bf16.msra.mxu0 %v3935
      %4180 = vmatprep.subr.bf16.mxu0 0
      %4181 = vmatpush1.bf16.msra.mxu0 %v3936
      %4182 = vmatprep.subr.bf16.mxu0 0
      %4183 = vmatpush1.bf16.msra.mxu0 %v3937
      %4184 = vmatprep.subr.bf16.mxu0 0
      %4185 = vmatpush1.bf16.msra.mxu0 %v3938
      %4186 = vmatprep.subr.bf16.mxu0 0
      %4187 = vmatpush1.bf16.msra.mxu0 %v3939
      %4188 = vmatprep.subr.bf16.mxu0 0
      %4189 = vmatpush1.bf16.msra.mxu0 %v3940
      %4190 = vmatprep.subr.bf16.mxu0 0
      %4191 = vmatpush1.bf16.msra.mxu0 %v3941
      %4192 = vmatprep.subr.bf16.mxu0 0
      %4193 = vmatpush1.bf16.msra.mxu0 %v3942
      %4194 = vmatprep.subr.bf16.mxu0 0
      %4195 = vmatpush1.bf16.msra.mxu0 %v3943
      %4196 = vmatprep.subr.bf16.mxu0 0
      %4197 = vmatpush1.bf16.msra.mxu0 %v3944
      %4198 = vmatprep.subr.bf16.mxu0 0
      %4199 = vmatpush1.bf16.msra.mxu0 %v3945
      %4200 = vmatprep.subr.bf16.mxu0 0
      %4201 = vmatpush1.bf16.msra.mxu0 %v3946
      %4202 = vmatprep.subr.bf16.mxu0 0
      %4203 = vmatpush1.bf16.msra.mxu0 %v3947
      %4204 = vmatprep.subr.bf16.mxu0 0
      %4205 = vmatpush1.bf16.msra.mxu0 %v3948
      %4206 = vmatprep.subr.bf16.mxu0 0
      %4207 = vmatpush1.bf16.msra.mxu0 %v3949
      %4208 = vmatprep.subr.bf16.mxu0 0
      %4209 = vmatpush1.bf16.msra.mxu0 %v3950
      %4210 = vmatprep.mubr.bf16.mxu0 %v3432
      %4211 = vmatmul.mubr.bf16.gmra.mrb[0].mxu0 %v3429
      %v4212 = vpop.f32.mrb[0].mxu0
      %v4213 = vadd.f32 %v4164, %v4212
      %v4214 = vpop.f32.mrb[0].mxu0
      %v4215 = vpop.f32.mrb[0].mxu0
      %v4216 = vadd.f32 %v4167, %v4215
      %v4217 = vpop.f32.mrb[0].mxu0
      %4218 = vmatprep.mubr.bf16.mxu0 %v3439
      %4219 = vmatmul.mubr.bf16.gmra.mrb[0].mxu0 %v3437
      %v4220 = vpop.f32.mrb[0].mxu0
      %v4221 = vadd.f32 %v4172, %v4220
      %v4222 = vpop.f32.mrb[0].mxu0
      %v4223 = vpop.f32.mrb[0].mxu0
      %v4224 = vadd.f32 %v4175, %v4223
      %v4225 = vpop.f32.mrb[0].mxu0
      %4226 = vdwg.mxu0
      %4227 = vmatprep.subr.bf16.mxu0 0
      %4228 = vmatpush1.bf16.msra.mxu0 %v3951
      %4229 = vmatprep.subr.bf16.mxu0 0
      %4230 = vmatpush1.bf16.msra.mxu0 %v3952
      %4231 = vmatprep.subr.bf16.mxu0 0
      %4232 = vmatpush1.bf16.msra.mxu0 %v3953
      %4233 = vmatprep.subr.bf16.mxu0 0
      %4234 = vmatpush1.bf16.msra.mxu0 %v3954
      %4235 = vmatprep.subr.bf16.mxu0 0
      %4236 = vmatpush1.bf16.msra.mxu0 %v3955
      %4237 = vmatprep.subr.bf16.mxu0 0
      %4238 = vmatpush1.bf16.msra.mxu0 %v3956
      %4239 = vmatprep.subr.bf16.mxu0 0
      %4240 = vmatpush1.bf16.msra.mxu0 %v3957
      %4241 = vmatprep.subr.bf16.mxu0 0
      %4242 = vmatpush1.bf16.msra.mxu0 %v3958
      %4243 = vmatprep.subr.bf16.mxu0 0
      %4244 = vmatpush1.bf16.msra.mxu0 0
      %4245 = vmatprep.subr.bf16.mxu0 0
      %4246 = vmatpush1.bf16.msra.mxu0 0
      %4247 = vmatprep.subr.bf16.mxu0 0
      %4248 = vmatpush1.bf16.msra.mxu0 0
      %4249 = vmatprep.subr.bf16.mxu0 0
      %4250 = vmatpush1.bf16.msra.mxu0 0
      %4251 = vmatprep.subr.bf16.mxu0 0
      %4252 = vmatpush1.bf16.msra.mxu0 0
      %4253 = vmatprep.subr.bf16.mxu0 0
      %4254 = vmatpush1.bf16.msra.mxu0 0
      %4255 = vmatprep.subr.bf16.mxu0 0
      %4256 = vmatpush1.bf16.msra.mxu0 0
      %4257 = vmatprep.subr.bf16.mxu0 0
      %4258 = vmatpush1.bf16.msra.mxu0 0
      %4259 = vmatprep.mubr.bf16.mxu0 0
      %4260 = vmatmul.mubr.bf16.gmra.mrb[0].mxu0 %v3435
      %v4261 = vpop.f32.mrb[0].mxu0
      %v4262 = vadd.f32 %v4213, %v4261
      %v4263 = vpop.f32.mrb[0].mxu0
      %v4264 = vpop.f32.mrb[0].mxu0
      %v4265 = vadd.f32 %v4216, %v4264
      %v4266 = vpop.f32.mrb[0].mxu0
      %4267 = vmatprep.mubr.bf16.mxu0 0
      %4268 = vmatmul.mubr.bf16.gmra.mrb[0].mxu0 %v3441
      %v4269 = vpop.f32.mrb[0].mxu0
      %v4270 = vadd.f32 %v4221, %v4269
      %v4271 = vpop.f32.mrb[0].mxu0
      %v4272 = vpop.f32.mrb[0].mxu0
      %v4273 = vadd.f32 %v4224, %v4272
      %v4274 = vpop.f32.mrb[0].mxu0
      %4275 = vdwg.mxu0
      %v4276 = vsub.f32 0.0, %v4262
      %v4277 = vsub.f32 0.0, %v4265
      %v4278 = vsub.f32 0.0, %v4270
      %v4279 = vsub.f32 0.0, %v4273
      %v4280 = vmul.f32 %v4276, 1.442695
      %v4281 = vpow.pop %v4280
      %v4282 = vmul.f32 %v4277, 1.442695
      %v4283 = vpow.pop %v4282
      %v4284 = vmul.f32 %v4278, 1.442695
      %v4285 = vpow.pop %v4284
      %v4286 = vmul.f32 %v4279, 1.442695
      %v4287 = vpow.pop %v4286
      %v4288 = vadd.f32 %v4281, 1.0
      %v4289 = vadd.f32 %v4283, 1.0
      %v4290 = vadd.f32 %v4285, 1.0
      %v4291 = vadd.f32 %v4287, 1.0
      %v4292 = vrcp.pop %v4288
      %v4293 = vrcp.pop %v4289
      %v4294 = vrcp.pop %v4290
      %v4295 = vrcp.pop %v4291
      %4296 = vst.msk [vmem:[%s469] sm:$0xff] %vm496, %v4292
      %4297 = vst.msk [vmem:[%s469 + $0x8] sm:$0xff] %vm496, %v4293
      %4298 = vst.msk [vmem:[%s469 + $0x10] sm:$0xff] %vm496, %v4294
      %4299 = vst.msk [vmem:[%s469 + $0x18] sm:$0xff] %vm496, %v4295
      %s4300 = smul.u32 4, %s25
      %p4301 = scmp.lt.s32.totalorder %s4300, 7
      %s4302 = scalar_select %p4301, %s4300, 7
      %s4303 = smul.addr %s4302, 8
      %s4304 = scalar_lea.vmem %s14, %s4303
      // Predicated region
      $region77: #{gen_forward.1} parent=75 // pred_check
        %p4305 = pneg %p342
      $region78: #{gen_forward.1} parent=75 // pred_check_branch
        %4307 = sbr.rel (%p4305) target = $region80
      $region79: #{gen_forward.1} parent=75 // pred_region
        %s4308 = smul.u32 4, %s25
      $region80: #{gen_forward.1} parent=75 // pred_fallthru
        _
    $region76: #{gen_forward.1} parent=5 // pred_fallthru
      _
    %p4309 = scmp.le.s32.totalorder 2, %s20
    // Predicated region
    $region81: #{gen_forward.1} parent=5 // pred_check
      %p4310 = pneg %p4309
    $region82: #{gen_forward.1} parent=5 // pred_check_branch
      %4312 = sbr.rel (%p4310) target = $region84
    $region83: #{gen_forward.1} parent=5 // pred_region
      %s4313 = ssub.s32 %s20, 2
      // Predicated region
      $region85: #{gen_forward.1} parent=83 // pred_check
        %p4314 = pneg %p348
      $region86: #{gen_forward.1} parent=83 // pred_check_branch
        %4316 = sbr.rel (%p4314) target = $region88
      $region87: #{gen_forward.1} parent=83 // pred_region
        %s4317 = smul.u32 4, %s26
        %p4318 = scmp.lt.s32.totalorder %s4317, 7
        %s4319 = scalar_select %p4318, %s4317, 7
        %s4320 = smul.addr %s4319, 8
        %s4321 = scalar_lea.vmem %s14, %s4320
      $region88: #{gen_forward.1} parent=83 // pred_fallthru
        _
    $region84: #{gen_forward.1} parent=5 // pred_fallthru
      _
  $region6: #{gen_forward.1} parent=0 // loop_footer
    %s24 = sadd.s32 1, %s20
  $region7: #{gen_forward.1} parent=0 // loop_footer_branch
    %19 = sbr.rel target = $region3
  $region8: #{gen_forward.1} parent=0 // loop_exit
    _

</llo_original>
